<compile_context>
chip_gen: v6e
topology: v6e:2x2x1
jax: 0.10.0
libtpu: 0.0.40
codegen_flags: <defaults>
</compile_context>

<pallas_src>
import jax
import jax.numpy as jnp
from jax.experimental import pallas as pl
from jax.experimental.pallas import tpu as pltpu


def _round_up(a, m):
    return ((a + m - 1) // m) * m


def _tsk_kernel(x_ref, kT_ref, ckT_ref, const_ref, w_ref, b_ref, o_ref):
    # x_ref:    [TB, D]      f32
    # kT_ref:   [D, Rp]      f32   (0.5 / sigma^2, transposed; 0 on padded rules)
    # ckT_ref:  [D, Rp]      f32   (centers * k, transposed; 0 on padded rules)
    # const_ref:[1, Rp]      f32   (sum_d c^2*k; +huge on padded rules)
    # w_ref:    [D*Rp, TN]   bf16  (w_flat[d*Rp + r, o] = W[r, d, o])
    # b_ref:    [Rp, TN]     f32
    # o_ref:    [TB, TN]
    x = x_ref[...].astype(jnp.float32)                 # [TB, D]
    kT = kT_ref[...]                                   # [D, Rp]
    ckT = ckT_ref[...]                                 # [D, Rp]

    # --- antecedent (kept in f32; matmul decomposition keeps it on the MXU) ---
    #   z = -(x^2 @ k^T - 2 x @ (c*k)^T + sum_d c^2 k)
    quad = jnp.dot(x * x, kT, preferred_element_type=jnp.float32)    # [TB, Rp]
    cross = jnp.dot(x, ckT, preferred_element_type=jnp.float32)      # [TB, Rp]
    z = 2.0 * cross - quad - const_ref[...]                          # [TB, Rp]

    # --- softmax over rules (full 128-lane rows; padded rules -> 0 weight) ---
    m = jnp.max(z, axis=1, keepdims=True)
    e = jnp.exp(z - m)
    denom = jnp.sum(e, axis=1, keepdims=True)
    frs = e * pl.reciprocal(denom, approx=True)                      # [TB, Rp]

    # --- consequent: bias term + one fused flattened contraction on the MXU ---
    acc = jnp.dot(frs, b_ref[...].astype(jnp.float32),
                  preferred_element_type=jnp.float32)                # [TB, TN]

    tb, d = x.shape
    rp = frs.shape[1]
    # xf[b, d*Rp + r] = x[b, d] * frs[b, r]; rule axis (128-multiple) is minor,
    # so the collapse to 2D is lane-aligned.
    xf = (x[:, :, None] * frs[:, None, :]).reshape(tb, d * rp)       # [TB, D*Rp]
    acc = acc + jnp.dot(xf.astype(jnp.bfloat16), w_ref[...],
                        preferred_element_type=jnp.float32)          # [TB, TN]

    o_ref[...] = acc.astype(o_ref.dtype)


def tsk_forward(x, centers, sigma, w, bias, *, block_b=None, block_n=128):
    """x: [B, D], centers/sigma: [R, D], w: [R, D, Dout], bias: [R, Dout]."""
    f32 = jnp.float32
    out_dtype = x.dtype
    B, D = x.shape
    R, _, Dout = w.shape

    x = x.astype(f32)
    k = 0.5 / (sigma.astype(f32) ** 2)                      # [R, D]
    ck = centers.astype(f32) * k                            # [R, D]
    const = jnp.sum(centers.astype(f32) ** 2 * k, axis=1)   # [R]

    # --- padding / layout (host side, grid-invariant) ---
    block_n = _round_up(block_n, 128)
    if block_b is None:
        block_b = 256 if B >= 256 else _round_up(B, 8)
    block_b = _round_up(block_b, 8)

    Rp = _round_up(R, 128)                  # lane-dense rule axis
    Dout_p = _round_up(Dout, block_n)       # lane-dense output blocks
    Bp = _round_up(B, block_b)

    kT = jnp.zeros((D, Rp), f32).at[:, :R].set(k.T)
    ckT = jnp.zeros((D, Rp), f32).at[:, :R].set(ck.T)
    # Padded rules get a huge constant -> z = -huge -> zero firing strength.
    const_p = jnp.full((1, Rp), 1e30, f32).at[0, :R].set(const)

    # w_flat[d*Rp + r, o] = W[r, d, o]; padded rules / outputs are zero.
    w_pad = jnp.zeros((Rp, D, Dout_p), f32).at[:R, :, :Dout].set(w.astype(f32))
    w_flat = jnp.transpose(w_pad, (1, 0, 2)).reshape(D * Rp, Dout_p)
    w_flat = w_flat.astype(jnp.bfloat16)
    bias_p = jnp.zeros((Rp, Dout_p), f32).at[:R, :Dout].set(bias.astype(f32))

    x_p = jnp.zeros((Bp, D), f32).at[:B].set(x)

    grid = (Bp // block_b, Dout_p // block_n)

    # rough VMEM budget (double-buffered blocks + in-kernel xf intermediate)
    block_bytes = (block_b * D * 4 + 2 * D * Rp * 4 + Rp * 4
                   + D * Rp * block_n * 2 + Rp * block_n * 4
                   + block_b * block_n * 4)
    xf_bytes = block_b * D * Rp * 6
    vmem_limit = int(min(48 * 1024 * 1024,
                         max(16 * 1024 * 1024, 3 * block_bytes + xf_bytes)))

    out = pl.pallas_call(
        _tsk_kernel,
        out_shape=jax.ShapeDtypeStruct((Bp, Dout_p), f32),
        grid_spec=pltpu.PrefetchScalarGridSpec(
            num_scalar_prefetch=0,
            grid=grid,
            in_specs=[
                pl.BlockSpec((block_b, D), lambda i, j: (i, 0)),      # x (batch tiled)
                pl.BlockSpec((D, Rp), lambda i, j: (0, 0)),           # k^T
                pl.BlockSpec((D, Rp), lambda i, j: (0, 0)),           # (c*k)^T
                pl.BlockSpec((1, Rp), lambda i, j: (0, 0)),           # sum_d c^2*k
                pl.BlockSpec((D * Rp, block_n), lambda i, j: (0, j)),  # W flat (bf16)
                pl.BlockSpec((Rp, block_n), lambda i, j: (0, j)),     # bias
            ],
            out_specs=pl.BlockSpec((block_b, block_n), lambda i, j: (i, j)),
        ),
        compiler_params=pltpu.CompilerParams(
            dimension_semantics=("parallel", "parallel"),
            vmem_limit_bytes=vmem_limit),
    )(x_p, kT, ckT, const_p, w_flat, bias_p)

    return out[:B, :Dout].astype(out_dtype)


def tsk_reference(x, centers, sigma, w, bias):
    """Pure-JAX reference with identical semantics (f32)."""
    d2 = (x[:, None, :] - centers[None, :, :]) ** 2          # [B, R, D]
    z = -jnp.sum(d2 / (2.0 * sigma[None] ** 2), axis=-1)     # [B, R]
    frs = jax.nn.softmax(z, axis=1)                          # [B, R]
    xw = jnp.einsum("bd,rdo->bro", x, w) + bias[None]        # [B, R, Dout]
    return jnp.einsum("br,bro->bo", frs, xw)


if __name__ == "__main__":
    # Small shapes consistent with the module's structure
    # (module defaults: input_dim=640, output_dim=640, n_rules=50).
    B, D_IN, D_OUT, N_RULES = 32, 64, 64, 8

    key = jax.random.PRNGKey(0)
    kx, kw, kb = jax.random.split(key, 3)

    x = jax.random.normal(kx, (B, D_IN), dtype=jnp.float32)

    # Deterministic "init_model" (cluster-style): centers = first batch samples,
    # sigma = constant spread (std scaling 0.2 from the call site).
    centers = x[:N_RULES]
    sigma = jnp.full((N_RULES, D_IN), 1.0, dtype=jnp.float32) * (1.0 + 0.2)

    # Deterministic consequent parameters.
    w = 0.05 * jax.random.normal(kw, (N_RULES, D_IN, D_OUT), dtype=jnp.float32)
    bias = 0.05 * jax.random.normal(kb, (N_RULES, D_OUT), dtype=jnp.float32)

    # block_b=8 forces a multi-step (pipelined) batch grid even at demo scale.
    out = tsk_forward(x, centers, sigma, w, bias, block_b=8, block_n=128)
    out = jax.block_until_ready(out)

    ref = tsk_reference(x, centers, sigma, w, bias)
    assert out.shape == (B, D_OUT)
    # bf16 MXU operands for the consequent -> modest tolerance vs f32 reference.
    assert jnp.allclose(out, ref, atol=3e-2, rtol=3e-2), "mismatch vs reference"

    print("KERNEL_OK")
</pallas_src>

<mosaic_0001>
module attributes {stable_mosaic.version = 11 : i64} {
  func.func @_tsk_kernel(%arg0: i32, %arg1: i32, %arg2: memref<8x64xf32, #tpu.memory_space<vmem>>, %arg3: memref<64x128xf32, #tpu.memory_space<vmem>>, %arg4: memref<64x128xf32, #tpu.memory_space<vmem>>, %arg5: memref<1x128xf32, #tpu.memory_space<vmem>>, %arg6: memref<8192x128xbf16, #tpu.memory_space<vmem>>, %arg7: memref<128x128xf32, #tpu.memory_space<vmem>>, %arg8: memref<8x128xf32, #tpu.memory_space<vmem>>) attributes {dimension_semantics = [#tpu.dimension_semantics<parallel>, #tpu.dimension_semantics<parallel>], iteration_bounds = array<i64: 4, 1>, scalar_prefetch = 0 : i64, scratch_operands = 0 : i64, tpu.core_type = #tpu.core_type<tc>, window_params = [{transform_indices = @transform_0, window_bounds = array<i64: 8, 64>}, {pipeline_mode = #tpu.pipeline_mode<synchronous>, transform_indices = @transform_1, window_bounds = array<i64: 64, 128>}, {pipeline_mode = #tpu.pipeline_mode<synchronous>, transform_indices = @transform_2, window_bounds = array<i64: 64, 128>}, {pipeline_mode = #tpu.pipeline_mode<synchronous>, transform_indices = @transform_3, window_bounds = array<i64: 1, 128>}, {transform_indices = @transform_4, window_bounds = array<i64: 8192, 128>}, {transform_indices = @transform_5, window_bounds = array<i64: 128, 128>}, {transform_indices = @transform_6, window_bounds = array<i64: 8, 128>}]} {
    %c0 = arith.constant 0 : index
    %c0_0 = arith.constant 0 : index
    %0 = vector.load %arg2[%c0, %c0_0] : memref<8x64xf32, #tpu.memory_space<vmem>>, vector<8x64xf32>
    %c0_1 = arith.constant 0 : index
    %c0_2 = arith.constant 0 : index
    %1 = vector.load %arg3[%c0_1, %c0_2] : memref<64x128xf32, #tpu.memory_space<vmem>>, vector<64x128xf32>
    %c0_3 = arith.constant 0 : index
    %c0_4 = arith.constant 0 : index
    %2 = vector.load %arg4[%c0_3, %c0_4] : memref<64x128xf32, #tpu.memory_space<vmem>>, vector<64x128xf32>
    %3 = arith.mulf %0, %0 : vector<8x64xf32>
    %cst = arith.constant dense<0.000000e+00> : vector<8x128xf32>
    %4 = tpu.matmul %3, %1, %cst {dimension_numbers = #tpu.dot_dimension_numbers<[1], [0], [0], [1], [0, 0, 1, 1], [], []>} : vector<8x64xf32>, vector<64x128xf32>, vector<8x128xf32> -> vector<8x128xf32>
    %cst_5 = arith.constant dense<0.000000e+00> : vector<8x128xf32>
    %5 = tpu.matmul %0, %2, %cst_5 {dimension_numbers = #tpu.dot_dimension_numbers<[1], [0], [0], [1], [0, 0, 1, 1], [], []>} : vector<8x64xf32>, vector<64x128xf32>, vector<8x128xf32> -> vector<8x128xf32>
    %cst_6 = arith.constant 2.000000e+00 : f32
    %6 = vector.broadcast %cst_6 : f32 to vector<8x128xf32>
    %7 = arith.mulf %6, %5 : vector<8x128xf32>
    %8 = arith.subf %7, %4 : vector<8x128xf32>
    %c0_7 = arith.constant 0 : index
    %c0_8 = arith.constant 0 : index
    %9 = vector.load %arg5[%c0_7, %c0_8] : memref<1x128xf32, #tpu.memory_space<vmem>>, vector<1x128xf32>
    %10 = vector.broadcast %9 : vector<1x128xf32> to vector<8x128xf32>
    %11 = arith.subf %8, %10 : vector<8x128xf32>
    %cst_9 = arith.constant dense<0xFF800000> : vector<8xf32>
    %12 = vector.multi_reduction <maximumf>, %11, %cst_9 [1] : vector<8x128xf32> to vector<8xf32>
    %13 = vector.shape_cast %12 : vector<8xf32> to vector<8x1xf32>
    %14 = vector.broadcast %13 : vector<8x1xf32> to vector<8x128xf32>
    %15 = arith.subf %11, %14 : vector<8x128xf32>
    %16 = math.exp %15 : vector<8x128xf32>
    %cst_10 = arith.constant dense<0.000000e+00> : vector<8xf32>
    %17 = vector.multi_reduction <add>, %16, %cst_10 [1] : vector<8x128xf32> to vector<8xf32>
    %18 = vector.shape_cast %17 : vector<8xf32> to vector<8x1xf32>
    %19 = tpu.reciprocal %18 {approx = true} : vector<8x1xf32> -> vector<8x1xf32>
    %20 = vector.broadcast %19 : vector<8x1xf32> to vector<8x128xf32>
    %21 = arith.mulf %16, %20 : vector<8x128xf32>
    %c0_11 = arith.constant 0 : index
    %c0_12 = arith.constant 0 : index
    %22 = vector.load %arg7[%c0_11, %c0_12] : memref<128x128xf32, #tpu.memory_space<vmem>>, vector<128x128xf32>
    %cst_13 = arith.constant dense<0.000000e+00> : vector<8x128xf32>
    %23 = tpu.matmul %21, %22, %cst_13 {dimension_numbers = #tpu.dot_dimension_numbers<[1], [0], [0], [1], [0, 0, 1, 1], [], []>} : vector<8x128xf32>, vector<128x128xf32>, vector<8x128xf32> -> vector<8x128xf32>
    %24 = vector.shape_cast %0 : vector<8x64xf32> to vector<8x64x1xf32>
    %25 = vector.shape_cast %21 : vector<8x128xf32> to vector<8x1x128xf32>
    %26 = vector.broadcast %24 : vector<8x64x1xf32> to vector<8x64x128xf32>
    %27 = vector.broadcast %25 : vector<8x1x128xf32> to vector<8x64x128xf32>
    %28 = arith.mulf %26, %27 : vector<8x64x128xf32>
    %29 = vector.shape_cast %28 : vector<8x64x128xf32> to vector<8x8192xf32>
    %30 = arith.truncf %29 : vector<8x8192xf32> to vector<8x8192xbf16>
    %c0_14 = arith.constant 0 : index
    %c0_15 = arith.constant 0 : index
    %31 = vector.load %arg6[%c0_14, %c0_15] : memref<8192x128xbf16, #tpu.memory_space<vmem>>, vector<8192x128xbf16>
    %cst_16 = arith.constant dense<0.000000e+00> : vector<8x128xf32>
    %32 = tpu.matmul %30, %31, %cst_16 {dimension_numbers = #tpu.dot_dimension_numbers<[1], [0], [0], [1], [0, 0, 1, 1], [], []>} : vector<8x8192xbf16>, vector<8192x128xbf16>, vector<8x128xf32> -> vector<8x128xf32>
    %33 = arith.addf %23, %32 : vector<8x128xf32>
    %c0_17 = arith.constant 0 : index
    %c0_18 = arith.constant 0 : index
    %34 = vector.load %arg8[%c0_17, %c0_18] : memref<8x128xf32, #tpu.memory_space<vmem>>, vector<8x128xf32>
    tpu.vector_store %arg8[%c0_17, %c0_18], %33 {strides = array<i32>} : memref<8x128xf32, #tpu.memory_space<vmem>>, vector<8x128xf32>,
    return
  }
  func.func @transform_0(%arg0: i32, %arg1: i32) -> (i32, i32) {
    %c0_i32 = arith.constant 0 : i32
    %c0_i32_0 = arith.constant 0 : i32
    return %arg0, %c0_i32 : i32, i32
  }
  func.func @transform_1(%arg0: i32, %arg1: i32) -> (i32, i32) {
    %c0_i32 = arith.constant 0 : i32
    %c0_i32_0 = arith.constant 0 : i32
    %c0_i32_1 = arith.constant 0 : i32
    return %c0_i32, %c0_i32_0 : i32, i32
  }
  func.func @transform_2(%arg0: i32, %arg1: i32) -> (i32, i32) {
    %c0_i32 = arith.constant 0 : i32
    %c0_i32_0 = arith.constant 0 : i32
    %c0_i32_1 = arith.constant 0 : i32
    return %c0_i32, %c0_i32_0 : i32, i32
  }
  func.func @transform_3(%arg0: i32, %arg1: i32) -> (i32, i32) {
    %c0_i32 = arith.constant 0 : i32
    %c0_i32_0 = arith.constant 0 : i32
    %c0_i32_1 = arith.constant 0 : i32
    return %c0_i32, %c0_i32_0 : i32, i32
  }
  func.func @transform_4(%arg0: i32, %arg1: i32) -> (i32, i32) {
    %c0_i32 = arith.constant 0 : i32
    %c0_i32_0 = arith.constant 0 : i32
    return %c0_i32, %arg1 : i32, i32
  }
  func.func @transform_5(%arg0: i32, %arg1: i32) -> (i32, i32) {
    %c0_i32 = arith.constant 0 : i32
    %c0_i32_0 = arith.constant 0 : i32
    return %c0_i32, %arg1 : i32, i32
  }
  func.func @transform_6(%arg0: i32, %arg1: i32) -> (i32, i32) {
    %c0_i32 = arith.constant 0 : i32
    return %arg0, %arg1 : i32, i32
  }
}

</mosaic_0001>

<llo_original>
// kernel: tpu_custom_call.1
$region0: #{tpu_custom_call.1}
  #allocation0 [shape = 'u32[]', space=smem, size = 0x4, offset = 0x4, fixed_abs, tag = 'smem constant byte address 0x4 - core index']
  #allocation1 [shape = 'u32[144,128]{1,0:T(1,128)}', space=vmem, size = 0x12000, scoped, tag = 'internal scratch']
  %s0 = inlined_call_operand.hbm [shape: f32[32,64], index: 0, kind: input, shape index: {}]
  %s1 = inlined_call_operand.hbm [shape: f32[64,128], index: 1, kind: input, shape index: {}]
  %s2 = inlined_call_operand.hbm [shape: f32[64,128], index: 2, kind: input, shape index: {}]
  %s3 = inlined_call_operand.hbm [shape: f32[1,128], index: 3, kind: input, shape index: {}]
  %s4 = inlined_call_operand.hbm [shape: bf16[8192,128], index: 4, kind: input, shape index: {}]
  %s5 = inlined_call_operand.hbm [shape: f32[128,128], index: 5, kind: input, shape index: {}]
  %s6 = inlined_call_operand.hbm [shape: f32[32,128], index: 6, kind: output, shape index: {}]
  %s7 = sld [smem:[#allocation0]]
  $region81: #{tpu_custom_call.1} parent=0
    _
  %s9 = ssub.s32 1, %s7
  %s10 = scalar_select 0, %s9, %s7
  $region1: #{tpu_custom_call.1} parent=0
    #allocation2 [shape = 'u8[8192]{0}', space=vmem, size = 0x2000, scoped, tag = 'input window, operand 0']
    #allocation3 [shape = 's32[2]{0}', space=sflag, size = 0x8, scoped, tag = 'scoped memory for tpu_custom_call.1']
    #allocation4 [shape = 's32[2]{0}', space=sflag, size = 0x8, scoped, tag = 'scoped memory for tpu_custom_call.1']
    #allocation5 [shape = 'u8[32768]{0}', space=vmem, size = 0x8000, scoped, tag = 'input window, operand 1, single buffered']
    #allocation6 [shape = 's32[1]{0}', space=sflag, size = 0x4, scoped, tag = 'scoped memory for tpu_custom_call.1']
    #allocation7 [shape = 'u8[32768]{0}', space=vmem, size = 0x8000, scoped, tag = 'input window, operand 2, single buffered']
    #allocation8 [shape = 'u8[512]{0}', space=vmem, size = 0x400, scoped, tag = 'input window, operand 3, single buffered']
    #allocation9 [shape = 's32[1]{0}', space=sflag, size = 0x4, scoped, tag = 'scoped memory for tpu_custom_call.1']
    #allocation10 [shape = 'u8[2097152]{0}', space=vmem, size = 0x200000, scoped, tag = 'input window, operand 4, single buffered']
    #allocation11 [shape = 'u8[65536]{0}', space=vmem, size = 0x10000, scoped, tag = 'input window, operand 5, single buffered']
    #allocation12 [shape = 's32[1]{0}', space=sflag, size = 0x4, scoped, tag = 'scoped memory for tpu_custom_call.1']
    #allocation13 [shape = 'u8[8192]{0}', space=vmem, size = 0x2000, scoped, tag = 'output window, operand 0']
    %11 = vsyncpa [#allocation3], 0
    %s12 = scalar_lea.sflag [#allocation3], 1
    %13 = vsyncpa %s12, 0
    %14 = vsyncpa [#allocation6], 0
    %15 = vsyncpa [#allocation9], 0
    %16 = vsyncpa [#allocation12], 0
    %17 = vsyncpa [#allocation4], 0
    %s18 = scalar_lea.sflag [#allocation4], 1
    %19 = vsyncpa %s18, 0
    loop: start=0, step=1, limit=6
    $region2: #{tpu_custom_call.1} parent=1 // loop_pre_header
      _
    $region3: #{tpu_custom_call.1} parent=1 // loop_header
      %s21 = sphi 0, %s25
      %p22 = scmp.ge.s32.totalorder %s21, 6
      %s28 = sphi 0, %s40
      %s29 = sphi 0, %s36
      %s30 = sphi 0, %s28
      %s31 = sphi 0, %s29
      %s32 = sphi 0, %s30
      %s33 = sphi 0, %s31
      %s43 = sphi 0, %s45
      %s46 = sphi 0, %s43
      %s47 = sphi 0, %s46
      %s63 = sphi 0, %s47
      %s67 = sphi 0, %s67
      %s69 = sphi 0, %s67
      %s70 = sphi 0, %s69
      %s84 = sphi 0, %s70
      %s88 = sphi 0, %s88
      %s90 = sphi 0, %s88
      %s91 = sphi 0, %s90
      %s105 = sphi 0, %s91
      %s109 = sphi 0, %s109
      %s111 = sphi 0, %s109
      %s112 = sphi 0, %s111
      %s126 = sphi 0, %s112
      %s132 = sphi 0, %s134
      %s135 = sphi 0, %s132
      %s136 = sphi 0, %s135
      %s152 = sphi 0, %s136
      %s158 = sphi 0, %s160
      %s161 = sphi 0, %s158
      %s162 = sphi 0, %s161
      %s178 = sphi 0, %s162
      %s186 = sphi 0, %s188
      %s189 = sphi 0, %s186
      %s190 = sphi 0, %s189
      %s206 = sphi 0, %s190
    $region4: #{tpu_custom_call.1} parent=1 // loop_header_branch
      %24 = sbr.rel (%p22) target = $region8
    $region5: #{tpu_custom_call.1} parent=1 // loop_body
      %s26 = ssub.s32 %s21, 1
      %s27 = ssub.s32 %s21, 2
      %s34 = sadd.s32 1, %s29
      %p35 = scmp.ge.s32.totalorder %s34, 1
      %s36 = scalar_select %p35, 0, %s34
      %s37 = sadd.s32 1, %s28
      %s38 = scalar_select %p35, %s37, %s28
      %p39 = scmp.ge.s32.totalorder %s38, 4
      %s40 = scalar_select %p39, 0, %s38
      %s41 = ssub.s32 %s28, %s40
      %p42 = scmp.eq.s32.totalorder %s41, 0
      %s44 = sadd.s32 %s43, 1
      %s45 = scalar_select %p42, %s43, %s44
      %p48 = pneg %p42
      %p49 = scmp.eq.s32.totalorder %s21, 3
      %p50 = por %p48, %p49
      %p51 = scmp.ne.s32.totalorder %s43, %s46
      %p52 = scmp.eq.s32.totalorder %s21, 0
      %p53 = por %p51, %p52
      %p54 = scmp.ne.s32.totalorder %s43, %s46
      %p55 = scmp.eq.s32.totalorder %s26, 3
      %p56 = por %p54, %p55
      %p57 = scmp.ne.s32.totalorder %s46, %s47
      %p58 = scmp.eq.s32.totalorder %s26, 0
      %p59 = por %p57, %p58
      %p60 = scmp.ne.s32.totalorder %s46, %s47
      %p61 = scmp.eq.s32.totalorder %s27, 3
      %p62 = por %p60, %p61
      %p64 = scmp.ne.s32.totalorder %s47, %s63
      %p65 = scmp.eq.s32.totalorder %s27, 0
      %p66 = por %p64, %p65
      %s68 = sadd.s32 %s67, 1
      %p71 = scmp.eq.s32.totalorder %s21, 3
      %p72 = scmp.ne.s32.totalorder %s67, %s69
      %p73 = scmp.eq.s32.totalorder %s21, 0
      %p74 = por %p72, %p73
      %p75 = scmp.ne.s32.totalorder %s67, %s69
      %p76 = scmp.eq.s32.totalorder %s26, 3
      %p77 = por %p75, %p76
      %p78 = scmp.ne.s32.totalorder %s69, %s70
      %p79 = scmp.eq.s32.totalorder %s26, 0
      %p80 = por %p78, %p79
      %p81 = scmp.ne.s32.totalorder %s69, %s70
      %p82 = scmp.eq.s32.totalorder %s27, 3
      %p83 = por %p81, %p82
      %p85 = scmp.ne.s32.totalorder %s70, %s84
      %p86 = scmp.eq.s32.totalorder %s27, 0
      %p87 = por %p85, %p86
      %s89 = sadd.s32 %s88, 1
      %p92 = scmp.eq.s32.totalorder %s21, 3
      %p93 = scmp.ne.s32.totalorder %s88, %s90
      %p94 = scmp.eq.s32.totalorder %s21, 0
      %p95 = por %p93, %p94
      %p96 = scmp.ne.s32.totalorder %s88, %s90
      %p97 = scmp.eq.s32.totalorder %s26, 3
      %p98 = por %p96, %p97
      %p99 = scmp.ne.s32.totalorder %s90, %s91
      %p100 = scmp.eq.s32.totalorder %s26, 0
      %p101 = por %p99, %p100
      %p102 = scmp.ne.s32.totalorder %s90, %s91
      %p103 = scmp.eq.s32.totalorder %s27, 3
      %p104 = por %p102, %p103
      %p106 = scmp.ne.s32.totalorder %s91, %s105
      %p107 = scmp.eq.s32.totalorder %s27, 0
      %p108 = por %p106, %p107
      %s110 = sadd.s32 %s109, 1
      %p113 = scmp.eq.s32.totalorder %s21, 3
      %p114 = scmp.ne.s32.totalorder %s109, %s111
      %p115 = scmp.eq.s32.totalorder %s21, 0
      %p116 = por %p114, %p115
      %p117 = scmp.ne.s32.totalorder %s109, %s111
      %p118 = scmp.eq.s32.totalorder %s26, 3
      %p119 = por %p117, %p118
      %p120 = scmp.ne.s32.totalorder %s111, %s112
      %p121 = scmp.eq.s32.totalorder %s26, 0
      %p122 = por %p120, %p121
      %p123 = scmp.ne.s32.totalorder %s111, %s112
      %p124 = scmp.eq.s32.totalorder %s27, 3
      %p125 = por %p123, %p124
      %p127 = scmp.ne.s32.totalorder %s112, %s126
      %p128 = scmp.eq.s32.totalorder %s27, 0
      %p129 = por %p127, %p128
      %s130 = ssub.s32 %s29, %s36
      %p131 = scmp.eq.s32.totalorder %s130, 0
      %s133 = sadd.s32 %s132, 1
      %s134 = scalar_select %p131, %s132, %s133
      %p137 = pneg %p131
      %p138 = scmp.eq.s32.totalorder %s21, 3
      %p139 = por %p137, %p138
      %p140 = scmp.ne.s32.totalorder %s132, %s135
      %p141 = scmp.eq.s32.totalorder %s21, 0
      %p142 = por %p140, %p141
      %p143 = scmp.ne.s32.totalorder %s132, %s135
      %p144 = scmp.eq.s32.totalorder %s26, 3
      %p145 = por %p143, %p144
      %p146 = scmp.ne.s32.totalorder %s135, %s136
      %p147 = scmp.eq.s32.totalorder %s26, 0
      %p148 = por %p146, %p147
      %p149 = scmp.ne.s32.totalorder %s135, %s136
      %p150 = scmp.eq.s32.totalorder %s27, 3
      %p151 = por %p149, %p150
      %p153 = scmp.ne.s32.totalorder %s136, %s152
      %p154 = scmp.eq.s32.totalorder %s27, 0
      %p155 = por %p153, %p154
      %s156 = ssub.s32 %s29, %s36
      %p157 = scmp.eq.s32.totalorder %s156, 0
      %s159 = sadd.s32 %s158, 1
      %s160 = scalar_select %p157, %s158, %s159
      %p163 = pneg %p157
      %p164 = scmp.eq.s32.totalorder %s21, 3
      %p165 = por %p163, %p164
      %p166 = scmp.ne.s32.totalorder %s158, %s161
      %p167 = scmp.eq.s32.totalorder %s21, 0
      %p168 = por %p166, %p167
      %p169 = scmp.ne.s32.totalorder %s158, %s161
      %p170 = scmp.eq.s32.totalorder %s26, 3
      %p171 = por %p169, %p170
      %p172 = scmp.ne.s32.totalorder %s161, %s162
      %p173 = scmp.eq.s32.totalorder %s26, 0
      %p174 = por %p172, %p173
      %p175 = scmp.ne.s32.totalorder %s161, %s162
      %p176 = scmp.eq.s32.totalorder %s27, 3
      %p177 = por %p175, %p176
      %p179 = scmp.ne.s32.totalorder %s162, %s178
      %p180 = scmp.eq.s32.totalorder %s27, 0
      %p181 = por %p179, %p180
      %s182 = ssub.s32 %s28, %s40
      %s183 = ssub.s32 %s29, %s36
      %s184 = sor.u32 %s182, %s183
      %p185 = scmp.eq.s32.totalorder %s184, 0
      %s187 = sadd.s32 %s186, 1
      %s188 = scalar_select %p185, %s186, %s187
      %p191 = pneg %p185
      %p192 = scmp.eq.s32.totalorder %s21, 3
      %p193 = por %p191, %p192
      %p194 = scmp.ne.s32.totalorder %s186, %s189
      %p195 = scmp.eq.s32.totalorder %s21, 0
      %p196 = por %p194, %p195
      %p197 = scmp.ne.s32.totalorder %s186, %s189
      %p198 = scmp.eq.s32.totalorder %s26, 3
      %p199 = por %p197, %p198
      %p200 = scmp.ne.s32.totalorder %s189, %s190
      %p201 = scmp.eq.s32.totalorder %s26, 0
      %p202 = por %p200, %p201
      %p203 = scmp.ne.s32.totalorder %s189, %s190
      %p204 = scmp.eq.s32.totalorder %s27, 3
      %p205 = por %p203, %p204
      %p207 = scmp.ne.s32.totalorder %s190, %s206
      %p208 = scmp.eq.s32.totalorder %s27, 0
      %p209 = por %p207, %p208
      %p210 = scmp.le.s32.totalorder 1, %s21
      %p211 = scmp.lt.s32.totalorder %s21, 5
      %p212 = pnand %p210, %p211
      %p213 = pneg %p212
      // Predicated region
      $region9: #{tpu_custom_call.1} parent=5 // pred_check
        _
      $region10: #{tpu_custom_call.1} parent=5 // pred_check_branch
        %215 = sbr.rel (%p212) target = $region12
      $region11: #{tpu_custom_call.1} parent=5 // pred_region
        %s216 = ssub.s32 %s21, 1
        // Predicated region
        $region13: #{tpu_custom_call.1} parent=11 // pred_check
          %p217 = pneg %p80
        $region14: #{tpu_custom_call.1} parent=11 // pred_check_branch
          %219 = sbr.rel (%p217) target = $region16
        $region15: #{tpu_custom_call.1} parent=11 // pred_region
          %s221 = ssub.s32 1024, 1024
          %222 = vsyncadd [#allocation6], %s221
          %s223 = sshll.u32 [#allocation5], 4
          %s224 = int_to_ptr.vmem [resolvable:$true] %s223
          %229 = dma.hbm_to_vmem [thread:$0]  %s1, 1024, %s224, [#allocation6], 128, 128, 8
        $region16: #{tpu_custom_call.1} parent=11 // pred_fallthru
          _
        // Predicated region
        $region17: #{tpu_custom_call.1} parent=11 // pred_check
          %p230 = pneg %p101
        $region18: #{tpu_custom_call.1} parent=11 // pred_check_branch
          %232 = sbr.rel (%p230) target = $region20
        $region19: #{tpu_custom_call.1} parent=11 // pred_region
          %s234 = ssub.s32 1024, 1024
          %235 = vsyncadd [#allocation6], %s234
          %s236 = sshll.u32 [#allocation7], 4
          %s237 = int_to_ptr.vmem [resolvable:$true] %s236
          %242 = dma.hbm_to_vmem [thread:$0]  %s2, 1024, %s237, [#allocation6], 128, 128, 8
        $region20: #{tpu_custom_call.1} parent=11 // pred_fallthru
          _
        // Predicated region
        $region21: #{tpu_custom_call.1} parent=11 // pred_check
          %p243 = pneg %p122
        $region22: #{tpu_custom_call.1} parent=11 // pred_check_branch
          %245 = sbr.rel (%p243) target = $region24
        $region23: #{tpu_custom_call.1} parent=11 // pred_region
          %s247 = ssub.s32 16, 16
          %248 = vsyncadd [#allocation9], %s247
          %s250 = sshll.u32 [#allocation8], 4
          %s251 = int_to_ptr.vmem [resolvable:$true] %s250
          %253 = dma.hbm_to_vmem [thread:$0]  %s3, 16, %s251, [#allocation9]
        $region24: #{tpu_custom_call.1} parent=11 // pred_fallthru
          _
        // Predicated region
        $region25: #{tpu_custom_call.1} parent=11 // pred_check
          %p254 = pneg %p148
        $region26: #{tpu_custom_call.1} parent=11 // pred_check_branch
          %256 = sbr.rel (%p254) target = $region28
        $region27: #{tpu_custom_call.1} parent=11 // pred_region
          %s258 = ssub.s32 65536, 65536
          %259 = vsyncadd [#allocation9], %s258
          %s260 = smul.addr %s31, 64
          %s261 = scalar_lea.hbm %s4, %s260
          %s262 = sshll.u32 [#allocation10], 4
          %s263 = int_to_ptr.vmem [resolvable:$true] %s262
          %268 = dma.hbm_to_vmem [thread:$0]  %s261, 65536, %s263, [#allocation9], 64, 64, 4
        $region28: #{tpu_custom_call.1} parent=11 // pred_fallthru
          _
        // Predicated region
        $region29: #{tpu_custom_call.1} parent=11 // pred_check
          %p269 = pneg %p174
        $region30: #{tpu_custom_call.1} parent=11 // pred_check_branch
          %271 = sbr.rel (%p269) target = $region32
        $region31: #{tpu_custom_call.1} parent=11 // pred_region
          %s273 = ssub.s32 2048, 2048
          %274 = vsyncadd [#allocation12], %s273
          %s275 = smul.addr %s31, 128
          %s276 = scalar_lea.hbm %s5, %s275
          %s277 = sshll.u32 [#allocation11], 4
          %s278 = int_to_ptr.vmem [resolvable:$true] %s277
          %283 = dma.hbm_to_vmem [thread:$0]  %s276, 2048, %s278, [#allocation12], 128, 128, 8
        $region32: #{tpu_custom_call.1} parent=11 // pred_fallthru
          _
      $region12: #{tpu_custom_call.1} parent=5 // pred_fallthru
        _
      %p284 = scmp.lt.s32.totalorder %s21, 4
      // Predicated region
      $region33: #{tpu_custom_call.1} parent=5 // pred_check
        %p285 = pneg %p284
      $region34: #{tpu_custom_call.1} parent=5 // pred_check_branch
        %287 = sbr.rel (%p285) target = $region36
      $region35: #{tpu_custom_call.1} parent=5 // pred_region
        // Predicated region
        $region37: #{tpu_custom_call.1} parent=35 // pred_check
          %p288 = pneg %p53
        $region38: #{tpu_custom_call.1} parent=35 // pred_check_branch
          %290 = sbr.rel (%p288) target = $region40
        $region39: #{tpu_custom_call.1} parent=35 // pred_region
          %s291 = sand.u32 %s43, 1
          %s292 = scalar_lea.sflag [#allocation3], %s291
          %s293 = sand.u32 %s43, 1
          %s294 = smul.addr %s293, 8
          %s295 = scalar_lea.vmem [#allocation2], %s294
          %s297 = ssub.s32 128, 128
          %298 = vsyncadd %s292, %s297
          %s299 = smul.addr %s28, 128
          %s300 = scalar_lea.hbm %s0, %s299
          %s302 = sshll.u32 %s295, 4
          %s303 = int_to_ptr.vmem [resolvable:$true] %s302
          %305 = dma.hbm_to_vmem [thread:$0]  %s300, 128, %s303, %s292
        $region40: #{tpu_custom_call.1} parent=35 // pred_fallthru
          _
      $region36: #{tpu_custom_call.1} parent=5 // pred_fallthru
        _
      %p306 = scmp.le.s32.totalorder 1, %s21
      %p307 = scmp.lt.s32.totalorder %s21, 5
      %p308 = pnand %p306, %p307
      %p309 = pneg %p308
      // Predicated region
      $region41: #{tpu_custom_call.1} parent=5 // pred_check
        _
      $region42: #{tpu_custom_call.1} parent=5 // pred_check_branch
        %311 = sbr.rel (%p308) target = $region44
      $region43: #{tpu_custom_call.1} parent=5 // pred_region
        %s312 = ssub.s32 %s21, 1
        %s313 = sand.u32 %s46, 1
        %s314 = scalar_lea.sflag [#allocation3], %s313
        %s315 = sand.u32 %s46, 1
        %s316 = smul.addr %s315, 8
        %s317 = scalar_lea.vmem [#allocation2], %s316
        // Predicated region
        $region45: #{tpu_custom_call.1} parent=43 // pred_check
          %p318 = pneg %p59
        $region46: #{tpu_custom_call.1} parent=43 // pred_check_branch
          %320 = sbr.rel (%p318) target = $region48
        $region47: #{tpu_custom_call.1} parent=43 // pred_region
          %321 = dma.done %s314, 128
        $region48: #{tpu_custom_call.1} parent=43 // pred_fallthru
          _
        // Predicated region
        $region49: #{tpu_custom_call.1} parent=43 // pred_check
          %p322 = pneg %p80
        $region50: #{tpu_custom_call.1} parent=43 // pred_check_branch
          %324 = sbr.rel (%p322) target = $region52
        $region51: #{tpu_custom_call.1} parent=43 // pred_region
          %325 = dma.done [#allocation6], 1024
        $region52: #{tpu_custom_call.1} parent=43 // pred_fallthru
          _
        // Predicated region
        $region53: #{tpu_custom_call.1} parent=43 // pred_check
          %p326 = pneg %p101
        $region54: #{tpu_custom_call.1} parent=43 // pred_check_branch
          %328 = sbr.rel (%p326) target = $region56
        $region55: #{tpu_custom_call.1} parent=43 // pred_region
          %329 = dma.done [#allocation6], 1024
        $region56: #{tpu_custom_call.1} parent=43 // pred_fallthru
          _
        // Predicated region
        $region57: #{tpu_custom_call.1} parent=43 // pred_check
          %p330 = pneg %p122
        $region58: #{tpu_custom_call.1} parent=43 // pred_check_branch
          %332 = sbr.rel (%p330) target = $region60
        $region59: #{tpu_custom_call.1} parent=43 // pred_region
          %333 = dma.done [#allocation9], 16
        $region60: #{tpu_custom_call.1} parent=43 // pred_fallthru
          _
        // Predicated region
        $region61: #{tpu_custom_call.1} parent=43 // pred_check
          %p334 = pneg %p148
        $region62: #{tpu_custom_call.1} parent=43 // pred_check_branch
          %336 = sbr.rel (%p334) target = $region64
        $region63: #{tpu_custom_call.1} parent=43 // pred_region
          %337 = dma.done [#allocation9], 65536
        $region64: #{tpu_custom_call.1} parent=43 // pred_fallthru
          _
        // Predicated region
        $region65: #{tpu_custom_call.1} parent=43 // pred_check
          %p338 = pneg %p174
        $region66: #{tpu_custom_call.1} parent=43 // pred_check_branch
          %340 = sbr.rel (%p338) target = $region68
        $region67: #{tpu_custom_call.1} parent=43 // pred_region
          %341 = dma.done [#allocation12], 2048
        $region68: #{tpu_custom_call.1} parent=43 // pred_fallthru
          _
        %s342 = sand.u32 %s46, 1
        %s343 = scalar_lea.sflag [#allocation3], %s342
        %s344 = sand.u32 %s46, 1
        %s345 = smul.addr %s344, 8
        %s346 = scalar_lea.vmem [#allocation2], %s345
        %p347 = pneg %p59
        %p348 = pneg %p56
        %p349 = pneg %p80
        %p350 = pneg %p77
        %p351 = pneg %p101
        %p352 = pneg %p98
        %p353 = pneg %p122
        %p354 = pneg %p119
        %p355 = pneg %p148
        %p356 = pneg %p145
        %p357 = pneg %p174
        %p358 = pneg %p171
        %p359 = pneg %p202
        %p360 = pneg %p199
        %s361 = sand.u32 %s189, 1
        %s362 = scalar_lea.sflag [#allocation4], %s361
        %s363 = sand.u32 %s189, 1
        %s364 = smul.addr %s363, 8
        %s365 = scalar_lea.vmem [#allocation13], %s364
        %v367 = vld [vmem:[%s317] sm:$0xff]
        %v368 = vld [vmem:[#allocation5] sm:$0xff]
        %v369 = vld [vmem:[#allocation5 + $0x8] sm:$0xff]
        %v370 = vld [vmem:[#allocation5 + $0x10] sm:$0xff]
        %v371 = vld [vmem:[#allocation5 + $0x18] sm:$0xff]
        %v372 = vld [vmem:[#allocation5 + $0x20] sm:$0xff]
        %v373 = vld [vmem:[#allocation5 + $0x28] sm:$0xff]
        %v374 = vld [vmem:[#allocation5 + $0x30] sm:$0xff]
        %v375 = vld [vmem:[#allocation5 + $0x38] sm:$0xff]
        %v376 = vld [vmem:[#allocation7] sm:$0xff]
        %v377 = vld [vmem:[#allocation7 + $0x8] sm:$0xff]
        %v378 = vld [vmem:[#allocation7 + $0x10] sm:$0xff]
        %v379 = vld [vmem:[#allocation7 + $0x18] sm:$0xff]
        %v380 = vld [vmem:[#allocation7 + $0x20] sm:$0xff]
        %v381 = vld [vmem:[#allocation7 + $0x28] sm:$0xff]
        %v382 = vld [vmem:[#allocation7 + $0x30] sm:$0xff]
        %v383 = vld [vmem:[#allocation7 + $0x38] sm:$0xff]
        %v384 = vmul.f32 %v367, %v367
        %vm385 = vcmask 523264
        %v387 = vsel %vm385, %v384, 0
        %389 = vmatprep.subr.mxu0 0.0
        %390 = vmatpush1.msra.mxu0 0.0
        %391 = vmatprep.subr.mxu0 0.0
        %392 = vmatpush1.msra.mxu0 0.0
        %393 = vmatprep.subr.mxu0 0.0
        %394 = vmatpush1.msra.mxu0 0.0
        %395 = vmatprep.subr.mxu0 0.0
        %396 = vmatpush1.msra.mxu0 0.0
        %397 = vmatprep.subr.mxu0 0.0
        %398 = vmatpush1.msra.mxu0 0.0
        %399 = vmatprep.subr.mxu0 0.0
        %400 = vmatpush1.msra.mxu0 0.0
        %401 = vmatprep.subr.mxu0 0.0
        %402 = vmatpush1.msra.mxu0 0.0
        %403 = vmatprep.subr.mxu0 0.0
        %404 = vmatpush1.msra.mxu0 0.0
        %405 = vmatprep.subr.mxu0 0.0
        %406 = vmatpush1.msra.mxu0 %v375
        %407 = vmatprep.subr.mxu0 0.0
        %408 = vmatpush1.msra.mxu0 %v374
        %409 = vmatprep.subr.mxu0 0.0
        %410 = vmatpush1.msra.mxu0 %v373
        %411 = vmatprep.subr.mxu0 0.0
        %412 = vmatpush1.msra.mxu0 %v372
        %413 = vmatprep.subr.mxu0 0.0
        %414 = vmatpush1.msra.mxu0 %v371
        %415 = vmatprep.subr.mxu0 0.0
        %416 = vmatpush1.msra.mxu0 %v370
        %417 = vmatprep.subr.mxu0 0.0
        %418 = vmatpush1.msra.mxu0 %v369
        %419 = vmatprep.subr.mxu0 0.0
        %420 = vmatpush1.msra.mxu0 %v368
        %421 = vmatprep.subr.mxu0 0.0
        %422 = vmatpush2.msra.mxu0 0.0
        %423 = vmatprep.subr.mxu0 0.0
        %424 = vmatpush2.msra.mxu0 0.0
        %425 = vmatprep.subr.mxu0 0.0
        %426 = vmatpush2.msra.mxu0 0.0
        %427 = vmatprep.subr.mxu0 0.0
        %428 = vmatpush2.msra.mxu0 0.0
        %429 = vmatprep.subr.mxu0 0.0
        %430 = vmatpush2.msra.mxu0 0.0
        %431 = vmatprep.subr.mxu0 0.0
        %432 = vmatpush2.msra.mxu0 0.0
        %433 = vmatprep.subr.mxu0 0.0
        %434 = vmatpush2.msra.mxu0 0.0
        %435 = vmatprep.subr.mxu0 0.0
        %436 = vmatpush2.msra.mxu0 0.0
        %437 = vmatprep.subr.mxu0 0.0
        %438 = vmatpush2.msra.mxu0 0.0
        %439 = vmatprep.subr.mxu0 0.0
        %440 = vmatpush2.msra.mxu0 0.0
        %441 = vmatprep.subr.mxu0 0.0
        %442 = vmatpush2.msra.mxu0 0.0
        %443 = vmatprep.subr.mxu0 0.0
        %444 = vmatpush2.msra.mxu0 0.0
        %445 = vmatprep.subr.mxu0 0.0
        %446 = vmatpush2.msra.mxu0 0.0
        %447 = vmatprep.subr.mxu0 0.0
        %448 = vmatpush2.msra.mxu0 0.0
        %449 = vmatprep.subr.mxu0 0.0
        %450 = vmatpush2.msra.mxu0 0.0
        %451 = vmatprep.subr.mxu0 0.0
        %452 = vmatpush2.msra.mxu0 0.0
        %453 = vmatprep.mubr.f32.mxu0 0.0
        %454 = vmatmul.mubr.f32.gmra.mxu0 %v387
        %v455 = vpop.f32.mrf.mxu0
        %v456 = vadd.f32 0.0, %v455
        %v457 = vpop.f32.mrf.mxu0
        %458 = vdwg.mxu0
        %v460 = vsel %vm385, %v367, 0
        %462 = vmatprep.subr.mxu0 0.0
        %463 = vmatpush1.msra.mxu0 0.0
        %464 = vmatprep.subr.mxu0 0.0
        %465 = vmatpush1.msra.mxu0 0.0
        %466 = vmatprep.subr.mxu0 0.0
        %467 = vmatpush1.msra.mxu0 0.0
        %468 = vmatprep.subr.mxu0 0.0
        %469 = vmatpush1.msra.mxu0 0.0
        %470 = vmatprep.subr.mxu0 0.0
        %471 = vmatpush1.msra.mxu0 0.0
        %472 = vmatprep.subr.mxu0 0.0
        %473 = vmatpush1.msra.mxu0 0.0
        %474 = vmatprep.subr.mxu0 0.0
        %475 = vmatpush1.msra.mxu0 0.0
        %476 = vmatprep.subr.mxu0 0.0
        %477 = vmatpush1.msra.mxu0 0.0
        %478 = vmatprep.subr.mxu0 0.0
        %479 = vmatpush1.msra.mxu0 %v383
        %480 = vmatprep.subr.mxu0 0.0
        %481 = vmatpush1.msra.mxu0 %v382
        %482 = vmatprep.subr.mxu0 0.0
        %483 = vmatpush1.msra.mxu0 %v381
        %484 = vmatprep.subr.mxu0 0.0
        %485 = vmatpush1.msra.mxu0 %v380
        %486 = vmatprep.subr.mxu0 0.0
        %487 = vmatpush1.msra.mxu0 %v379
        %488 = vmatprep.subr.mxu0 0.0
        %489 = vmatpush1.msra.mxu0 %v378
        %490 = vmatprep.subr.mxu0 0.0
        %491 = vmatpush1.msra.mxu0 %v377
        %492 = vmatprep.subr.mxu0 0.0
        %493 = vmatpush1.msra.mxu0 %v376
        %494 = vmatprep.subr.mxu0 0.0
        %495 = vmatpush2.msra.mxu0 0.0
        %496 = vmatprep.subr.mxu0 0.0
        %497 = vmatpush2.msra.mxu0 0.0
        %498 = vmatprep.subr.mxu0 0.0
        %499 = vmatpush2.msra.mxu0 0.0
        %500 = vmatprep.subr.mxu0 0.0
        %501 = vmatpush2.msra.mxu0 0.0
        %502 = vmatprep.subr.mxu0 0.0
        %503 = vmatpush2.msra.mxu0 0.0
        %504 = vmatprep.subr.mxu0 0.0
        %505 = vmatpush2.msra.mxu0 0.0
        %506 = vmatprep.subr.mxu0 0.0
        %507 = vmatpush2.msra.mxu0 0.0
        %508 = vmatprep.subr.mxu0 0.0
        %509 = vmatpush2.msra.mxu0 0.0
        %510 = vmatprep.subr.mxu0 0.0
        %511 = vmatpush2.msra.mxu0 0.0
        %512 = vmatprep.subr.mxu0 0.0
        %513 = vmatpush2.msra.mxu0 0.0
        %514 = vmatprep.subr.mxu0 0.0
        %515 = vmatpush2.msra.mxu0 0.0
        %516 = vmatprep.subr.mxu0 0.0
        %517 = vmatpush2.msra.mxu0 0.0
        %518 = vmatprep.subr.mxu0 0.0
        %519 = vmatpush2.msra.mxu0 0.0
        %520 = vmatprep.subr.mxu0 0.0
        %521 = vmatpush2.msra.mxu0 0.0
        %522 = vmatprep.subr.mxu0 0.0
        %523 = vmatpush2.msra.mxu0 0.0
        %524 = vmatprep.subr.mxu0 0.0
        %525 = vmatpush2.msra.mxu0 0.0
        %526 = vmatprep.mubr.f32.mxu0 0.0
        %527 = vmatmul.mubr.f32.gmra.mxu0 %v460
        %v528 = vpop.f32.mrf.mxu0
        %v529 = vadd.f32 0.0, %v528
        %v530 = vpop.f32.mrf.mxu0
        %531 = vdwg.mxu0
        %v532 = vmul.f32 %v529, 2.0
        %v533 = vsub.f32 %v532, %v456
        %v534 = vld [vmem:[#allocation8] sm:$0x1]
        %v536 = vlaneseq
        %v537 = vshrl.u32 %v536, 7
        %v538 = vsub.s32 0, %v537
        %v539 = vrot.slane %v534, %v538
        %v541 = vsub.f32 %v533, %v539
        %542 = vmax.xlane.f32.xlu0 %v541
        %v543 = vpop.xlane.xlu0 %542
        %v544 = vsub.f32 %v541, %v543
        %v545 = vmul.f32 %v544, 1.442695
        %v546 = vpow.pop %v545
        %547 = vadd.xlane.f32.xlu0 %v546
        %v548 = vpop.xlane.xlu0 %547
        %v549 = vrcp.pop %v548
        %v550 = vmul.f32 %v546, %v549
        %v551 = vld [vmem:[#allocation11] sm:$0xff]
        %v552 = vld [vmem:[#allocation11 + $0x8] sm:$0xff]
        %v553 = vld [vmem:[#allocation11 + $0x10] sm:$0xff]
        %v554 = vld [vmem:[#allocation11 + $0x18] sm:$0xff]
        %v555 = vld [vmem:[#allocation11 + $0x20] sm:$0xff]
        %v556 = vld [vmem:[#allocation11 + $0x28] sm:$0xff]
        %v557 = vld [vmem:[#allocation11 + $0x30] sm:$0xff]
        %v558 = vld [vmem:[#allocation11 + $0x38] sm:$0xff]
        %v559 = vld [vmem:[#allocation11 + $0x40] sm:$0xff]
        %v560 = vld [vmem:[#allocation11 + $0x48] sm:$0xff]
        %v561 = vld [vmem:[#allocation11 + $0x50] sm:$0xff]
        %v562 = vld [vmem:[#allocation11 + $0x58] sm:$0xff]
        %v563 = vld [vmem:[#allocation11 + $0x60] sm:$0xff]
        %v564 = vld [vmem:[#allocation11 + $0x68] sm:$0xff]
        %v565 = vld [vmem:[#allocation11 + $0x70] sm:$0xff]
        %v566 = vld [vmem:[#allocation11 + $0x78] sm:$0xff]
        %v567 = vlaneseq
        %v568 = vshrl.u32 %v567, 7
        %v569 = vsub.s32 0, %v568
        %v570 = vrot.slane %v367, %v569
        %572 = vbcast.lane.b32.xlu0 %v570, 256
        %v573 = vpop.permute.xlu0 %572
        %s575 = sor.u32 256, 8
        %576 = vbcast.lane.b32.xlu0 %v570, %s575
        %v577 = vpop.permute.xlu0 %576
        %s579 = sor.u32 256, 16
        %580 = vbcast.lane.b32.xlu0 %v570, %s579
        %v581 = vpop.permute.xlu0 %580
        %s583 = sor.u32 256, 24
        %584 = vbcast.lane.b32.xlu0 %v570, %s583
        %v585 = vpop.permute.xlu0 %584
        %s587 = sor.u32 256, 32
        %588 = vbcast.lane.b32.xlu0 %v570, %s587
        %v589 = vpop.permute.xlu0 %588
        %s591 = sor.u32 256, 40
        %592 = vbcast.lane.b32.xlu0 %v570, %s591
        %v593 = vpop.permute.xlu0 %592
        %s595 = sor.u32 256, 48
        %596 = vbcast.lane.b32.xlu0 %v570, %s595
        %v597 = vpop.permute.xlu0 %596
        %s599 = sor.u32 256, 56
        %600 = vbcast.lane.b32.xlu0 %v570, %s599
        %v601 = vpop.permute.xlu0 %600
        %v602 = vlaneseq
        %v603 = vshrl.u32 %v602, 7
        %v604 = vsub.s32 1, %v603
        %v605 = vrot.slane %v367, %v604
        %607 = vbcast.lane.b32.xlu0 %v605, 256
        %v608 = vpop.permute.xlu0 %607
        %s610 = sor.u32 256, 8
        %611 = vbcast.lane.b32.xlu0 %v605, %s610
        %v612 = vpop.permute.xlu0 %611
        %s614 = sor.u32 256, 16
        %615 = vbcast.lane.b32.xlu0 %v605, %s614
        %v616 = vpop.permute.xlu0 %615
        %s618 = sor.u32 256, 24
        %619 = vbcast.lane.b32.xlu0 %v605, %s618
        %v620 = vpop.permute.xlu0 %619
        %s622 = sor.u32 256, 32
        %623 = vbcast.lane.b32.xlu0 %v605, %s622
        %v624 = vpop.permute.xlu0 %623
        %s626 = sor.u32 256, 40
        %627 = vbcast.lane.b32.xlu0 %v605, %s626
        %v628 = vpop.permute.xlu0 %627
        %s630 = sor.u32 256, 48
        %631 = vbcast.lane.b32.xlu0 %v605, %s630
        %v632 = vpop.permute.xlu0 %631
        %s634 = sor.u32 256, 56
        %635 = vbcast.lane.b32.xlu0 %v605, %s634
        %v636 = vpop.permute.xlu0 %635
        %v637 = vlaneseq
        %v638 = vshrl.u32 %v637, 7
        %v639 = vsub.s32 2, %v638
        %v640 = vrot.slane %v367, %v639
        %642 = vbcast.lane.b32.xlu0 %v640, 256
        %v643 = vpop.permute.xlu0 %642
        %s645 = sor.u32 256, 8
        %646 = vbcast.lane.b32.xlu0 %v640, %s645
        %v647 = vpop.permute.xlu0 %646
        %s649 = sor.u32 256, 16
        %650 = vbcast.lane.b32.xlu0 %v640, %s649
        %v651 = vpop.permute.xlu0 %650
        %s653 = sor.u32 256, 24
        %654 = vbcast.lane.b32.xlu0 %v640, %s653
        %v655 = vpop.permute.xlu0 %654
        %s657 = sor.u32 256, 32
        %658 = vbcast.lane.b32.xlu0 %v640, %s657
        %v659 = vpop.permute.xlu0 %658
        %s661 = sor.u32 256, 40
        %662 = vbcast.lane.b32.xlu0 %v640, %s661
        %v663 = vpop.permute.xlu0 %662
        %s665 = sor.u32 256, 48
        %666 = vbcast.lane.b32.xlu0 %v640, %s665
        %v667 = vpop.permute.xlu0 %666
        %s669 = sor.u32 256, 56
        %670 = vbcast.lane.b32.xlu0 %v640, %s669
        %v671 = vpop.permute.xlu0 %670
        %v672 = vlaneseq
        %v673 = vshrl.u32 %v672, 7
        %v674 = vsub.s32 3, %v673
        %v675 = vrot.slane %v367, %v674
        %677 = vbcast.lane.b32.xlu0 %v675, 256
        %v678 = vpop.permute.xlu0 %677
        %s680 = sor.u32 256, 8
        %681 = vbcast.lane.b32.xlu0 %v675, %s680
        %v682 = vpop.permute.xlu0 %681
        %s684 = sor.u32 256, 16
        %685 = vbcast.lane.b32.xlu0 %v675, %s684
        %v686 = vpop.permute.xlu0 %685
        %s688 = sor.u32 256, 24
        %689 = vbcast.lane.b32.xlu0 %v675, %s688
        %v690 = vpop.permute.xlu0 %689
        %s692 = sor.u32 256, 32
        %693 = vbcast.lane.b32.xlu0 %v675, %s692
        %v694 = vpop.permute.xlu0 %693
        %s696 = sor.u32 256, 40
        %697 = vbcast.lane.b32.xlu0 %v675, %s696
        %v698 = vpop.permute.xlu0 %697
        %s700 = sor.u32 256, 48
        %701 = vbcast.lane.b32.xlu0 %v675, %s700
        %v702 = vpop.permute.xlu0 %701
        %s704 = sor.u32 256, 56
        %705 = vbcast.lane.b32.xlu0 %v675, %s704
        %v706 = vpop.permute.xlu0 %705
        %v707 = vlaneseq
        %v708 = vshrl.u32 %v707, 7
        %v709 = vsub.s32 4, %v708
        %v710 = vrot.slane %v367, %v709
        %712 = vbcast.lane.b32.xlu0 %v710, 256
        %v713 = vpop.permute.xlu0 %712
        %s715 = sor.u32 256, 8
        %716 = vbcast.lane.b32.xlu0 %v710, %s715
        %v717 = vpop.permute.xlu0 %716
        %s719 = sor.u32 256, 16
        %720 = vbcast.lane.b32.xlu0 %v710, %s719
        %v721 = vpop.permute.xlu0 %720
        %s723 = sor.u32 256, 24
        %724 = vbcast.lane.b32.xlu0 %v710, %s723
        %v725 = vpop.permute.xlu0 %724
        %s727 = sor.u32 256, 32
        %728 = vbcast.lane.b32.xlu0 %v710, %s727
        %v729 = vpop.permute.xlu0 %728
        %s731 = sor.u32 256, 40
        %732 = vbcast.lane.b32.xlu0 %v710, %s731
        %v733 = vpop.permute.xlu0 %732
        %s735 = sor.u32 256, 48
        %736 = vbcast.lane.b32.xlu0 %v710, %s735
        %v737 = vpop.permute.xlu0 %736
        %s739 = sor.u32 256, 56
        %740 = vbcast.lane.b32.xlu0 %v710, %s739
        %v741 = vpop.permute.xlu0 %740
        %v742 = vlaneseq
        %v743 = vshrl.u32 %v742, 7
        %v744 = vsub.s32 5, %v743
        %v745 = vrot.slane %v367, %v744
        %747 = vbcast.lane.b32.xlu0 %v745, 256
        %v748 = vpop.permute.xlu0 %747
        %s750 = sor.u32 256, 8
        %751 = vbcast.lane.b32.xlu0 %v745, %s750
        %v752 = vpop.permute.xlu0 %751
        %s754 = sor.u32 256, 16
        %755 = vbcast.lane.b32.xlu0 %v745, %s754
        %v756 = vpop.permute.xlu0 %755
        %s758 = sor.u32 256, 24
        %759 = vbcast.lane.b32.xlu0 %v745, %s758
        %v760 = vpop.permute.xlu0 %759
        %s762 = sor.u32 256, 32
        %763 = vbcast.lane.b32.xlu0 %v745, %s762
        %v764 = vpop.permute.xlu0 %763
        %s766 = sor.u32 256, 40
        %767 = vbcast.lane.b32.xlu0 %v745, %s766
        %v768 = vpop.permute.xlu0 %767
        %s770 = sor.u32 256, 48
        %771 = vbcast.lane.b32.xlu0 %v745, %s770
        %v772 = vpop.permute.xlu0 %771
        %s774 = sor.u32 256, 56
        %775 = vbcast.lane.b32.xlu0 %v745, %s774
        %v776 = vpop.permute.xlu0 %775
        %v777 = vlaneseq
        %v778 = vshrl.u32 %v777, 7
        %v779 = vsub.s32 6, %v778
        %v780 = vrot.slane %v367, %v779
        %782 = vbcast.lane.b32.xlu0 %v780, 256
        %v783 = vpop.permute.xlu0 %782
        %s785 = sor.u32 256, 8
        %786 = vbcast.lane.b32.xlu0 %v780, %s785
        %v787 = vpop.permute.xlu0 %786
        %s789 = sor.u32 256, 16
        %790 = vbcast.lane.b32.xlu0 %v780, %s789
        %v791 = vpop.permute.xlu0 %790
        %s793 = sor.u32 256, 24
        %794 = vbcast.lane.b32.xlu0 %v780, %s793
        %v795 = vpop.permute.xlu0 %794
        %s797 = sor.u32 256, 32
        %798 = vbcast.lane.b32.xlu0 %v780, %s797
        %v799 = vpop.permute.xlu0 %798
        %s801 = sor.u32 256, 40
        %802 = vbcast.lane.b32.xlu0 %v780, %s801
        %v803 = vpop.permute.xlu0 %802
        %s805 = sor.u32 256, 48
        %806 = vbcast.lane.b32.xlu0 %v780, %s805
        %v807 = vpop.permute.xlu0 %806
        %s809 = sor.u32 256, 56
        %810 = vbcast.lane.b32.xlu0 %v780, %s809
        %v811 = vpop.permute.xlu0 %810
        %v812 = vlaneseq
        %v813 = vshrl.u32 %v812, 7
        %v814 = vsub.s32 7, %v813
        %v815 = vrot.slane %v367, %v814
        %817 = vbcast.lane.b32.xlu0 %v815, 256
        %v818 = vpop.permute.xlu0 %817
        %s820 = sor.u32 256, 8
        %821 = vbcast.lane.b32.xlu0 %v815, %s820
        %v822 = vpop.permute.xlu0 %821
        %s824 = sor.u32 256, 16
        %825 = vbcast.lane.b32.xlu0 %v815, %s824
        %v826 = vpop.permute.xlu0 %825
        %s828 = sor.u32 256, 24
        %829 = vbcast.lane.b32.xlu0 %v815, %s828
        %v830 = vpop.permute.xlu0 %829
        %s832 = sor.u32 256, 32
        %833 = vbcast.lane.b32.xlu0 %v815, %s832
        %v834 = vpop.permute.xlu0 %833
        %s836 = sor.u32 256, 40
        %837 = vbcast.lane.b32.xlu0 %v815, %s836
        %v838 = vpop.permute.xlu0 %837
        %s840 = sor.u32 256, 48
        %841 = vbcast.lane.b32.xlu0 %v815, %s840
        %v842 = vpop.permute.xlu0 %841
        %s844 = sor.u32 256, 56
        %845 = vbcast.lane.b32.xlu0 %v815, %s844
        %v846 = vpop.permute.xlu0 %845
        %v848 = vcombine.high %v550, %v550
        %v850 = vunpack.c.l.s4 1966171168
        %v851 = vunpack.c.0.s8 %v850
        %v852 = vlaneseq
        %v853 = vshrl.u32 %v852, 7
        %v854 = vsub.s32 %v851, %v853
        %v855 = vrot.slane %v550, %v854
        %v857 = vunpack.c.l.s4 1966171168
        %v858 = vunpack.c.0.s8 %v857
        %v859 = vlaneseq
        %v860 = vshrl.u32 %v859, 7
        %v861 = vsub.s32 %v858, %v860
        %v862 = vrot.slane %v848, %v861
        %v863 = vcombine.high %v855, %v855
        %v864 = vcombine.high %v862, %v862
        %v866 = vunpack.c.l.s4 1966171168
        %v867 = vunpack.c.0.s8 %v866
        %v868 = vlaneseq
        %v869 = vshrl.u32 %v868, 7
        %v870 = vsub.s32 %v867, %v869
        %v871 = vrot.slane %v855, %v870
        %v873 = vunpack.c.l.s4 1966171168
        %v874 = vunpack.c.0.s8 %v873
        %v875 = vlaneseq
        %v876 = vshrl.u32 %v875, 7
        %v877 = vsub.s32 %v874, %v876
        %v878 = vrot.slane %v862, %v877
        %v880 = vunpack.c.l.s4 1966171168
        %v881 = vunpack.c.0.s8 %v880
        %v882 = vlaneseq
        %v883 = vshrl.u32 %v882, 7
        %v884 = vsub.s32 %v881, %v883
        %v885 = vrot.slane %v863, %v884
        %v887 = vunpack.c.l.s4 1966171168
        %v888 = vunpack.c.0.s8 %v887
        %v889 = vlaneseq
        %v890 = vshrl.u32 %v889, 7
        %v891 = vsub.s32 %v888, %v890
        %v892 = vrot.slane %v864, %v891
        %v893 = vcombine.high %v871, %v871
        %v894 = vcombine.high %v878, %v878
        %v895 = vcombine.high %v885, %v885
        %v896 = vcombine.high %v892, %v892
        %v897 = vlaneseq
        %v898 = vshrl.u32 %v897, 7
        %v899 = vsub.s32 0, %v898
        %v900 = vrot.slane %v871, %v899
        %v901 = vlaneseq
        %v902 = vshrl.u32 %v901, 7
        %v903 = vsub.s32 0, %v902
        %v904 = vrot.slane %v885, %v903
        %v905 = vlaneseq
        %v906 = vshrl.u32 %v905, 7
        %v907 = vsub.s32 0, %v906
        %v908 = vrot.slane %v893, %v907
        %v909 = vlaneseq
        %v910 = vshrl.u32 %v909, 7
        %v911 = vsub.s32 0, %v910
        %v912 = vrot.slane %v895, %v911
        %v913 = vlaneseq
        %v914 = vshrl.u32 %v913, 7
        %v915 = vsub.s32 0, %v914
        %v916 = vrot.slane %v878, %v915
        %v917 = vlaneseq
        %v918 = vshrl.u32 %v917, 7
        %v919 = vsub.s32 0, %v918
        %v920 = vrot.slane %v892, %v919
        %v921 = vlaneseq
        %v922 = vshrl.u32 %v921, 7
        %v923 = vsub.s32 0, %v922
        %v924 = vrot.slane %v894, %v923
        %v925 = vlaneseq
        %v926 = vshrl.u32 %v925, 7
        %v927 = vsub.s32 0, %v926
        %v928 = vrot.slane %v896, %v927
        %v937 = vmul.f32 %v573, %v900
        %v938 = vmul.f32 %v577, %v900
        %v939 = vmul.f32 %v581, %v900
        %v940 = vmul.f32 %v585, %v900
        %v941 = vmul.f32 %v589, %v900
        %v942 = vmul.f32 %v593, %v900
        %v943 = vmul.f32 %v597, %v900
        %v944 = vmul.f32 %v601, %v900
        %v945 = vmul.f32 %v608, %v904
        %v946 = vmul.f32 %v612, %v904
        %v947 = vmul.f32 %v616, %v904
        %v948 = vmul.f32 %v620, %v904
        %v949 = vmul.f32 %v624, %v904
        %v950 = vmul.f32 %v628, %v904
        %v951 = vmul.f32 %v632, %v904
        %v952 = vmul.f32 %v636, %v904
        %v953 = vmul.f32 %v643, %v908
        %v954 = vmul.f32 %v647, %v908
        %v955 = vmul.f32 %v651, %v908
        %v956 = vmul.f32 %v655, %v908
        %v957 = vmul.f32 %v659, %v908
        %v958 = vmul.f32 %v663, %v908
        %v959 = vmul.f32 %v667, %v908
        %v960 = vmul.f32 %v671, %v908
        %v961 = vmul.f32 %v678, %v912
        %v962 = vmul.f32 %v682, %v912
        %v963 = vmul.f32 %v686, %v912
        %v964 = vmul.f32 %v690, %v912
        %v965 = vmul.f32 %v694, %v912
        %v966 = vmul.f32 %v698, %v912
        %v967 = vmul.f32 %v702, %v912
        %v968 = vmul.f32 %v706, %v912
        %v969 = vmul.f32 %v713, %v916
        %v970 = vmul.f32 %v717, %v916
        %v971 = vmul.f32 %v721, %v916
        %v972 = vmul.f32 %v725, %v916
        %v973 = vmul.f32 %v729, %v916
        %v974 = vmul.f32 %v733, %v916
        %v975 = vmul.f32 %v737, %v916
        %v976 = vmul.f32 %v741, %v916
        %v977 = vmul.f32 %v748, %v920
        %v978 = vmul.f32 %v752, %v920
        %v979 = vmul.f32 %v756, %v920
        %v980 = vmul.f32 %v760, %v920
        %v981 = vmul.f32 %v764, %v920
        %v982 = vmul.f32 %v768, %v920
        %v983 = vmul.f32 %v772, %v920
        %v984 = vmul.f32 %v776, %v920
        %v985 = vmul.f32 %v783, %v924
        %v986 = vmul.f32 %v787, %v924
        %v987 = vmul.f32 %v791, %v924
        %v988 = vmul.f32 %v795, %v924
        %v989 = vmul.f32 %v799, %v924
        %v990 = vmul.f32 %v803, %v924
        %v991 = vmul.f32 %v807, %v924
        %v992 = vmul.f32 %v811, %v924
        %v993 = vmul.f32 %v818, %v928
        %v994 = vmul.f32 %v822, %v928
        %v995 = vmul.f32 %v826, %v928
        %v996 = vmul.f32 %v830, %v928
        %v997 = vmul.f32 %v834, %v928
        %v998 = vmul.f32 %v838, %v928
        %v999 = vmul.f32 %v842, %v928
        %v1000 = vmul.f32 %v846, %v928
        %v1001 = vcombine.low %v937, %v953
        %v1002 = vcombine.high %v937, %v953
        %v1004 = vunpack.c.l.s4 1983009808
        %v1005 = vunpack.c.0.s8 %v1004
        %v1006 = vlaneseq
        %v1007 = vshrl.u32 %v1006, 7
        %v1008 = vsub.s32 %v1005, %v1007
        %v1009 = vrot.slane %v1001, %v1008
        %v1011 = vunpack.c.l.s4 1983009808
        %v1012 = vunpack.c.0.s8 %v1011
        %v1013 = vlaneseq
        %v1014 = vshrl.u32 %v1013, 7
        %v1015 = vsub.s32 %v1012, %v1014
        %v1016 = vrot.slane %v1002, %v1015
        %v1017 = vcombine.low %v945, %v961
        %v1018 = vcombine.high %v945, %v961
        %v1020 = vunpack.c.l.s4 1983009808
        %v1021 = vunpack.c.0.s8 %v1020
        %v1022 = vlaneseq
        %v1023 = vshrl.u32 %v1022, 7
        %v1024 = vsub.s32 %v1021, %v1023
        %v1025 = vrot.slane %v1017, %v1024
        %v1027 = vunpack.c.l.s4 1983009808
        %v1028 = vunpack.c.0.s8 %v1027
        %v1029 = vlaneseq
        %v1030 = vshrl.u32 %v1029, 7
        %v1031 = vsub.s32 %v1028, %v1030
        %v1032 = vrot.slane %v1018, %v1031
        %v1033 = vcombine.low %v969, %v985
        %v1034 = vcombine.high %v969, %v985
        %v1036 = vunpack.c.l.s4 1983009808
        %v1037 = vunpack.c.0.s8 %v1036
        %v1038 = vlaneseq
        %v1039 = vshrl.u32 %v1038, 7
        %v1040 = vsub.s32 %v1037, %v1039
        %v1041 = vrot.slane %v1033, %v1040
        %v1043 = vunpack.c.l.s4 1983009808
        %v1044 = vunpack.c.0.s8 %v1043
        %v1045 = vlaneseq
        %v1046 = vshrl.u32 %v1045, 7
        %v1047 = vsub.s32 %v1044, %v1046
        %v1048 = vrot.slane %v1034, %v1047
        %v1049 = vcombine.low %v977, %v993
        %v1050 = vcombine.high %v977, %v993
        %v1052 = vunpack.c.l.s4 1983009808
        %v1053 = vunpack.c.0.s8 %v1052
        %v1054 = vlaneseq
        %v1055 = vshrl.u32 %v1054, 7
        %v1056 = vsub.s32 %v1053, %v1055
        %v1057 = vrot.slane %v1049, %v1056
        %v1059 = vunpack.c.l.s4 1983009808
        %v1060 = vunpack.c.0.s8 %v1059
        %v1061 = vlaneseq
        %v1062 = vshrl.u32 %v1061, 7
        %v1063 = vsub.s32 %v1060, %v1062
        %v1064 = vrot.slane %v1050, %v1063
        %v1065 = vcombine.low %v1009, %v1025
        %v1066 = vcombine.high %v1009, %v1025
        %v1068 = vunpack.c.l.s4 1934713408
        %v1069 = vunpack.c.0.s8 %v1068
        %v1070 = vlaneseq
        %v1071 = vshrl.u32 %v1070, 7
        %v1072 = vsub.s32 %v1069, %v1071
        %v1073 = vrot.slane %v1065, %v1072
        %v1075 = vunpack.c.l.s4 1934713408
        %v1076 = vunpack.c.0.s8 %v1075
        %v1077 = vlaneseq
        %v1078 = vshrl.u32 %v1077, 7
        %v1079 = vsub.s32 %v1076, %v1078
        %v1080 = vrot.slane %v1066, %v1079
        %v1081 = vcombine.low %v1016, %v1032
        %v1082 = vcombine.high %v1016, %v1032
        %v1084 = vunpack.c.l.s4 1934713408
        %v1085 = vunpack.c.0.s8 %v1084
        %v1086 = vlaneseq
        %v1087 = vshrl.u32 %v1086, 7
        %v1088 = vsub.s32 %v1085, %v1087
        %v1089 = vrot.slane %v1081, %v1088
        %v1091 = vunpack.c.l.s4 1934713408
        %v1092 = vunpack.c.0.s8 %v1091
        %v1093 = vlaneseq
        %v1094 = vshrl.u32 %v1093, 7
        %v1095 = vsub.s32 %v1092, %v1094
        %v1096 = vrot.slane %v1082, %v1095
        %v1097 = vcombine.low %v1041, %v1057
        %v1098 = vcombine.high %v1041, %v1057
        %v1100 = vunpack.c.l.s4 1934713408
        %v1101 = vunpack.c.0.s8 %v1100
        %v1102 = vlaneseq
        %v1103 = vshrl.u32 %v1102, 7
        %v1104 = vsub.s32 %v1101, %v1103
        %v1105 = vrot.slane %v1097, %v1104
        %v1107 = vunpack.c.l.s4 1934713408
        %v1108 = vunpack.c.0.s8 %v1107
        %v1109 = vlaneseq
        %v1110 = vshrl.u32 %v1109, 7
        %v1111 = vsub.s32 %v1108, %v1110
        %v1112 = vrot.slane %v1098, %v1111
        %v1113 = vcombine.low %v1048, %v1064
        %v1114 = vcombine.high %v1048, %v1064
        %v1116 = vunpack.c.l.s4 1934713408
        %v1117 = vunpack.c.0.s8 %v1116
        %v1118 = vlaneseq
        %v1119 = vshrl.u32 %v1118, 7
        %v1120 = vsub.s32 %v1117, %v1119
        %v1121 = vrot.slane %v1113, %v1120
        %v1123 = vunpack.c.l.s4 1934713408
        %v1124 = vunpack.c.0.s8 %v1123
        %v1125 = vlaneseq
        %v1126 = vshrl.u32 %v1125, 7
        %v1127 = vsub.s32 %v1124, %v1126
        %v1128 = vrot.slane %v1114, %v1127
        %v1129 = vcombine.low %v1073, %v1105
        %v1130 = vcombine.high %v1073, %v1105
        %v1131 = vcombine.low %v1080, %v1112
        %v1132 = vcombine.high %v1080, %v1112
        %v1133 = vcombine.low %v1089, %v1121
        %v1134 = vcombine.high %v1089, %v1121
        %v1135 = vcombine.low %v1096, %v1128
        %v1136 = vcombine.high %v1096, %v1128
        %v1137 = vcombine.low %v938, %v954
        %v1138 = vcombine.high %v938, %v954
        %v1140 = vunpack.c.l.s4 1983009808
        %v1141 = vunpack.c.0.s8 %v1140
        %v1142 = vlaneseq
        %v1143 = vshrl.u32 %v1142, 7
        %v1144 = vsub.s32 %v1141, %v1143
        %v1145 = vrot.slane %v1137, %v1144
        %v1147 = vunpack.c.l.s4 1983009808
        %v1148 = vunpack.c.0.s8 %v1147
        %v1149 = vlaneseq
        %v1150 = vshrl.u32 %v1149, 7
        %v1151 = vsub.s32 %v1148, %v1150
        %v1152 = vrot.slane %v1138, %v1151
        %v1153 = vcombine.low %v946, %v962
        %v1154 = vcombine.high %v946, %v962
        %v1156 = vunpack.c.l.s4 1983009808
        %v1157 = vunpack.c.0.s8 %v1156
        %v1158 = vlaneseq
        %v1159 = vshrl.u32 %v1158, 7
        %v1160 = vsub.s32 %v1157, %v1159
        %v1161 = vrot.slane %v1153, %v1160
        %v1163 = vunpack.c.l.s4 1983009808
        %v1164 = vunpack.c.0.s8 %v1163
        %v1165 = vlaneseq
        %v1166 = vshrl.u32 %v1165, 7
        %v1167 = vsub.s32 %v1164, %v1166
        %v1168 = vrot.slane %v1154, %v1167
        %v1169 = vcombine.low %v970, %v986
        %v1170 = vcombine.high %v970, %v986
        %v1172 = vunpack.c.l.s4 1983009808
        %v1173 = vunpack.c.0.s8 %v1172
        %v1174 = vlaneseq
        %v1175 = vshrl.u32 %v1174, 7
        %v1176 = vsub.s32 %v1173, %v1175
        %v1177 = vrot.slane %v1169, %v1176
        %v1179 = vunpack.c.l.s4 1983009808
        %v1180 = vunpack.c.0.s8 %v1179
        %v1181 = vlaneseq
        %v1182 = vshrl.u32 %v1181, 7
        %v1183 = vsub.s32 %v1180, %v1182
        %v1184 = vrot.slane %v1170, %v1183
        %v1185 = vcombine.low %v978, %v994
        %v1186 = vcombine.high %v978, %v994
        %v1188 = vunpack.c.l.s4 1983009808
        %v1189 = vunpack.c.0.s8 %v1188
        %v1190 = vlaneseq
        %v1191 = vshrl.u32 %v1190, 7
        %v1192 = vsub.s32 %v1189, %v1191
        %v1193 = vrot.slane %v1185, %v1192
        %v1195 = vunpack.c.l.s4 1983009808
        %v1196 = vunpack.c.0.s8 %v1195
        %v1197 = vlaneseq
        %v1198 = vshrl.u32 %v1197, 7
        %v1199 = vsub.s32 %v1196, %v1198
        %v1200 = vrot.slane %v1186, %v1199
        %v1201 = vcombine.low %v1145, %v1161
        %v1202 = vcombine.high %v1145, %v1161
        %v1204 = vunpack.c.l.s4 1934713408
        %v1205 = vunpack.c.0.s8 %v1204
        %v1206 = vlaneseq
        %v1207 = vshrl.u32 %v1206, 7
        %v1208 = vsub.s32 %v1205, %v1207
        %v1209 = vrot.slane %v1201, %v1208
        %v1211 = vunpack.c.l.s4 1934713408
        %v1212 = vunpack.c.0.s8 %v1211
        %v1213 = vlaneseq
        %v1214 = vshrl.u32 %v1213, 7
        %v1215 = vsub.s32 %v1212, %v1214
        %v1216 = vrot.slane %v1202, %v1215
        %v1217 = vcombine.low %v1152, %v1168
        %v1218 = vcombine.high %v1152, %v1168
        %v1220 = vunpack.c.l.s4 1934713408
        %v1221 = vunpack.c.0.s8 %v1220
        %v1222 = vlaneseq
        %v1223 = vshrl.u32 %v1222, 7
        %v1224 = vsub.s32 %v1221, %v1223
        %v1225 = vrot.slane %v1217, %v1224
        %v1227 = vunpack.c.l.s4 1934713408
        %v1228 = vunpack.c.0.s8 %v1227
        %v1229 = vlaneseq
        %v1230 = vshrl.u32 %v1229, 7
        %v1231 = vsub.s32 %v1228, %v1230
        %v1232 = vrot.slane %v1218, %v1231
        %v1233 = vcombine.low %v1177, %v1193
        %v1234 = vcombine.high %v1177, %v1193
        %v1236 = vunpack.c.l.s4 1934713408
        %v1237 = vunpack.c.0.s8 %v1236
        %v1238 = vlaneseq
        %v1239 = vshrl.u32 %v1238, 7
        %v1240 = vsub.s32 %v1237, %v1239
        %v1241 = vrot.slane %v1233, %v1240
        %v1243 = vunpack.c.l.s4 1934713408
        %v1244 = vunpack.c.0.s8 %v1243
        %v1245 = vlaneseq
        %v1246 = vshrl.u32 %v1245, 7
        %v1247 = vsub.s32 %v1244, %v1246
        %v1248 = vrot.slane %v1234, %v1247
        %v1249 = vcombine.low %v1184, %v1200
        %v1250 = vcombine.high %v1184, %v1200
        %v1252 = vunpack.c.l.s4 1934713408
        %v1253 = vunpack.c.0.s8 %v1252
        %v1254 = vlaneseq
        %v1255 = vshrl.u32 %v1254, 7
        %v1256 = vsub.s32 %v1253, %v1255
        %v1257 = vrot.slane %v1249, %v1256
        %v1259 = vunpack.c.l.s4 1934713408
        %v1260 = vunpack.c.0.s8 %v1259
        %v1261 = vlaneseq
        %v1262 = vshrl.u32 %v1261, 7
        %v1263 = vsub.s32 %v1260, %v1262
        %v1264 = vrot.slane %v1250, %v1263
        %v1265 = vcombine.low %v1209, %v1241
        %v1266 = vcombine.high %v1209, %v1241
        %v1267 = vcombine.low %v1216, %v1248
        %v1268 = vcombine.high %v1216, %v1248
        %v1269 = vcombine.low %v1225, %v1257
        %v1270 = vcombine.high %v1225, %v1257
        %v1271 = vcombine.low %v1232, %v1264
        %v1272 = vcombine.high %v1232, %v1264
        %v1273 = vcombine.low %v939, %v955
        %v1274 = vcombine.high %v939, %v955
        %v1276 = vunpack.c.l.s4 1983009808
        %v1277 = vunpack.c.0.s8 %v1276
        %v1278 = vlaneseq
        %v1279 = vshrl.u32 %v1278, 7
        %v1280 = vsub.s32 %v1277, %v1279
        %v1281 = vrot.slane %v1273, %v1280
        %v1283 = vunpack.c.l.s4 1983009808
        %v1284 = vunpack.c.0.s8 %v1283
        %v1285 = vlaneseq
        %v1286 = vshrl.u32 %v1285, 7
        %v1287 = vsub.s32 %v1284, %v1286
        %v1288 = vrot.slane %v1274, %v1287
        %v1289 = vcombine.low %v947, %v963
        %v1290 = vcombine.high %v947, %v963
        %v1292 = vunpack.c.l.s4 1983009808
        %v1293 = vunpack.c.0.s8 %v1292
        %v1294 = vlaneseq
        %v1295 = vshrl.u32 %v1294, 7
        %v1296 = vsub.s32 %v1293, %v1295
        %v1297 = vrot.slane %v1289, %v1296
        %v1299 = vunpack.c.l.s4 1983009808
        %v1300 = vunpack.c.0.s8 %v1299
        %v1301 = vlaneseq
        %v1302 = vshrl.u32 %v1301, 7
        %v1303 = vsub.s32 %v1300, %v1302
        %v1304 = vrot.slane %v1290, %v1303
        %v1305 = vcombine.low %v971, %v987
        %v1306 = vcombine.high %v971, %v987
        %v1308 = vunpack.c.l.s4 1983009808
        %v1309 = vunpack.c.0.s8 %v1308
        %v1310 = vlaneseq
        %v1311 = vshrl.u32 %v1310, 7
        %v1312 = vsub.s32 %v1309, %v1311
        %v1313 = vrot.slane %v1305, %v1312
        %v1315 = vunpack.c.l.s4 1983009808
        %v1316 = vunpack.c.0.s8 %v1315
        %v1317 = vlaneseq
        %v1318 = vshrl.u32 %v1317, 7
        %v1319 = vsub.s32 %v1316, %v1318
        %v1320 = vrot.slane %v1306, %v1319
        %v1321 = vcombine.low %v979, %v995
        %v1322 = vcombine.high %v979, %v995
        %v1324 = vunpack.c.l.s4 1983009808
        %v1325 = vunpack.c.0.s8 %v1324
        %v1326 = vlaneseq
        %v1327 = vshrl.u32 %v1326, 7
        %v1328 = vsub.s32 %v1325, %v1327
        %v1329 = vrot.slane %v1321, %v1328
        %v1331 = vunpack.c.l.s4 1983009808
        %v1332 = vunpack.c.0.s8 %v1331
        %v1333 = vlaneseq
        %v1334 = vshrl.u32 %v1333, 7
        %v1335 = vsub.s32 %v1332, %v1334
        %v1336 = vrot.slane %v1322, %v1335
        %v1337 = vcombine.low %v1281, %v1297
        %v1338 = vcombine.high %v1281, %v1297
        %v1340 = vunpack.c.l.s4 1934713408
        %v1341 = vunpack.c.0.s8 %v1340
        %v1342 = vlaneseq
        %v1343 = vshrl.u32 %v1342, 7
        %v1344 = vsub.s32 %v1341, %v1343
        %v1345 = vrot.slane %v1337, %v1344
        %v1347 = vunpack.c.l.s4 1934713408
        %v1348 = vunpack.c.0.s8 %v1347
        %v1349 = vlaneseq
        %v1350 = vshrl.u32 %v1349, 7
        %v1351 = vsub.s32 %v1348, %v1350
        %v1352 = vrot.slane %v1338, %v1351
        %v1353 = vcombine.low %v1288, %v1304
        %v1354 = vcombine.high %v1288, %v1304
        %v1356 = vunpack.c.l.s4 1934713408
        %v1357 = vunpack.c.0.s8 %v1356
        %v1358 = vlaneseq
        %v1359 = vshrl.u32 %v1358, 7
        %v1360 = vsub.s32 %v1357, %v1359
        %v1361 = vrot.slane %v1353, %v1360
        %v1363 = vunpack.c.l.s4 1934713408
        %v1364 = vunpack.c.0.s8 %v1363
        %v1365 = vlaneseq
        %v1366 = vshrl.u32 %v1365, 7
        %v1367 = vsub.s32 %v1364, %v1366
        %v1368 = vrot.slane %v1354, %v1367
        %v1369 = vcombine.low %v1313, %v1329
        %v1370 = vcombine.high %v1313, %v1329
        %v1372 = vunpack.c.l.s4 1934713408
        %v1373 = vunpack.c.0.s8 %v1372
        %v1374 = vlaneseq
        %v1375 = vshrl.u32 %v1374, 7
        %v1376 = vsub.s32 %v1373, %v1375
        %v1377 = vrot.slane %v1369, %v1376
        %v1379 = vunpack.c.l.s4 1934713408
        %v1380 = vunpack.c.0.s8 %v1379
        %v1381 = vlaneseq
        %v1382 = vshrl.u32 %v1381, 7
        %v1383 = vsub.s32 %v1380, %v1382
        %v1384 = vrot.slane %v1370, %v1383
        %v1385 = vcombine.low %v1320, %v1336
        %v1386 = vcombine.high %v1320, %v1336
        %v1388 = vunpack.c.l.s4 1934713408
        %v1389 = vunpack.c.0.s8 %v1388
        %v1390 = vlaneseq
        %v1391 = vshrl.u32 %v1390, 7
        %v1392 = vsub.s32 %v1389, %v1391
        %v1393 = vrot.slane %v1385, %v1392
        %v1395 = vunpack.c.l.s4 1934713408
        %v1396 = vunpack.c.0.s8 %v1395
        %v1397 = vlaneseq
        %v1398 = vshrl.u32 %v1397, 7
        %v1399 = vsub.s32 %v1396, %v1398
        %v1400 = vrot.slane %v1386, %v1399
        %v1401 = vcombine.low %v1345, %v1377
        %v1402 = vcombine.high %v1345, %v1377
        %v1403 = vcombine.low %v1352, %v1384
        %v1404 = vcombine.high %v1352, %v1384
        %v1405 = vcombine.low %v1361, %v1393
        %v1406 = vcombine.high %v1361, %v1393
        %v1407 = vcombine.low %v1368, %v1400
        %v1408 = vcombine.high %v1368, %v1400
        %v1409 = vcombine.low %v940, %v956
        %v1410 = vcombine.high %v940, %v956
        %v1412 = vunpack.c.l.s4 1983009808
        %v1413 = vunpack.c.0.s8 %v1412
        %v1414 = vlaneseq
        %v1415 = vshrl.u32 %v1414, 7
        %v1416 = vsub.s32 %v1413, %v1415
        %v1417 = vrot.slane %v1409, %v1416
        %v1419 = vunpack.c.l.s4 1983009808
        %v1420 = vunpack.c.0.s8 %v1419
        %v1421 = vlaneseq
        %v1422 = vshrl.u32 %v1421, 7
        %v1423 = vsub.s32 %v1420, %v1422
        %v1424 = vrot.slane %v1410, %v1423
        %v1425 = vcombine.low %v948, %v964
        %v1426 = vcombine.high %v948, %v964
        %v1428 = vunpack.c.l.s4 1983009808
        %v1429 = vunpack.c.0.s8 %v1428
        %v1430 = vlaneseq
        %v1431 = vshrl.u32 %v1430, 7
        %v1432 = vsub.s32 %v1429, %v1431
        %v1433 = vrot.slane %v1425, %v1432
        %v1435 = vunpack.c.l.s4 1983009808
        %v1436 = vunpack.c.0.s8 %v1435
        %v1437 = vlaneseq
        %v1438 = vshrl.u32 %v1437, 7
        %v1439 = vsub.s32 %v1436, %v1438
        %v1440 = vrot.slane %v1426, %v1439
        %v1441 = vcombine.low %v972, %v988
        %v1442 = vcombine.high %v972, %v988
        %v1444 = vunpack.c.l.s4 1983009808
        %v1445 = vunpack.c.0.s8 %v1444
        %v1446 = vlaneseq
        %v1447 = vshrl.u32 %v1446, 7
        %v1448 = vsub.s32 %v1445, %v1447
        %v1449 = vrot.slane %v1441, %v1448
        %v1451 = vunpack.c.l.s4 1983009808
        %v1452 = vunpack.c.0.s8 %v1451
        %v1453 = vlaneseq
        %v1454 = vshrl.u32 %v1453, 7
        %v1455 = vsub.s32 %v1452, %v1454
        %v1456 = vrot.slane %v1442, %v1455
        %v1457 = vcombine.low %v980, %v996
        %v1458 = vcombine.high %v980, %v996
        %v1460 = vunpack.c.l.s4 1983009808
        %v1461 = vunpack.c.0.s8 %v1460
        %v1462 = vlaneseq
        %v1463 = vshrl.u32 %v1462, 7
        %v1464 = vsub.s32 %v1461, %v1463
        %v1465 = vrot.slane %v1457, %v1464
        %v1467 = vunpack.c.l.s4 1983009808
        %v1468 = vunpack.c.0.s8 %v1467
        %v1469 = vlaneseq
        %v1470 = vshrl.u32 %v1469, 7
        %v1471 = vsub.s32 %v1468, %v1470
        %v1472 = vrot.slane %v1458, %v1471
        %v1473 = vcombine.low %v1417, %v1433
        %v1474 = vcombine.high %v1417, %v1433
        %v1476 = vunpack.c.l.s4 1934713408
        %v1477 = vunpack.c.0.s8 %v1476
        %v1478 = vlaneseq
        %v1479 = vshrl.u32 %v1478, 7
        %v1480 = vsub.s32 %v1477, %v1479
        %v1481 = vrot.slane %v1473, %v1480
        %v1483 = vunpack.c.l.s4 1934713408
        %v1484 = vunpack.c.0.s8 %v1483
        %v1485 = vlaneseq
        %v1486 = vshrl.u32 %v1485, 7
        %v1487 = vsub.s32 %v1484, %v1486
        %v1488 = vrot.slane %v1474, %v1487
        %v1489 = vcombine.low %v1424, %v1440
        %v1490 = vcombine.high %v1424, %v1440
        %v1492 = vunpack.c.l.s4 1934713408
        %v1493 = vunpack.c.0.s8 %v1492
        %v1494 = vlaneseq
        %v1495 = vshrl.u32 %v1494, 7
        %v1496 = vsub.s32 %v1493, %v1495
        %v1497 = vrot.slane %v1489, %v1496
        %v1499 = vunpack.c.l.s4 1934713408
        %v1500 = vunpack.c.0.s8 %v1499
        %v1501 = vlaneseq
        %v1502 = vshrl.u32 %v1501, 7
        %v1503 = vsub.s32 %v1500, %v1502
        %v1504 = vrot.slane %v1490, %v1503
        %v1505 = vcombine.low %v1449, %v1465
        %v1506 = vcombine.high %v1449, %v1465
        %v1508 = vunpack.c.l.s4 1934713408
        %v1509 = vunpack.c.0.s8 %v1508
        %v1510 = vlaneseq
        %v1511 = vshrl.u32 %v1510, 7
        %v1512 = vsub.s32 %v1509, %v1511
        %v1513 = vrot.slane %v1505, %v1512
        %v1515 = vunpack.c.l.s4 1934713408
        %v1516 = vunpack.c.0.s8 %v1515
        %v1517 = vlaneseq
        %v1518 = vshrl.u32 %v1517, 7
        %v1519 = vsub.s32 %v1516, %v1518
        %v1520 = vrot.slane %v1506, %v1519
        %v1521 = vcombine.low %v1456, %v1472
        %v1522 = vcombine.high %v1456, %v1472
        %v1524 = vunpack.c.l.s4 1934713408
        %v1525 = vunpack.c.0.s8 %v1524
        %v1526 = vlaneseq
        %v1527 = vshrl.u32 %v1526, 7
        %v1528 = vsub.s32 %v1525, %v1527
        %v1529 = vrot.slane %v1521, %v1528
        %v1531 = vunpack.c.l.s4 1934713408
        %v1532 = vunpack.c.0.s8 %v1531
        %v1533 = vlaneseq
        %v1534 = vshrl.u32 %v1533, 7
        %v1535 = vsub.s32 %v1532, %v1534
        %v1536 = vrot.slane %v1522, %v1535
        %v1537 = vcombine.low %v1481, %v1513
        %v1538 = vcombine.high %v1481, %v1513
        %v1539 = vcombine.low %v1488, %v1520
        %v1540 = vcombine.high %v1488, %v1520
        %v1541 = vcombine.low %v1497, %v1529
        %v1542 = vcombine.high %v1497, %v1529
        %v1543 = vcombine.low %v1504, %v1536
        %v1544 = vcombine.high %v1504, %v1536
        %v1545 = vcombine.low %v941, %v957
        %v1546 = vcombine.high %v941, %v957
        %v1548 = vunpack.c.l.s4 1983009808
        %v1549 = vunpack.c.0.s8 %v1548
        %v1550 = vlaneseq
        %v1551 = vshrl.u32 %v1550, 7
        %v1552 = vsub.s32 %v1549, %v1551
        %v1553 = vrot.slane %v1545, %v1552
        %v1555 = vunpack.c.l.s4 1983009808
        %v1556 = vunpack.c.0.s8 %v1555
        %v1557 = vlaneseq
        %v1558 = vshrl.u32 %v1557, 7
        %v1559 = vsub.s32 %v1556, %v1558
        %v1560 = vrot.slane %v1546, %v1559
        %v1561 = vcombine.low %v949, %v965
        %v1562 = vcombine.high %v949, %v965
        %v1564 = vunpack.c.l.s4 1983009808
        %v1565 = vunpack.c.0.s8 %v1564
        %v1566 = vlaneseq
        %v1567 = vshrl.u32 %v1566, 7
        %v1568 = vsub.s32 %v1565, %v1567
        %v1569 = vrot.slane %v1561, %v1568
        %v1571 = vunpack.c.l.s4 1983009808
        %v1572 = vunpack.c.0.s8 %v1571
        %v1573 = vlaneseq
        %v1574 = vshrl.u32 %v1573, 7
        %v1575 = vsub.s32 %v1572, %v1574
        %v1576 = vrot.slane %v1562, %v1575
        %v1577 = vcombine.low %v973, %v989
        %v1578 = vcombine.high %v973, %v989
        %v1580 = vunpack.c.l.s4 1983009808
        %v1581 = vunpack.c.0.s8 %v1580
        %v1582 = vlaneseq
        %v1583 = vshrl.u32 %v1582, 7
        %v1584 = vsub.s32 %v1581, %v1583
        %v1585 = vrot.slane %v1577, %v1584
        %v1587 = vunpack.c.l.s4 1983009808
        %v1588 = vunpack.c.0.s8 %v1587
        %v1589 = vlaneseq
        %v1590 = vshrl.u32 %v1589, 7
        %v1591 = vsub.s32 %v1588, %v1590
        %v1592 = vrot.slane %v1578, %v1591
        %v1593 = vcombine.low %v981, %v997
        %v1594 = vcombine.high %v981, %v997
        %v1596 = vunpack.c.l.s4 1983009808
        %v1597 = vunpack.c.0.s8 %v1596
        %v1598 = vlaneseq
        %v1599 = vshrl.u32 %v1598, 7
        %v1600 = vsub.s32 %v1597, %v1599
        %v1601 = vrot.slane %v1593, %v1600
        %v1603 = vunpack.c.l.s4 1983009808
        %v1604 = vunpack.c.0.s8 %v1603
        %v1605 = vlaneseq
        %v1606 = vshrl.u32 %v1605, 7
        %v1607 = vsub.s32 %v1604, %v1606
        %v1608 = vrot.slane %v1594, %v1607
        %v1609 = vcombine.low %v1553, %v1569
        %v1610 = vcombine.high %v1553, %v1569
        %v1612 = vunpack.c.l.s4 1934713408
        %v1613 = vunpack.c.0.s8 %v1612
        %v1614 = vlaneseq
        %v1615 = vshrl.u32 %v1614, 7
        %v1616 = vsub.s32 %v1613, %v1615
        %v1617 = vrot.slane %v1609, %v1616
        %v1619 = vunpack.c.l.s4 1934713408
        %v1620 = vunpack.c.0.s8 %v1619
        %v1621 = vlaneseq
        %v1622 = vshrl.u32 %v1621, 7
        %v1623 = vsub.s32 %v1620, %v1622
        %v1624 = vrot.slane %v1610, %v1623
        %v1625 = vcombine.low %v1560, %v1576
        %v1626 = vcombine.high %v1560, %v1576
        %v1628 = vunpack.c.l.s4 1934713408
        %v1629 = vunpack.c.0.s8 %v1628
        %v1630 = vlaneseq
        %v1631 = vshrl.u32 %v1630, 7
        %v1632 = vsub.s32 %v1629, %v1631
        %v1633 = vrot.slane %v1625, %v1632
        %v1635 = vunpack.c.l.s4 1934713408
        %v1636 = vunpack.c.0.s8 %v1635
        %v1637 = vlaneseq
        %v1638 = vshrl.u32 %v1637, 7
        %v1639 = vsub.s32 %v1636, %v1638
        %v1640 = vrot.slane %v1626, %v1639
        %v1641 = vcombine.low %v1585, %v1601
        %v1642 = vcombine.high %v1585, %v1601
        %v1644 = vunpack.c.l.s4 1934713408
        %v1645 = vunpack.c.0.s8 %v1644
        %v1646 = vlaneseq
        %v1647 = vshrl.u32 %v1646, 7
        %v1648 = vsub.s32 %v1645, %v1647
        %v1649 = vrot.slane %v1641, %v1648
        %v1651 = vunpack.c.l.s4 1934713408
        %v1652 = vunpack.c.0.s8 %v1651
        %v1653 = vlaneseq
        %v1654 = vshrl.u32 %v1653, 7
        %v1655 = vsub.s32 %v1652, %v1654
        %v1656 = vrot.slane %v1642, %v1655
        %v1657 = vcombine.low %v1592, %v1608
        %v1658 = vcombine.high %v1592, %v1608
        %v1660 = vunpack.c.l.s4 1934713408
        %v1661 = vunpack.c.0.s8 %v1660
        %v1662 = vlaneseq
        %v1663 = vshrl.u32 %v1662, 7
        %v1664 = vsub.s32 %v1661, %v1663
        %v1665 = vrot.slane %v1657, %v1664
        %v1667 = vunpack.c.l.s4 1934713408
        %v1668 = vunpack.c.0.s8 %v1667
        %v1669 = vlaneseq
        %v1670 = vshrl.u32 %v1669, 7
        %v1671 = vsub.s32 %v1668, %v1670
        %v1672 = vrot.slane %v1658, %v1671
        %v1673 = vcombine.low %v1617, %v1649
        %v1674 = vcombine.high %v1617, %v1649
        %v1675 = vcombine.low %v1624, %v1656
        %v1676 = vcombine.high %v1624, %v1656
        %v1677 = vcombine.low %v1633, %v1665
        %v1678 = vcombine.high %v1633, %v1665
        %v1679 = vcombine.low %v1640, %v1672
        %v1680 = vcombine.high %v1640, %v1672
        %v1681 = vcombine.low %v942, %v958
        %v1682 = vcombine.high %v942, %v958
        %v1684 = vunpack.c.l.s4 1983009808
        %v1685 = vunpack.c.0.s8 %v1684
        %v1686 = vlaneseq
        %v1687 = vshrl.u32 %v1686, 7
        %v1688 = vsub.s32 %v1685, %v1687
        %v1689 = vrot.slane %v1681, %v1688
        %v1691 = vunpack.c.l.s4 1983009808
        %v1692 = vunpack.c.0.s8 %v1691
        %v1693 = vlaneseq
        %v1694 = vshrl.u32 %v1693, 7
        %v1695 = vsub.s32 %v1692, %v1694
        %v1696 = vrot.slane %v1682, %v1695
        %v1697 = vcombine.low %v950, %v966
        %v1698 = vcombine.high %v950, %v966
        %v1700 = vunpack.c.l.s4 1983009808
        %v1701 = vunpack.c.0.s8 %v1700
        %v1702 = vlaneseq
        %v1703 = vshrl.u32 %v1702, 7
        %v1704 = vsub.s32 %v1701, %v1703
        %v1705 = vrot.slane %v1697, %v1704
        %v1707 = vunpack.c.l.s4 1983009808
        %v1708 = vunpack.c.0.s8 %v1707
        %v1709 = vlaneseq
        %v1710 = vshrl.u32 %v1709, 7
        %v1711 = vsub.s32 %v1708, %v1710
        %v1712 = vrot.slane %v1698, %v1711
        %v1713 = vcombine.low %v974, %v990
        %v1714 = vcombine.high %v974, %v990
        %v1716 = vunpack.c.l.s4 1983009808
        %v1717 = vunpack.c.0.s8 %v1716
        %v1718 = vlaneseq
        %v1719 = vshrl.u32 %v1718, 7
        %v1720 = vsub.s32 %v1717, %v1719
        %v1721 = vrot.slane %v1713, %v1720
        %v1723 = vunpack.c.l.s4 1983009808
        %v1724 = vunpack.c.0.s8 %v1723
        %v1725 = vlaneseq
        %v1726 = vshrl.u32 %v1725, 7
        %v1727 = vsub.s32 %v1724, %v1726
        %v1728 = vrot.slane %v1714, %v1727
        %v1729 = vcombine.low %v982, %v998
        %v1730 = vcombine.high %v982, %v998
        %v1732 = vunpack.c.l.s4 1983009808
        %v1733 = vunpack.c.0.s8 %v1732
        %v1734 = vlaneseq
        %v1735 = vshrl.u32 %v1734, 7
        %v1736 = vsub.s32 %v1733, %v1735
        %v1737 = vrot.slane %v1729, %v1736
        %v1739 = vunpack.c.l.s4 1983009808
        %v1740 = vunpack.c.0.s8 %v1739
        %v1741 = vlaneseq
        %v1742 = vshrl.u32 %v1741, 7
        %v1743 = vsub.s32 %v1740, %v1742
        %v1744 = vrot.slane %v1730, %v1743
        %v1745 = vcombine.low %v1689, %v1705
        %v1746 = vcombine.high %v1689, %v1705
        %v1748 = vunpack.c.l.s4 1934713408
        %v1749 = vunpack.c.0.s8 %v1748
        %v1750 = vlaneseq
        %v1751 = vshrl.u32 %v1750, 7
        %v1752 = vsub.s32 %v1749, %v1751
        %v1753 = vrot.slane %v1745, %v1752
        %v1755 = vunpack.c.l.s4 1934713408
        %v1756 = vunpack.c.0.s8 %v1755
        %v1757 = vlaneseq
        %v1758 = vshrl.u32 %v1757, 7
        %v1759 = vsub.s32 %v1756, %v1758
        %v1760 = vrot.slane %v1746, %v1759
        %v1761 = vcombine.low %v1696, %v1712
        %v1762 = vcombine.high %v1696, %v1712
        %v1764 = vunpack.c.l.s4 1934713408
        %v1765 = vunpack.c.0.s8 %v1764
        %v1766 = vlaneseq
        %v1767 = vshrl.u32 %v1766, 7
        %v1768 = vsub.s32 %v1765, %v1767
        %v1769 = vrot.slane %v1761, %v1768
        %v1771 = vunpack.c.l.s4 1934713408
        %v1772 = vunpack.c.0.s8 %v1771
        %v1773 = vlaneseq
        %v1774 = vshrl.u32 %v1773, 7
        %v1775 = vsub.s32 %v1772, %v1774
        %v1776 = vrot.slane %v1762, %v1775
        %v1777 = vcombine.low %v1721, %v1737
        %v1778 = vcombine.high %v1721, %v1737
        %v1780 = vunpack.c.l.s4 1934713408
        %v1781 = vunpack.c.0.s8 %v1780
        %v1782 = vlaneseq
        %v1783 = vshrl.u32 %v1782, 7
        %v1784 = vsub.s32 %v1781, %v1783
        %v1785 = vrot.slane %v1777, %v1784
        %v1787 = vunpack.c.l.s4 1934713408
        %v1788 = vunpack.c.0.s8 %v1787
        %v1789 = vlaneseq
        %v1790 = vshrl.u32 %v1789, 7
        %v1791 = vsub.s32 %v1788, %v1790
        %v1792 = vrot.slane %v1778, %v1791
        %v1793 = vcombine.low %v1728, %v1744
        %v1794 = vcombine.high %v1728, %v1744
        %v1796 = vunpack.c.l.s4 1934713408
        %v1797 = vunpack.c.0.s8 %v1796
        %v1798 = vlaneseq
        %v1799 = vshrl.u32 %v1798, 7
        %v1800 = vsub.s32 %v1797, %v1799
        %v1801 = vrot.slane %v1793, %v1800
        %v1803 = vunpack.c.l.s4 1934713408
        %v1804 = vunpack.c.0.s8 %v1803
        %v1805 = vlaneseq
        %v1806 = vshrl.u32 %v1805, 7
        %v1807 = vsub.s32 %v1804, %v1806
        %v1808 = vrot.slane %v1794, %v1807
        %v1809 = vcombine.low %v1753, %v1785
        %v1810 = vcombine.high %v1753, %v1785
        %v1811 = vcombine.low %v1760, %v1792
        %v1812 = vcombine.high %v1760, %v1792
        %v1813 = vcombine.low %v1769, %v1801
        %v1814 = vcombine.high %v1769, %v1801
        %v1815 = vcombine.low %v1776, %v1808
        %v1816 = vcombine.high %v1776, %v1808
        %v1817 = vcombine.low %v943, %v959
        %v1818 = vcombine.high %v943, %v959
        %v1820 = vunpack.c.l.s4 1983009808
        %v1821 = vunpack.c.0.s8 %v1820
        %v1822 = vlaneseq
        %v1823 = vshrl.u32 %v1822, 7
        %v1824 = vsub.s32 %v1821, %v1823
        %v1825 = vrot.slane %v1817, %v1824
        %v1827 = vunpack.c.l.s4 1983009808
        %v1828 = vunpack.c.0.s8 %v1827
        %v1829 = vlaneseq
        %v1830 = vshrl.u32 %v1829, 7
        %v1831 = vsub.s32 %v1828, %v1830
        %v1832 = vrot.slane %v1818, %v1831
        %v1833 = vcombine.low %v951, %v967
        %v1834 = vcombine.high %v951, %v967
        %v1836 = vunpack.c.l.s4 1983009808
        %v1837 = vunpack.c.0.s8 %v1836
        %v1838 = vlaneseq
        %v1839 = vshrl.u32 %v1838, 7
        %v1840 = vsub.s32 %v1837, %v1839
        %v1841 = vrot.slane %v1833, %v1840
        %v1843 = vunpack.c.l.s4 1983009808
        %v1844 = vunpack.c.0.s8 %v1843
        %v1845 = vlaneseq
        %v1846 = vshrl.u32 %v1845, 7
        %v1847 = vsub.s32 %v1844, %v1846
        %v1848 = vrot.slane %v1834, %v1847
        %v1849 = vcombine.low %v975, %v991
        %v1850 = vcombine.high %v975, %v991
        %v1852 = vunpack.c.l.s4 1983009808
        %v1853 = vunpack.c.0.s8 %v1852
        %v1854 = vlaneseq
        %v1855 = vshrl.u32 %v1854, 7
        %v1856 = vsub.s32 %v1853, %v1855
        %v1857 = vrot.slane %v1849, %v1856
        %v1859 = vunpack.c.l.s4 1983009808
        %v1860 = vunpack.c.0.s8 %v1859
        %v1861 = vlaneseq
        %v1862 = vshrl.u32 %v1861, 7
        %v1863 = vsub.s32 %v1860, %v1862
        %v1864 = vrot.slane %v1850, %v1863
        %v1865 = vcombine.low %v983, %v999
        %v1866 = vcombine.high %v983, %v999
        %v1868 = vunpack.c.l.s4 1983009808
        %v1869 = vunpack.c.0.s8 %v1868
        %v1870 = vlaneseq
        %v1871 = vshrl.u32 %v1870, 7
        %v1872 = vsub.s32 %v1869, %v1871
        %v1873 = vrot.slane %v1865, %v1872
        %v1875 = vunpack.c.l.s4 1983009808
        %v1876 = vunpack.c.0.s8 %v1875
        %v1877 = vlaneseq
        %v1878 = vshrl.u32 %v1877, 7
        %v1879 = vsub.s32 %v1876, %v1878
        %v1880 = vrot.slane %v1866, %v1879
        %v1881 = vcombine.low %v1825, %v1841
        %v1882 = vcombine.high %v1825, %v1841
        %v1884 = vunpack.c.l.s4 1934713408
        %v1885 = vunpack.c.0.s8 %v1884
        %v1886 = vlaneseq
        %v1887 = vshrl.u32 %v1886, 7
        %v1888 = vsub.s32 %v1885, %v1887
        %v1889 = vrot.slane %v1881, %v1888
        %v1891 = vunpack.c.l.s4 1934713408
        %v1892 = vunpack.c.0.s8 %v1891
        %v1893 = vlaneseq
        %v1894 = vshrl.u32 %v1893, 7
        %v1895 = vsub.s32 %v1892, %v1894
        %v1896 = vrot.slane %v1882, %v1895
        %v1897 = vcombine.low %v1832, %v1848
        %v1898 = vcombine.high %v1832, %v1848
        %v1900 = vunpack.c.l.s4 1934713408
        %v1901 = vunpack.c.0.s8 %v1900
        %v1902 = vlaneseq
        %v1903 = vshrl.u32 %v1902, 7
        %v1904 = vsub.s32 %v1901, %v1903
        %v1905 = vrot.slane %v1897, %v1904
        %v1907 = vunpack.c.l.s4 1934713408
        %v1908 = vunpack.c.0.s8 %v1907
        %v1909 = vlaneseq
        %v1910 = vshrl.u32 %v1909, 7
        %v1911 = vsub.s32 %v1908, %v1910
        %v1912 = vrot.slane %v1898, %v1911
        %v1913 = vcombine.low %v1857, %v1873
        %v1914 = vcombine.high %v1857, %v1873
        %v1916 = vunpack.c.l.s4 1934713408
        %v1917 = vunpack.c.0.s8 %v1916
        %v1918 = vlaneseq
        %v1919 = vshrl.u32 %v1918, 7
        %v1920 = vsub.s32 %v1917, %v1919
        %v1921 = vrot.slane %v1913, %v1920
        %v1923 = vunpack.c.l.s4 1934713408
        %v1924 = vunpack.c.0.s8 %v1923
        %v1925 = vlaneseq
        %v1926 = vshrl.u32 %v1925, 7
        %v1927 = vsub.s32 %v1924, %v1926
        %v1928 = vrot.slane %v1914, %v1927
        %v1929 = vcombine.low %v1864, %v1880
        %v1930 = vcombine.high %v1864, %v1880
        %v1932 = vunpack.c.l.s4 1934713408
        %v1933 = vunpack.c.0.s8 %v1932
        %v1934 = vlaneseq
        %v1935 = vshrl.u32 %v1934, 7
        %v1936 = vsub.s32 %v1933, %v1935
        %v1937 = vrot.slane %v1929, %v1936
        %v1939 = vunpack.c.l.s4 1934713408
        %v1940 = vunpack.c.0.s8 %v1939
        %v1941 = vlaneseq
        %v1942 = vshrl.u32 %v1941, 7
        %v1943 = vsub.s32 %v1940, %v1942
        %v1944 = vrot.slane %v1930, %v1943
        %v1945 = vcombine.low %v1889, %v1921
        %v1946 = vcombine.high %v1889, %v1921
        %v1947 = vcombine.low %v1896, %v1928
        %v1948 = vcombine.high %v1896, %v1928
        %v1949 = vcombine.low %v1905, %v1937
        %v1950 = vcombine.high %v1905, %v1937
        %v1951 = vcombine.low %v1912, %v1944
        %v1952 = vcombine.high %v1912, %v1944
        %v1953 = vcombine.low %v944, %v960
        %v1954 = vcombine.high %v944, %v960
        %v1956 = vunpack.c.l.s4 1983009808
        %v1957 = vunpack.c.0.s8 %v1956
        %v1958 = vlaneseq
        %v1959 = vshrl.u32 %v1958, 7
        %v1960 = vsub.s32 %v1957, %v1959
        %v1961 = vrot.slane %v1953, %v1960
        %v1963 = vunpack.c.l.s4 1983009808
        %v1964 = vunpack.c.0.s8 %v1963
        %v1965 = vlaneseq
        %v1966 = vshrl.u32 %v1965, 7
        %v1967 = vsub.s32 %v1964, %v1966
        %v1968 = vrot.slane %v1954, %v1967
        %v1969 = vcombine.low %v952, %v968
        %v1970 = vcombine.high %v952, %v968
        %v1972 = vunpack.c.l.s4 1983009808
        %v1973 = vunpack.c.0.s8 %v1972
        %v1974 = vlaneseq
        %v1975 = vshrl.u32 %v1974, 7
        %v1976 = vsub.s32 %v1973, %v1975
        %v1977 = vrot.slane %v1969, %v1976
        %v1979 = vunpack.c.l.s4 1983009808
        %v1980 = vunpack.c.0.s8 %v1979
        %v1981 = vlaneseq
        %v1982 = vshrl.u32 %v1981, 7
        %v1983 = vsub.s32 %v1980, %v1982
        %v1984 = vrot.slane %v1970, %v1983
        %v1985 = vcombine.low %v976, %v992
        %v1986 = vcombine.high %v976, %v992
        %v1988 = vunpack.c.l.s4 1983009808
        %v1989 = vunpack.c.0.s8 %v1988
        %v1990 = vlaneseq
        %v1991 = vshrl.u32 %v1990, 7
        %v1992 = vsub.s32 %v1989, %v1991
        %v1993 = vrot.slane %v1985, %v1992
        %v1995 = vunpack.c.l.s4 1983009808
        %v1996 = vunpack.c.0.s8 %v1995
        %v1997 = vlaneseq
        %v1998 = vshrl.u32 %v1997, 7
        %v1999 = vsub.s32 %v1996, %v1998
        %v2000 = vrot.slane %v1986, %v1999
        %v2001 = vcombine.low %v984, %v1000
        %v2002 = vcombine.high %v984, %v1000
        %v2004 = vunpack.c.l.s4 1983009808
        %v2005 = vunpack.c.0.s8 %v2004
        %v2006 = vlaneseq
        %v2007 = vshrl.u32 %v2006, 7
        %v2008 = vsub.s32 %v2005, %v2007
        %v2009 = vrot.slane %v2001, %v2008
        %v2011 = vunpack.c.l.s4 1983009808
        %v2012 = vunpack.c.0.s8 %v2011
        %v2013 = vlaneseq
        %v2014 = vshrl.u32 %v2013, 7
        %v2015 = vsub.s32 %v2012, %v2014
        %v2016 = vrot.slane %v2002, %v2015
        %v2017 = vcombine.low %v1961, %v1977
        %v2018 = vcombine.high %v1961, %v1977
        %v2020 = vunpack.c.l.s4 1934713408
        %v2021 = vunpack.c.0.s8 %v2020
        %v2022 = vlaneseq
        %v2023 = vshrl.u32 %v2022, 7
        %v2024 = vsub.s32 %v2021, %v2023
        %v2025 = vrot.slane %v2017, %v2024
        %v2027 = vunpack.c.l.s4 1934713408
        %v2028 = vunpack.c.0.s8 %v2027
        %v2029 = vlaneseq
        %v2030 = vshrl.u32 %v2029, 7
        %v2031 = vsub.s32 %v2028, %v2030
        %v2032 = vrot.slane %v2018, %v2031
        %v2033 = vcombine.low %v1968, %v1984
        %v2034 = vcombine.high %v1968, %v1984
        %v2036 = vunpack.c.l.s4 1934713408
        %v2037 = vunpack.c.0.s8 %v2036
        %v2038 = vlaneseq
        %v2039 = vshrl.u32 %v2038, 7
        %v2040 = vsub.s32 %v2037, %v2039
        %v2041 = vrot.slane %v2033, %v2040
        %v2043 = vunpack.c.l.s4 1934713408
        %v2044 = vunpack.c.0.s8 %v2043
        %v2045 = vlaneseq
        %v2046 = vshrl.u32 %v2045, 7
        %v2047 = vsub.s32 %v2044, %v2046
        %v2048 = vrot.slane %v2034, %v2047
        %v2049 = vcombine.low %v1993, %v2009
        %v2050 = vcombine.high %v1993, %v2009
        %v2052 = vunpack.c.l.s4 1934713408
        %v2053 = vunpack.c.0.s8 %v2052
        %v2054 = vlaneseq
        %v2055 = vshrl.u32 %v2054, 7
        %v2056 = vsub.s32 %v2053, %v2055
        %v2057 = vrot.slane %v2049, %v2056
        %v2059 = vunpack.c.l.s4 1934713408
        %v2060 = vunpack.c.0.s8 %v2059
        %v2061 = vlaneseq
        %v2062 = vshrl.u32 %v2061, 7
        %v2063 = vsub.s32 %v2060, %v2062
        %v2064 = vrot.slane %v2050, %v2063
        %v2065 = vcombine.low %v2000, %v2016
        %v2066 = vcombine.high %v2000, %v2016
        %v2068 = vunpack.c.l.s4 1934713408
        %v2069 = vunpack.c.0.s8 %v2068
        %v2070 = vlaneseq
        %v2071 = vshrl.u32 %v2070, 7
        %v2072 = vsub.s32 %v2069, %v2071
        %v2073 = vrot.slane %v2065, %v2072
        %v2075 = vunpack.c.l.s4 1934713408
        %v2076 = vunpack.c.0.s8 %v2075
        %v2077 = vlaneseq
        %v2078 = vshrl.u32 %v2077, 7
        %v2079 = vsub.s32 %v2076, %v2078
        %v2080 = vrot.slane %v2066, %v2079
        %v2081 = vcombine.low %v2025, %v2057
        %v2082 = vcombine.high %v2025, %v2057
        %v2083 = vcombine.low %v2032, %v2064
        %v2084 = vcombine.high %v2032, %v2064
        %v2085 = vcombine.low %v2041, %v2073
        %v2086 = vcombine.high %v2041, %v2073
        %v2087 = vcombine.low %v2048, %v2080
        %v2088 = vcombine.high %v2048, %v2080
        %v2089 = vpack.c.bf16 %v1129, %v1129
        %v2090 = vpack.c.bf16 %v1130, %v1130
        %v2091 = vpack.c.bf16 %v1131, %v1131
        %v2092 = vpack.c.bf16 %v1132, %v1132
        %v2093 = vpack.c.bf16 %v1133, %v1133
        %v2094 = vpack.c.bf16 %v1134, %v1134
        %v2095 = vpack.c.bf16 %v1135, %v1135
        %v2096 = vpack.c.bf16 %v1136, %v1136
        %v2097 = vpack.c.bf16 %v1265, %v1265
        %v2098 = vpack.c.bf16 %v1266, %v1266
        %v2099 = vpack.c.bf16 %v1267, %v1267
        %v2100 = vpack.c.bf16 %v1268, %v1268
        %v2101 = vpack.c.bf16 %v1269, %v1269
        %v2102 = vpack.c.bf16 %v1270, %v1270
        %v2103 = vpack.c.bf16 %v1271, %v1271
        %v2104 = vpack.c.bf16 %v1272, %v1272
        %v2105 = vpack.c.bf16 %v1401, %v1401
        %v2106 = vpack.c.bf16 %v1402, %v1402
        %v2107 = vpack.c.bf16 %v1403, %v1403
        %v2108 = vpack.c.bf16 %v1404, %v1404
        %v2109 = vpack.c.bf16 %v1405, %v1405
        %v2110 = vpack.c.bf16 %v1406, %v1406
        %v2111 = vpack.c.bf16 %v1407, %v1407
        %v2112 = vpack.c.bf16 %v1408, %v1408
        %v2113 = vpack.c.bf16 %v1537, %v1537
        %v2114 = vpack.c.bf16 %v1538, %v1538
        %v2115 = vpack.c.bf16 %v1539, %v1539
        %v2116 = vpack.c.bf16 %v1540, %v1540
        %v2117 = vpack.c.bf16 %v1541, %v1541
        %v2118 = vpack.c.bf16 %v1542, %v1542
        %v2119 = vpack.c.bf16 %v1543, %v1543
        %v2120 = vpack.c.bf16 %v1544, %v1544
        %v2121 = vpack.c.bf16 %v1673, %v1673
        %v2122 = vpack.c.bf16 %v1674, %v1674
        %v2123 = vpack.c.bf16 %v1675, %v1675
        %v2124 = vpack.c.bf16 %v1676, %v1676
        %v2125 = vpack.c.bf16 %v1677, %v1677
        %v2126 = vpack.c.bf16 %v1678, %v1678
        %v2127 = vpack.c.bf16 %v1679, %v1679
        %v2128 = vpack.c.bf16 %v1680, %v1680
        %v2129 = vpack.c.bf16 %v1809, %v1809
        %v2130 = vpack.c.bf16 %v1810, %v1810
        %v2131 = vpack.c.bf16 %v1811, %v1811
        %v2132 = vpack.c.bf16 %v1812, %v1812
        %v2133 = vpack.c.bf16 %v1813, %v1813
        %v2134 = vpack.c.bf16 %v1814, %v1814
        %v2135 = vpack.c.bf16 %v1815, %v1815
        %v2136 = vpack.c.bf16 %v1816, %v1816
        %v2137 = vpack.c.bf16 %v1945, %v1945
        %v2138 = vpack.c.bf16 %v1946, %v1946
        %v2139 = vpack.c.bf16 %v1947, %v1947
        %v2140 = vpack.c.bf16 %v1948, %v1948
        %v2141 = vpack.c.bf16 %v1949, %v1949
        %v2142 = vpack.c.bf16 %v1950, %v1950
        %v2143 = vpack.c.bf16 %v1951, %v1951
        %v2144 = vpack.c.bf16 %v1952, %v1952
        %v2145 = vpack.c.bf16 %v2081, %v2081
        %v2146 = vpack.c.bf16 %v2082, %v2082
        %v2147 = vpack.c.bf16 %v2083, %v2083
        %v2148 = vpack.c.bf16 %v2084, %v2084
        %v2149 = vpack.c.bf16 %v2085, %v2085
        %v2150 = vpack.c.bf16 %v2086, %v2086
        %v2151 = vpack.c.bf16 %v2087, %v2087
        %v2152 = vpack.c.bf16 %v2088, %v2088
        %v2153 = vld [vmem:[#allocation10] sm:$0xf]
        %v2154 = vld [vmem:[#allocation10 + $0x4] sm:$0xf]
        %v2155 = vld [vmem:[#allocation10 + $0x8] sm:$0xf]
        %v2156 = vld [vmem:[#allocation10 + $0xc] sm:$0xf]
        %v2157 = vld [vmem:[#allocation10 + $0x10] sm:$0xf]
        %v2158 = vld [vmem:[#allocation10 + $0x14] sm:$0xf]
        %v2159 = vld [vmem:[#allocation10 + $0x18] sm:$0xf]
        %v2160 = vld [vmem:[#allocation10 + $0x1c] sm:$0xf]
        %v2161 = vld [vmem:[#allocation10 + $0x20] sm:$0xf]
        %v2162 = vld [vmem:[#allocation10 + $0x24] sm:$0xf]
        %v2163 = vld [vmem:[#allocation10 + $0x28] sm:$0xf]
        %v2164 = vld [vmem:[#allocation10 + $0x2c] sm:$0xf]
        %v2165 = vld [vmem:[#allocation10 + $0x30] sm:$0xf]
        %v2166 = vld [vmem:[#allocation10 + $0x34] sm:$0xf]
        %v2167 = vld [vmem:[#allocation10 + $0x38] sm:$0xf]
        %v2168 = vld [vmem:[#allocation10 + $0x3c] sm:$0xf]
        %v2169 = vld [vmem:[#allocation10 + $0x40] sm:$0xf]
        %v2170 = vld [vmem:[#allocation10 + $0x44] sm:$0xf]
        %v2171 = vld [vmem:[#allocation10 + $0x48] sm:$0xf]
        %v2172 = vld [vmem:[#allocation10 + $0x4c] sm:$0xf]
        %v2173 = vld [vmem:[#allocation10 + $0x50] sm:$0xf]
        %v2174 = vld [vmem:[#allocation10 + $0x54] sm:$0xf]
        %v2175 = vld [vmem:[#allocation10 + $0x58] sm:$0xf]
        %v2176 = vld [vmem:[#allocation10 + $0x5c] sm:$0xf]
        %v2177 = vld [vmem:[#allocation10 + $0x60] sm:$0xf]
        %v2178 = vld [vmem:[#allocation10 + $0x64] sm:$0xf]
        %v2179 = vld [vmem:[#allocation10 + $0x68] sm:$0xf]
        %v2180 = vld [vmem:[#allocation10 + $0x6c] sm:$0xf]
        %v2181 = vld [vmem:[#allocation10 + $0x70] sm:$0xf]
        %v2182 = vld [vmem:[#allocation10 + $0x74] sm:$0xf]
        %v2183 = vld [vmem:[#allocation10 + $0x78] sm:$0xf]
        %v2184 = vld [vmem:[#allocation10 + $0x7c] sm:$0xf]
        %v2185 = vld [vmem:[#allocation10 + $0x80] sm:$0xf]
        %v2186 = vld [vmem:[#allocation10 + $0x84] sm:$0xf]
        %v2187 = vld [vmem:[#allocation10 + $0x88] sm:$0xf]
        %v2188 = vld [vmem:[#allocation10 + $0x8c] sm:$0xf]
        %v2189 = vld [vmem:[#allocation10 + $0x90] sm:$0xf]
        %v2190 = vld [vmem:[#allocation10 + $0x94] sm:$0xf]
        %v2191 = vld [vmem:[#allocation10 + $0x98] sm:$0xf]
        %v2192 = vld [vmem:[#allocation10 + $0x9c] sm:$0xf]
        %v2193 = vld [vmem:[#allocation10 + $0xa0] sm:$0xf]
        %v2194 = vld [vmem:[#allocation10 + $0xa4] sm:$0xf]
        %v2195 = vld [vmem:[#allocation10 + $0xa8] sm:$0xf]
        %v2196 = vld [vmem:[#allocation10 + $0xac] sm:$0xf]
        %v2197 = vld [vmem:[#allocation10 + $0xb0] sm:$0xf]
        %v2198 = vld [vmem:[#allocation10 + $0xb4] sm:$0xf]
        %v2199 = vld [vmem:[#allocation10 + $0xb8] sm:$0xf]
        %v2200 = vld [vmem:[#allocation10 + $0xbc] sm:$0xf]
        %v2201 = vld [vmem:[#allocation10 + $0xc0] sm:$0xf]
        %v2202 = vld [vmem:[#allocation10 + $0xc4] sm:$0xf]
        %v2203 = vld [vmem:[#allocation10 + $0xc8] sm:$0xf]
        %v2204 = vld [vmem:[#allocation10 + $0xcc] sm:$0xf]
        %v2205 = vld [vmem:[#allocation10 + $0xd0] sm:$0xf]
        %v2206 = vld [vmem:[#allocation10 + $0xd4] sm:$0xf]
        %v2207 = vld [vmem:[#allocation10 + $0xd8] sm:$0xf]
        %v2208 = vld [vmem:[#allocation10 + $0xdc] sm:$0xf]
        %v2209 = vld [vmem:[#allocation10 + $0xe0] sm:$0xf]
        %v2210 = vld [vmem:[#allocation10 + $0xe4] sm:$0xf]
        %v2211 = vld [vmem:[#allocation10 + $0xe8] sm:$0xf]
        %v2212 = vld [vmem:[#allocation10 + $0xec] sm:$0xf]
        %v2213 = vld [vmem:[#allocation10 + $0xf0] sm:$0xf]
        %v2214 = vld [vmem:[#allocation10 + $0xf4] sm:$0xf]
        %v2215 = vld [vmem:[#allocation10 + $0xf8] sm:$0xf]
        %v2216 = vld [vmem:[#allocation10 + $0xfc] sm:$0xf]
        %v2217 = vld [vmem:[#allocation10 + $0x100] sm:$0xf]
        %v2218 = vld [vmem:[#allocation10 + $0x104] sm:$0xf]
        %v2219 = vld [vmem:[#allocation10 + $0x108] sm:$0xf]
        %v2220 = vld [vmem:[#allocation10 + $0x10c] sm:$0xf]
        %v2221 = vld [vmem:[#allocation10 + $0x110] sm:$0xf]
        %v2222 = vld [vmem:[#allocation10 + $0x114] sm:$0xf]
        %v2223 = vld [vmem:[#allocation10 + $0x118] sm:$0xf]
        %v2224 = vld [vmem:[#allocation10 + $0x11c] sm:$0xf]
        %v2225 = vld [vmem:[#allocation10 + $0x120] sm:$0xf]
        %v2226 = vld [vmem:[#allocation10 + $0x124] sm:$0xf]
        %v2227 = vld [vmem:[#allocation10 + $0x128] sm:$0xf]
        %v2228 = vld [vmem:[#allocation10 + $0x12c] sm:$0xf]
        %v2229 = vld [vmem:[#allocation10 + $0x130] sm:$0xf]
        %v2230 = vld [vmem:[#allocation10 + $0x134] sm:$0xf]
        %v2231 = vld [vmem:[#allocation10 + $0x138] sm:$0xf]
        %v2232 = vld [vmem:[#allocation10 + $0x13c] sm:$0xf]
        %v2233 = vld [vmem:[#allocation10 + $0x140] sm:$0xf]
        %v2234 = vld [vmem:[#allocation10 + $0x144] sm:$0xf]
        %v2235 = vld [vmem:[#allocation10 + $0x148] sm:$0xf]
        %v2236 = vld [vmem:[#allocation10 + $0x14c] sm:$0xf]
        %v2237 = vld [vmem:[#allocation10 + $0x150] sm:$0xf]
        %v2238 = vld [vmem:[#allocation10 + $0x154] sm:$0xf]
        %v2239 = vld [vmem:[#allocation10 + $0x158] sm:$0xf]
        %v2240 = vld [vmem:[#allocation10 + $0x15c] sm:$0xf]
        %v2241 = vld [vmem:[#allocation10 + $0x160] sm:$0xf]
        %v2242 = vld [vmem:[#allocation10 + $0x164] sm:$0xf]
        %v2243 = vld [vmem:[#allocation10 + $0x168] sm:$0xf]
        %v2244 = vld [vmem:[#allocation10 + $0x16c] sm:$0xf]
        %v2245 = vld [vmem:[#allocation10 + $0x170] sm:$0xf]
        %v2246 = vld [vmem:[#allocation10 + $0x174] sm:$0xf]
        %v2247 = vld [vmem:[#allocation10 + $0x178] sm:$0xf]
        %v2248 = vld [vmem:[#allocation10 + $0x17c] sm:$0xf]
        %v2249 = vld [vmem:[#allocation10 + $0x180] sm:$0xf]
        %v2250 = vld [vmem:[#allocation10 + $0x184] sm:$0xf]
        %v2251 = vld [vmem:[#allocation10 + $0x188] sm:$0xf]
        %v2252 = vld [vmem:[#allocation10 + $0x18c] sm:$0xf]
        %v2253 = vld [vmem:[#allocation10 + $0x190] sm:$0xf]
        %v2254 = vld [vmem:[#allocation10 + $0x194] sm:$0xf]
        %v2255 = vld [vmem:[#allocation10 + $0x198] sm:$0xf]
        %v2256 = vld [vmem:[#allocation10 + $0x19c] sm:$0xf]
        %v2257 = vld [vmem:[#allocation10 + $0x1a0] sm:$0xf]
        %v2258 = vld [vmem:[#allocation10 + $0x1a4] sm:$0xf]
        %v2259 = vld [vmem:[#allocation10 + $0x1a8] sm:$0xf]
        %v2260 = vld [vmem:[#allocation10 + $0x1ac] sm:$0xf]
        %v2261 = vld [vmem:[#allocation10 + $0x1b0] sm:$0xf]
        %v2262 = vld [vmem:[#allocation10 + $0x1b4] sm:$0xf]
        %v2263 = vld [vmem:[#allocation10 + $0x1b8] sm:$0xf]
        %v2264 = vld [vmem:[#allocation10 + $0x1bc] sm:$0xf]
        %v2265 = vld [vmem:[#allocation10 + $0x1c0] sm:$0xf]
        %v2266 = vld [vmem:[#allocation10 + $0x1c4] sm:$0xf]
        %v2267 = vld [vmem:[#allocation10 + $0x1c8] sm:$0xf]
        %v2268 = vld [vmem:[#allocation10 + $0x1cc] sm:$0xf]
        %v2269 = vld [vmem:[#allocation10 + $0x1d0] sm:$0xf]
        %v2270 = vld [vmem:[#allocation10 + $0x1d4] sm:$0xf]
        %v2271 = vld [vmem:[#allocation10 + $0x1d8] sm:$0xf]
        %v2272 = vld [vmem:[#allocation10 + $0x1dc] sm:$0xf]
        %v2273 = vld [vmem:[#allocation10 + $0x1e0] sm:$0xf]
        %v2274 = vld [vmem:[#allocation10 + $0x1e4] sm:$0xf]
        %v2275 = vld [vmem:[#allocation10 + $0x1e8] sm:$0xf]
        %v2276 = vld [vmem:[#allocation10 + $0x1ec] sm:$0xf]
        %v2277 = vld [vmem:[#allocation10 + $0x1f0] sm:$0xf]
        %v2278 = vld [vmem:[#allocation10 + $0x1f4] sm:$0xf]
        %v2279 = vld [vmem:[#allocation10 + $0x1f8] sm:$0xf]
        %v2280 = vld [vmem:[#allocation10 + $0x1fc] sm:$0xf]
        %v2281 = vld [vmem:[#allocation10 + $0x200] sm:$0xf]
        %v2282 = vld [vmem:[#allocation10 + $0x204] sm:$0xf]
        %v2283 = vld [vmem:[#allocation10 + $0x208] sm:$0xf]
        %v2284 = vld [vmem:[#allocation10 + $0x20c] sm:$0xf]
        %v2285 = vld [vmem:[#allocation10 + $0x210] sm:$0xf]
        %v2286 = vld [vmem:[#allocation10 + $0x214] sm:$0xf]
        %v2287 = vld [vmem:[#allocation10 + $0x218] sm:$0xf]
        %v2288 = vld [vmem:[#allocation10 + $0x21c] sm:$0xf]
        %v2289 = vld [vmem:[#allocation10 + $0x220] sm:$0xf]
        %v2290 = vld [vmem:[#allocation10 + $0x224] sm:$0xf]
        %v2291 = vld [vmem:[#allocation10 + $0x228] sm:$0xf]
        %v2292 = vld [vmem:[#allocation10 + $0x22c] sm:$0xf]
        %v2293 = vld [vmem:[#allocation10 + $0x230] sm:$0xf]
        %v2294 = vld [vmem:[#allocation10 + $0x234] sm:$0xf]
        %v2295 = vld [vmem:[#allocation10 + $0x238] sm:$0xf]
        %v2296 = vld [vmem:[#allocation10 + $0x23c] sm:$0xf]
        %v2297 = vld [vmem:[#allocation10 + $0x240] sm:$0xf]
        %v2298 = vld [vmem:[#allocation10 + $0x244] sm:$0xf]
        %v2299 = vld [vmem:[#allocation10 + $0x248] sm:$0xf]
        %v2300 = vld [vmem:[#allocation10 + $0x24c] sm:$0xf]
        %v2301 = vld [vmem:[#allocation10 + $0x250] sm:$0xf]
        %v2302 = vld [vmem:[#allocation10 + $0x254] sm:$0xf]
        %v2303 = vld [vmem:[#allocation10 + $0x258] sm:$0xf]
        %v2304 = vld [vmem:[#allocation10 + $0x25c] sm:$0xf]
        %v2305 = vld [vmem:[#allocation10 + $0x260] sm:$0xf]
        %v2306 = vld [vmem:[#allocation10 + $0x264] sm:$0xf]
        %v2307 = vld [vmem:[#allocation10 + $0x268] sm:$0xf]
        %v2308 = vld [vmem:[#allocation10 + $0x26c] sm:$0xf]
        %v2309 = vld [vmem:[#allocation10 + $0x270] sm:$0xf]
        %v2310 = vld [vmem:[#allocation10 + $0x274] sm:$0xf]
        %v2311 = vld [vmem:[#allocation10 + $0x278] sm:$0xf]
        %v2312 = vld [vmem:[#allocation10 + $0x27c] sm:$0xf]
        %v2313 = vld [vmem:[#allocation10 + $0x280] sm:$0xf]
        %v2314 = vld [vmem:[#allocation10 + $0x284] sm:$0xf]
        %v2315 = vld [vmem:[#allocation10 + $0x288] sm:$0xf]
        %v2316 = vld [vmem:[#allocation10 + $0x28c] sm:$0xf]
        %v2317 = vld [vmem:[#allocation10 + $0x290] sm:$0xf]
        %v2318 = vld [vmem:[#allocation10 + $0x294] sm:$0xf]
        %v2319 = vld [vmem:[#allocation10 + $0x298] sm:$0xf]
        %v2320 = vld [vmem:[#allocation10 + $0x29c] sm:$0xf]
        %v2321 = vld [vmem:[#allocation10 + $0x2a0] sm:$0xf]
        %v2322 = vld [vmem:[#allocation10 + $0x2a4] sm:$0xf]
        %v2323 = vld [vmem:[#allocation10 + $0x2a8] sm:$0xf]
        %v2324 = vld [vmem:[#allocation10 + $0x2ac] sm:$0xf]
        %v2325 = vld [vmem:[#allocation10 + $0x2b0] sm:$0xf]
        %v2326 = vld [vmem:[#allocation10 + $0x2b4] sm:$0xf]
        %v2327 = vld [vmem:[#allocation10 + $0x2b8] sm:$0xf]
        %v2328 = vld [vmem:[#allocation10 + $0x2bc] sm:$0xf]
        %v2329 = vld [vmem:[#allocation10 + $0x2c0] sm:$0xf]
        %v2330 = vld [vmem:[#allocation10 + $0x2c4] sm:$0xf]
        %v2331 = vld [vmem:[#allocation10 + $0x2c8] sm:$0xf]
        %v2332 = vld [vmem:[#allocation10 + $0x2cc] sm:$0xf]
        %v2333 = vld [vmem:[#allocation10 + $0x2d0] sm:$0xf]
        %v2334 = vld [vmem:[#allocation10 + $0x2d4] sm:$0xf]
        %v2335 = vld [vmem:[#allocation10 + $0x2d8] sm:$0xf]
        %v2336 = vld [vmem:[#allocation10 + $0x2dc] sm:$0xf]
        %v2337 = vld [vmem:[#allocation10 + $0x2e0] sm:$0xf]
        %v2338 = vld [vmem:[#allocation10 + $0x2e4] sm:$0xf]
        %v2339 = vld [vmem:[#allocation10 + $0x2e8] sm:$0xf]
        %v2340 = vld [vmem:[#allocation10 + $0x2ec] sm:$0xf]
        %v2341 = vld [vmem:[#allocation10 + $0x2f0] sm:$0xf]
        %v2342 = vld [vmem:[#allocation10 + $0x2f4] sm:$0xf]
        %v2343 = vld [vmem:[#allocation10 + $0x2f8] sm:$0xf]
        %v2344 = vld [vmem:[#allocation10 + $0x2fc] sm:$0xf]
        %v2345 = vld [vmem:[#allocation10 + $0x300] sm:$0xf]
        %v2346 = vld [vmem:[#allocation10 + $0x304] sm:$0xf]
        %v2347 = vld [vmem:[#allocation10 + $0x308] sm:$0xf]
        %v2348 = vld [vmem:[#allocation10 + $0x30c] sm:$0xf]
        %v2349 = vld [vmem:[#allocation10 + $0x310] sm:$0xf]
        %v2350 = vld [vmem:[#allocation10 + $0x314] sm:$0xf]
        %v2351 = vld [vmem:[#allocation10 + $0x318] sm:$0xf]
        %v2352 = vld [vmem:[#allocation10 + $0x31c] sm:$0xf]
        %v2353 = vld [vmem:[#allocation10 + $0x320] sm:$0xf]
        %v2354 = vld [vmem:[#allocation10 + $0x324] sm:$0xf]
        %v2355 = vld [vmem:[#allocation10 + $0x328] sm:$0xf]
        %v2356 = vld [vmem:[#allocation10 + $0x32c] sm:$0xf]
        %v2357 = vld [vmem:[#allocation10 + $0x330] sm:$0xf]
        %v2358 = vld [vmem:[#allocation10 + $0x334] sm:$0xf]
        %v2359 = vld [vmem:[#allocation10 + $0x338] sm:$0xf]
        %v2360 = vld [vmem:[#allocation10 + $0x33c] sm:$0xf]
        %v2361 = vld [vmem:[#allocation10 + $0x340] sm:$0xf]
        %v2362 = vld [vmem:[#allocation10 + $0x344] sm:$0xf]
        %v2363 = vld [vmem:[#allocation10 + $0x348] sm:$0xf]
        %v2364 = vld [vmem:[#allocation10 + $0x34c] sm:$0xf]
        %v2365 = vld [vmem:[#allocation10 + $0x350] sm:$0xf]
        %v2366 = vld [vmem:[#allocation10 + $0x354] sm:$0xf]
        %v2367 = vld [vmem:[#allocation10 + $0x358] sm:$0xf]
        %v2368 = vld [vmem:[#allocation10 + $0x35c] sm:$0xf]
        %v2369 = vld [vmem:[#allocation10 + $0x360] sm:$0xf]
        %v2370 = vld [vmem:[#allocation10 + $0x364] sm:$0xf]
        %v2371 = vld [vmem:[#allocation10 + $0x368] sm:$0xf]
        %v2372 = vld [vmem:[#allocation10 + $0x36c] sm:$0xf]
        %v2373 = vld [vmem:[#allocation10 + $0x370] sm:$0xf]
        %v2374 = vld [vmem:[#allocation10 + $0x374] sm:$0xf]
        %v2375 = vld [vmem:[#allocation10 + $0x378] sm:$0xf]
        %v2376 = vld [vmem:[#allocation10 + $0x37c] sm:$0xf]
        %v2377 = vld [vmem:[#allocation10 + $0x380] sm:$0xf]
        %v2378 = vld [vmem:[#allocation10 + $0x384] sm:$0xf]
        %v2379 = vld [vmem:[#allocation10 + $0x388] sm:$0xf]
        %v2380 = vld [vmem:[#allocation10 + $0x38c] sm:$0xf]
        %v2381 = vld [vmem:[#allocation10 + $0x390] sm:$0xf]
        %v2382 = vld [vmem:[#allocation10 + $0x394] sm:$0xf]
        %v2383 = vld [vmem:[#allocation10 + $0x398] sm:$0xf]
        %v2384 = vld [vmem:[#allocation10 + $0x39c] sm:$0xf]
        %v2385 = vld [vmem:[#allocation10 + $0x3a0] sm:$0xf]
        %v2386 = vld [vmem:[#allocation10 + $0x3a4] sm:$0xf]
        %v2387 = vld [vmem:[#allocation10 + $0x3a8] sm:$0xf]
        %v2388 = vld [vmem:[#allocation10 + $0x3ac] sm:$0xf]
        %v2389 = vld [vmem:[#allocation10 + $0x3b0] sm:$0xf]
        %v2390 = vld [vmem:[#allocation10 + $0x3b4] sm:$0xf]
        %v2391 = vld [vmem:[#allocation10 + $0x3b8] sm:$0xf]
        %v2392 = vld [vmem:[#allocation10 + $0x3bc] sm:$0xf]
        %v2393 = vld [vmem:[#allocation10 + $0x3c0] sm:$0xf]
        %v2394 = vld [vmem:[#allocation10 + $0x3c4] sm:$0xf]
        %v2395 = vld [vmem:[#allocation10 + $0x3c8] sm:$0xf]
        %v2396 = vld [vmem:[#allocation10 + $0x3cc] sm:$0xf]
        %v2397 = vld [vmem:[#allocation10 + $0x3d0] sm:$0xf]
        %v2398 = vld [vmem:[#allocation10 + $0x3d4] sm:$0xf]
        %v2399 = vld [vmem:[#allocation10 + $0x3d8] sm:$0xf]
        %v2400 = vld [vmem:[#allocation10 + $0x3dc] sm:$0xf]
        %v2401 = vld [vmem:[#allocation10 + $0x3e0] sm:$0xf]
        %v2402 = vld [vmem:[#allocation10 + $0x3e4] sm:$0xf]
        %v2403 = vld [vmem:[#allocation10 + $0x3e8] sm:$0xf]
        %v2404 = vld [vmem:[#allocation10 + $0x3ec] sm:$0xf]
        %v2405 = vld [vmem:[#allocation10 + $0x3f0] sm:$0xf]
        %v2406 = vld [vmem:[#allocation10 + $0x3f4] sm:$0xf]
        %v2407 = vld [vmem:[#allocation10 + $0x3f8] sm:$0xf]
        %v2408 = vld [vmem:[#allocation10 + $0x3fc] sm:$0xf]
        %v2409 = vld [vmem:[#allocation10 + $0x400] sm:$0xf]
        %v2410 = vld [vmem:[#allocation10 + $0x404] sm:$0xf]
        %v2411 = vld [vmem:[#allocation10 + $0x408] sm:$0xf]
        %v2412 = vld [vmem:[#allocation10 + $0x40c] sm:$0xf]
        %v2413 = vld [vmem:[#allocation10 + $0x410] sm:$0xf]
        %v2414 = vld [vmem:[#allocation10 + $0x414] sm:$0xf]
        %v2415 = vld [vmem:[#allocation10 + $0x418] sm:$0xf]
        %v2416 = vld [vmem:[#allocation10 + $0x41c] sm:$0xf]
        %v2417 = vld [vmem:[#allocation10 + $0x420] sm:$0xf]
        %v2418 = vld [vmem:[#allocation10 + $0x424] sm:$0xf]
        %v2419 = vld [vmem:[#allocation10 + $0x428] sm:$0xf]
        %v2420 = vld [vmem:[#allocation10 + $0x42c] sm:$0xf]
        %v2421 = vld [vmem:[#allocation10 + $0x430] sm:$0xf]
        %v2422 = vld [vmem:[#allocation10 + $0x434] sm:$0xf]
        %v2423 = vld [vmem:[#allocation10 + $0x438] sm:$0xf]
        %v2424 = vld [vmem:[#allocation10 + $0x43c] sm:$0xf]
        %v2425 = vld [vmem:[#allocation10 + $0x440] sm:$0xf]
        %v2426 = vld [vmem:[#allocation10 + $0x444] sm:$0xf]
        %v2427 = vld [vmem:[#allocation10 + $0x448] sm:$0xf]
        %v2428 = vld [vmem:[#allocation10 + $0x44c] sm:$0xf]
        %v2429 = vld [vmem:[#allocation10 + $0x450] sm:$0xf]
        %v2430 = vld [vmem:[#allocation10 + $0x454] sm:$0xf]
        %v2431 = vld [vmem:[#allocation10 + $0x458] sm:$0xf]
        %v2432 = vld [vmem:[#allocation10 + $0x45c] sm:$0xf]
        %v2433 = vld [vmem:[#allocation10 + $0x460] sm:$0xf]
        %v2434 = vld [vmem:[#allocation10 + $0x464] sm:$0xf]
        %v2435 = vld [vmem:[#allocation10 + $0x468] sm:$0xf]
        %v2436 = vld [vmem:[#allocation10 + $0x46c] sm:$0xf]
        %v2437 = vld [vmem:[#allocation10 + $0x470] sm:$0xf]
        %v2438 = vld [vmem:[#allocation10 + $0x474] sm:$0xf]
        %v2439 = vld [vmem:[#allocation10 + $0x478] sm:$0xf]
        %v2440 = vld [vmem:[#allocation10 + $0x47c] sm:$0xf]
        %v2441 = vld [vmem:[#allocation10 + $0x480] sm:$0xf]
        %v2442 = vld [vmem:[#allocation10 + $0x484] sm:$0xf]
        %v2443 = vld [vmem:[#allocation10 + $0x488] sm:$0xf]
        %v2444 = vld [vmem:[#allocation10 + $0x48c] sm:$0xf]
        %v2445 = vld [vmem:[#allocation10 + $0x490] sm:$0xf]
        %v2446 = vld [vmem:[#allocation10 + $0x494] sm:$0xf]
        %v2447 = vld [vmem:[#allocation10 + $0x498] sm:$0xf]
        %v2448 = vld [vmem:[#allocation10 + $0x49c] sm:$0xf]
        %v2449 = vld [vmem:[#allocation10 + $0x4a0] sm:$0xf]
        %v2450 = vld [vmem:[#allocation10 + $0x4a4] sm:$0xf]
        %v2451 = vld [vmem:[#allocation10 + $0x4a8] sm:$0xf]
        %v2452 = vld [vmem:[#allocation10 + $0x4ac] sm:$0xf]
        %v2453 = vld [vmem:[#allocation10 + $0x4b0] sm:$0xf]
        %v2454 = vld [vmem:[#allocation10 + $0x4b4] sm:$0xf]
        %v2455 = vld [vmem:[#allocation10 + $0x4b8] sm:$0xf]
        %v2456 = vld [vmem:[#allocation10 + $0x4bc] sm:$0xf]
        %v2457 = vld [vmem:[#allocation10 + $0x4c0] sm:$0xf]
        %v2458 = vld [vmem:[#allocation10 + $0x4c4] sm:$0xf]
        %v2459 = vld [vmem:[#allocation10 + $0x4c8] sm:$0xf]
        %v2460 = vld [vmem:[#allocation10 + $0x4cc] sm:$0xf]
        %v2461 = vld [vmem:[#allocation10 + $0x4d0] sm:$0xf]
        %v2462 = vld [vmem:[#allocation10 + $0x4d4] sm:$0xf]
        %v2463 = vld [vmem:[#allocation10 + $0x4d8] sm:$0xf]
        %v2464 = vld [vmem:[#allocation10 + $0x4dc] sm:$0xf]
        %v2465 = vld [vmem:[#allocation10 + $0x4e0] sm:$0xf]
        %v2466 = vld [vmem:[#allocation10 + $0x4e4] sm:$0xf]
        %v2467 = vld [vmem:[#allocation10 + $0x4e8] sm:$0xf]
        %v2468 = vld [vmem:[#allocation10 + $0x4ec] sm:$0xf]
        %v2469 = vld [vmem:[#allocation10 + $0x4f0] sm:$0xf]
        %v2470 = vld [vmem:[#allocation10 + $0x4f4] sm:$0xf]
        %v2471 = vld [vmem:[#allocation10 + $0x4f8] sm:$0xf]
        %v2472 = vld [vmem:[#allocation10 + $0x4fc] sm:$0xf]
        %v2473 = vld [vmem:[#allocation10 + $0x500] sm:$0xf]
        %v2474 = vld [vmem:[#allocation10 + $0x504] sm:$0xf]
        %v2475 = vld [vmem:[#allocation10 + $0x508] sm:$0xf]
        %v2476 = vld [vmem:[#allocation10 + $0x50c] sm:$0xf]
        %v2477 = vld [vmem:[#allocation10 + $0x510] sm:$0xf]
        %v2478 = vld [vmem:[#allocation10 + $0x514] sm:$0xf]
        %v2479 = vld [vmem:[#allocation10 + $0x518] sm:$0xf]
        %v2480 = vld [vmem:[#allocation10 + $0x51c] sm:$0xf]
        %v2481 = vld [vmem:[#allocation10 + $0x520] sm:$0xf]
        %v2482 = vld [vmem:[#allocation10 + $0x524] sm:$0xf]
        %v2483 = vld [vmem:[#allocation10 + $0x528] sm:$0xf]
        %v2484 = vld [vmem:[#allocation10 + $0x52c] sm:$0xf]
        %v2485 = vld [vmem:[#allocation10 + $0x530] sm:$0xf]
        %v2486 = vld [vmem:[#allocation10 + $0x534] sm:$0xf]
        %v2487 = vld [vmem:[#allocation10 + $0x538] sm:$0xf]
        %v2488 = vld [vmem:[#allocation10 + $0x53c] sm:$0xf]
        %v2489 = vld [vmem:[#allocation10 + $0x540] sm:$0xf]
        %v2490 = vld [vmem:[#allocation10 + $0x544] sm:$0xf]
        %v2491 = vld [vmem:[#allocation10 + $0x548] sm:$0xf]
        %v2492 = vld [vmem:[#allocation10 + $0x54c] sm:$0xf]
        %v2493 = vld [vmem:[#allocation10 + $0x550] sm:$0xf]
        %v2494 = vld [vmem:[#allocation10 + $0x554] sm:$0xf]
        %v2495 = vld [vmem:[#allocation10 + $0x558] sm:$0xf]
        %v2496 = vld [vmem:[#allocation10 + $0x55c] sm:$0xf]
        %v2497 = vld [vmem:[#allocation10 + $0x560] sm:$0xf]
        %v2498 = vld [vmem:[#allocation10 + $0x564] sm:$0xf]
        %v2499 = vld [vmem:[#allocation10 + $0x568] sm:$0xf]
        %v2500 = vld [vmem:[#allocation10 + $0x56c] sm:$0xf]
        %v2501 = vld [vmem:[#allocation10 + $0x570] sm:$0xf]
        %v2502 = vld [vmem:[#allocation10 + $0x574] sm:$0xf]
        %v2503 = vld [vmem:[#allocation10 + $0x578] sm:$0xf]
        %v2504 = vld [vmem:[#allocation10 + $0x57c] sm:$0xf]
        %v2505 = vld [vmem:[#allocation10 + $0x580] sm:$0xf]
        %v2506 = vld [vmem:[#allocation10 + $0x584] sm:$0xf]
        %v2507 = vld [vmem:[#allocation10 + $0x588] sm:$0xf]
        %v2508 = vld [vmem:[#allocation10 + $0x58c] sm:$0xf]
        %v2509 = vld [vmem:[#allocation10 + $0x590] sm:$0xf]
        %v2510 = vld [vmem:[#allocation10 + $0x594] sm:$0xf]
        %v2511 = vld [vmem:[#allocation10 + $0x598] sm:$0xf]
        %v2512 = vld [vmem:[#allocation10 + $0x59c] sm:$0xf]
        %v2513 = vld [vmem:[#allocation10 + $0x5a0] sm:$0xf]
        %v2514 = vld [vmem:[#allocation10 + $0x5a4] sm:$0xf]
        %v2515 = vld [vmem:[#allocation10 + $0x5a8] sm:$0xf]
        %v2516 = vld [vmem:[#allocation10 + $0x5ac] sm:$0xf]
        %v2517 = vld [vmem:[#allocation10 + $0x5b0] sm:$0xf]
        %v2518 = vld [vmem:[#allocation10 + $0x5b4] sm:$0xf]
        %v2519 = vld [vmem:[#allocation10 + $0x5b8] sm:$0xf]
        %v2520 = vld [vmem:[#allocation10 + $0x5bc] sm:$0xf]
        %v2521 = vld [vmem:[#allocation10 + $0x5c0] sm:$0xf]
        %v2522 = vld [vmem:[#allocation10 + $0x5c4] sm:$0xf]
        %v2523 = vld [vmem:[#allocation10 + $0x5c8] sm:$0xf]
        %v2524 = vld [vmem:[#allocation10 + $0x5cc] sm:$0xf]
        %v2525 = vld [vmem:[#allocation10 + $0x5d0] sm:$0xf]
        %v2526 = vld [vmem:[#allocation10 + $0x5d4] sm:$0xf]
        %v2527 = vld [vmem:[#allocation10 + $0x5d8] sm:$0xf]
        %v2528 = vld [vmem:[#allocation10 + $0x5dc] sm:$0xf]
        %v2529 = vld [vmem:[#allocation10 + $0x5e0] sm:$0xf]
        %v2530 = vld [vmem:[#allocation10 + $0x5e4] sm:$0xf]
        %v2531 = vld [vmem:[#allocation10 + $0x5e8] sm:$0xf]
        %v2532 = vld [vmem:[#allocation10 + $0x5ec] sm:$0xf]
        %v2533 = vld [vmem:[#allocation10 + $0x5f0] sm:$0xf]
        %v2534 = vld [vmem:[#allocation10 + $0x5f4] sm:$0xf]
        %v2535 = vld [vmem:[#allocation10 + $0x5f8] sm:$0xf]
        %v2536 = vld [vmem:[#allocation10 + $0x5fc] sm:$0xf]
        %v2537 = vld [vmem:[#allocation10 + $0x600] sm:$0xf]
        %v2538 = vld [vmem:[#allocation10 + $0x604] sm:$0xf]
        %v2539 = vld [vmem:[#allocation10 + $0x608] sm:$0xf]
        %v2540 = vld [vmem:[#allocation10 + $0x60c] sm:$0xf]
        %v2541 = vld [vmem:[#allocation10 + $0x610] sm:$0xf]
        %v2542 = vld [vmem:[#allocation10 + $0x614] sm:$0xf]
        %v2543 = vld [vmem:[#allocation10 + $0x618] sm:$0xf]
        %v2544 = vld [vmem:[#allocation10 + $0x61c] sm:$0xf]
        %v2545 = vld [vmem:[#allocation10 + $0x620] sm:$0xf]
        %v2546 = vld [vmem:[#allocation10 + $0x624] sm:$0xf]
        %v2547 = vld [vmem:[#allocation10 + $0x628] sm:$0xf]
        %v2548 = vld [vmem:[#allocation10 + $0x62c] sm:$0xf]
        %v2549 = vld [vmem:[#allocation10 + $0x630] sm:$0xf]
        %v2550 = vld [vmem:[#allocation10 + $0x634] sm:$0xf]
        %v2551 = vld [vmem:[#allocation10 + $0x638] sm:$0xf]
        %v2552 = vld [vmem:[#allocation10 + $0x63c] sm:$0xf]
        %v2553 = vld [vmem:[#allocation10 + $0x640] sm:$0xf]
        %v2554 = vld [vmem:[#allocation10 + $0x644] sm:$0xf]
        %v2555 = vld [vmem:[#allocation10 + $0x648] sm:$0xf]
        %v2556 = vld [vmem:[#allocation10 + $0x64c] sm:$0xf]
        %v2557 = vld [vmem:[#allocation10 + $0x650] sm:$0xf]
        %v2558 = vld [vmem:[#allocation10 + $0x654] sm:$0xf]
        %v2559 = vld [vmem:[#allocation10 + $0x658] sm:$0xf]
        %v2560 = vld [vmem:[#allocation10 + $0x65c] sm:$0xf]
        %v2561 = vld [vmem:[#allocation10 + $0x660] sm:$0xf]
        %v2562 = vld [vmem:[#allocation10 + $0x664] sm:$0xf]
        %v2563 = vld [vmem:[#allocation10 + $0x668] sm:$0xf]
        %v2564 = vld [vmem:[#allocation10 + $0x66c] sm:$0xf]
        %v2565 = vld [vmem:[#allocation10 + $0x670] sm:$0xf]
        %v2566 = vld [vmem:[#allocation10 + $0x674] sm:$0xf]
        %v2567 = vld [vmem:[#allocation10 + $0x678] sm:$0xf]
        %v2568 = vld [vmem:[#allocation10 + $0x67c] sm:$0xf]
        %v2569 = vld [vmem:[#allocation10 + $0x680] sm:$0xf]
        %v2570 = vld [vmem:[#allocation10 + $0x684] sm:$0xf]
        %v2571 = vld [vmem:[#allocation10 + $0x688] sm:$0xf]
        %v2572 = vld [vmem:[#allocation10 + $0x68c] sm:$0xf]
        %v2573 = vld [vmem:[#allocation10 + $0x690] sm:$0xf]
        %v2574 = vld [vmem:[#allocation10 + $0x694] sm:$0xf]
        %v2575 = vld [vmem:[#allocation10 + $0x698] sm:$0xf]
        %v2576 = vld [vmem:[#allocation10 + $0x69c] sm:$0xf]
        %v2577 = vld [vmem:[#allocation10 + $0x6a0] sm:$0xf]
        %v2578 = vld [vmem:[#allocation10 + $0x6a4] sm:$0xf]
        %v2579 = vld [vmem:[#allocation10 + $0x6a8] sm:$0xf]
        %v2580 = vld [vmem:[#allocation10 + $0x6ac] sm:$0xf]
        %v2581 = vld [vmem:[#allocation10 + $0x6b0] sm:$0xf]
        %v2582 = vld [vmem:[#allocation10 + $0x6b4] sm:$0xf]
        %v2583 = vld [vmem:[#allocation10 + $0x6b8] sm:$0xf]
        %v2584 = vld [vmem:[#allocation10 + $0x6bc] sm:$0xf]
        %v2585 = vld [vmem:[#allocation10 + $0x6c0] sm:$0xf]
        %v2586 = vld [vmem:[#allocation10 + $0x6c4] sm:$0xf]
        %v2587 = vld [vmem:[#allocation10 + $0x6c8] sm:$0xf]
        %v2588 = vld [vmem:[#allocation10 + $0x6cc] sm:$0xf]
        %v2589 = vld [vmem:[#allocation10 + $0x6d0] sm:$0xf]
        %v2590 = vld [vmem:[#allocation10 + $0x6d4] sm:$0xf]
        %v2591 = vld [vmem:[#allocation10 + $0x6d8] sm:$0xf]
        %v2592 = vld [vmem:[#allocation10 + $0x6dc] sm:$0xf]
        %v2593 = vld [vmem:[#allocation10 + $0x6e0] sm:$0xf]
        %v2594 = vld [vmem:[#allocation10 + $0x6e4] sm:$0xf]
        %v2595 = vld [vmem:[#allocation10 + $0x6e8] sm:$0xf]
        %v2596 = vld [vmem:[#allocation10 + $0x6ec] sm:$0xf]
        %v2597 = vld [vmem:[#allocation10 + $0x6f0] sm:$0xf]
        %v2598 = vld [vmem:[#allocation10 + $0x6f4] sm:$0xf]
        %v2599 = vld [vmem:[#allocation10 + $0x6f8] sm:$0xf]
        %v2600 = vld [vmem:[#allocation10 + $0x6fc] sm:$0xf]
        %v2601 = vld [vmem:[#allocation10 + $0x700] sm:$0xf]
        %v2602 = vld [vmem:[#allocation10 + $0x704] sm:$0xf]
        %v2603 = vld [vmem:[#allocation10 + $0x708] sm:$0xf]
        %v2604 = vld [vmem:[#allocation10 + $0x70c] sm:$0xf]
        %v2605 = vld [vmem:[#allocation10 + $0x710] sm:$0xf]
        %v2606 = vld [vmem:[#allocation10 + $0x714] sm:$0xf]
        %v2607 = vld [vmem:[#allocation10 + $0x718] sm:$0xf]
        %v2608 = vld [vmem:[#allocation10 + $0x71c] sm:$0xf]
        %v2609 = vld [vmem:[#allocation10 + $0x720] sm:$0xf]
        %v2610 = vld [vmem:[#allocation10 + $0x724] sm:$0xf]
        %v2611 = vld [vmem:[#allocation10 + $0x728] sm:$0xf]
        %v2612 = vld [vmem:[#allocation10 + $0x72c] sm:$0xf]
        %v2613 = vld [vmem:[#allocation10 + $0x730] sm:$0xf]
        %v2614 = vld [vmem:[#allocation10 + $0x734] sm:$0xf]
        %v2615 = vld [vmem:[#allocation10 + $0x738] sm:$0xf]
        %v2616 = vld [vmem:[#allocation10 + $0x73c] sm:$0xf]
        %v2617 = vld [vmem:[#allocation10 + $0x740] sm:$0xf]
        %v2618 = vld [vmem:[#allocation10 + $0x744] sm:$0xf]
        %v2619 = vld [vmem:[#allocation10 + $0x748] sm:$0xf]
        %v2620 = vld [vmem:[#allocation10 + $0x74c] sm:$0xf]
        %v2621 = vld [vmem:[#allocation10 + $0x750] sm:$0xf]
        %v2622 = vld [vmem:[#allocation10 + $0x754] sm:$0xf]
        %v2623 = vld [vmem:[#allocation10 + $0x758] sm:$0xf]
        %v2624 = vld [vmem:[#allocation10 + $0x75c] sm:$0xf]
        %v2625 = vld [vmem:[#allocation10 + $0x760] sm:$0xf]
        %v2626 = vld [vmem:[#allocation10 + $0x764] sm:$0xf]
        %v2627 = vld [vmem:[#allocation10 + $0x768] sm:$0xf]
        %v2628 = vld [vmem:[#allocation10 + $0x76c] sm:$0xf]
        %v2629 = vld [vmem:[#allocation10 + $0x770] sm:$0xf]
        %v2630 = vld [vmem:[#allocation10 + $0x774] sm:$0xf]
        %v2631 = vld [vmem:[#allocation10 + $0x778] sm:$0xf]
        %v2632 = vld [vmem:[#allocation10 + $0x77c] sm:$0xf]
        %v2633 = vld [vmem:[#allocation10 + $0x780] sm:$0xf]
        %v2634 = vld [vmem:[#allocation10 + $0x784] sm:$0xf]
        %v2635 = vld [vmem:[#allocation10 + $0x788] sm:$0xf]
        %v2636 = vld [vmem:[#allocation10 + $0x78c] sm:$0xf]
        %v2637 = vld [vmem:[#allocation10 + $0x790] sm:$0xf]
        %v2638 = vld [vmem:[#allocation10 + $0x794] sm:$0xf]
        %v2639 = vld [vmem:[#allocation10 + $0x798] sm:$0xf]
        %v2640 = vld [vmem:[#allocation10 + $0x79c] sm:$0xf]
        %v2641 = vld [vmem:[#allocation10 + $0x7a0] sm:$0xf]
        %v2642 = vld [vmem:[#allocation10 + $0x7a4] sm:$0xf]
        %v2643 = vld [vmem:[#allocation10 + $0x7a8] sm:$0xf]
        %v2644 = vld [vmem:[#allocation10 + $0x7ac] sm:$0xf]
        %v2645 = vld [vmem:[#allocation10 + $0x7b0] sm:$0xf]
        %v2646 = vld [vmem:[#allocation10 + $0x7b4] sm:$0xf]
        %v2647 = vld [vmem:[#allocation10 + $0x7b8] sm:$0xf]
        %v2648 = vld [vmem:[#allocation10 + $0x7bc] sm:$0xf]
        %v2649 = vld [vmem:[#allocation10 + $0x7c0] sm:$0xf]
        %v2650 = vld [vmem:[#allocation10 + $0x7c4] sm:$0xf]
        %v2651 = vld [vmem:[#allocation10 + $0x7c8] sm:$0xf]
        %v2652 = vld [vmem:[#allocation10 + $0x7cc] sm:$0xf]
        %v2653 = vld [vmem:[#allocation10 + $0x7d0] sm:$0xf]
        %v2654 = vld [vmem:[#allocation10 + $0x7d4] sm:$0xf]
        %v2655 = vld [vmem:[#allocation10 + $0x7d8] sm:$0xf]
        %v2656 = vld [vmem:[#allocation10 + $0x7dc] sm:$0xf]
        %v2657 = vld [vmem:[#allocation10 + $0x7e0] sm:$0xf]
        %v2658 = vld [vmem:[#allocation10 + $0x7e4] sm:$0xf]
        %v2659 = vld [vmem:[#allocation10 + $0x7e8] sm:$0xf]
        %v2660 = vld [vmem:[#allocation10 + $0x7ec] sm:$0xf]
        %v2661 = vld [vmem:[#allocation10 + $0x7f0] sm:$0xf]
        %v2662 = vld [vmem:[#allocation10 + $0x7f4] sm:$0xf]
        %v2663 = vld [vmem:[#allocation10 + $0x7f8] sm:$0xf]
        %v2664 = vld [vmem:[#allocation10 + $0x7fc] sm:$0xf]
        %v2665 = vld [vmem:[#allocation10 + $0x800] sm:$0xf]
        %v2666 = vld [vmem:[#allocation10 + $0x804] sm:$0xf]
        %v2667 = vld [vmem:[#allocation10 + $0x808] sm:$0xf]
        %v2668 = vld [vmem:[#allocation10 + $0x80c] sm:$0xf]
        %v2669 = vld [vmem:[#allocation10 + $0x810] sm:$0xf]
        %v2670 = vld [vmem:[#allocation10 + $0x814] sm:$0xf]
        %v2671 = vld [vmem:[#allocation10 + $0x818] sm:$0xf]
        %v2672 = vld [vmem:[#allocation10 + $0x81c] sm:$0xf]
        %v2673 = vld [vmem:[#allocation10 + $0x820] sm:$0xf]
        %v2674 = vld [vmem:[#allocation10 + $0x824] sm:$0xf]
        %v2675 = vld [vmem:[#allocation10 + $0x828] sm:$0xf]
        %v2676 = vld [vmem:[#allocation10 + $0x82c] sm:$0xf]
        %v2677 = vld [vmem:[#allocation10 + $0x830] sm:$0xf]
        %v2678 = vld [vmem:[#allocation10 + $0x834] sm:$0xf]
        %v2679 = vld [vmem:[#allocation10 + $0x838] sm:$0xf]
        %v2680 = vld [vmem:[#allocation10 + $0x83c] sm:$0xf]
        %v2681 = vld [vmem:[#allocation10 + $0x840] sm:$0xf]
        %v2682 = vld [vmem:[#allocation10 + $0x844] sm:$0xf]
        %v2683 = vld [vmem:[#allocation10 + $0x848] sm:$0xf]
        %v2684 = vld [vmem:[#allocation10 + $0x84c] sm:$0xf]
        %v2685 = vld [vmem:[#allocation10 + $0x850] sm:$0xf]
        %v2686 = vld [vmem:[#allocation10 + $0x854] sm:$0xf]
        %v2687 = vld [vmem:[#allocation10 + $0x858] sm:$0xf]
        %v2688 = vld [vmem:[#allocation10 + $0x85c] sm:$0xf]
        %v2689 = vld [vmem:[#allocation10 + $0x860] sm:$0xf]
        %v2690 = vld [vmem:[#allocation10 + $0x864] sm:$0xf]
        %v2691 = vld [vmem:[#allocation10 + $0x868] sm:$0xf]
        %v2692 = vld [vmem:[#allocation10 + $0x86c] sm:$0xf]
        %v2693 = vld [vmem:[#allocation10 + $0x870] sm:$0xf]
        %v2694 = vld [vmem:[#allocation10 + $0x874] sm:$0xf]
        %v2695 = vld [vmem:[#allocation10 + $0x878] sm:$0xf]
        %v2696 = vld [vmem:[#allocation10 + $0x87c] sm:$0xf]
        %v2697 = vld [vmem:[#allocation10 + $0x880] sm:$0xf]
        %v2698 = vld [vmem:[#allocation10 + $0x884] sm:$0xf]
        %v2699 = vld [vmem:[#allocation10 + $0x888] sm:$0xf]
        %v2700 = vld [vmem:[#allocation10 + $0x88c] sm:$0xf]
        %v2701 = vld [vmem:[#allocation10 + $0x890] sm:$0xf]
        %v2702 = vld [vmem:[#allocation10 + $0x894] sm:$0xf]
        %v2703 = vld [vmem:[#allocation10 + $0x898] sm:$0xf]
        %v2704 = vld [vmem:[#allocation10 + $0x89c] sm:$0xf]
        %v2705 = vld [vmem:[#allocation10 + $0x8a0] sm:$0xf]
        %v2706 = vld [vmem:[#allocation10 + $0x8a4] sm:$0xf]
        %v2707 = vld [vmem:[#allocation10 + $0x8a8] sm:$0xf]
        %v2708 = vld [vmem:[#allocation10 + $0x8ac] sm:$0xf]
        %v2709 = vld [vmem:[#allocation10 + $0x8b0] sm:$0xf]
        %v2710 = vld [vmem:[#allocation10 + $0x8b4] sm:$0xf]
        %v2711 = vld [vmem:[#allocation10 + $0x8b8] sm:$0xf]
        %v2712 = vld [vmem:[#allocation10 + $0x8bc] sm:$0xf]
        %v2713 = vld [vmem:[#allocation10 + $0x8c0] sm:$0xf]
        %v2714 = vld [vmem:[#allocation10 + $0x8c4] sm:$0xf]
        %v2715 = vld [vmem:[#allocation10 + $0x8c8] sm:$0xf]
        %v2716 = vld [vmem:[#allocation10 + $0x8cc] sm:$0xf]
        %v2717 = vld [vmem:[#allocation10 + $0x8d0] sm:$0xf]
        %v2718 = vld [vmem:[#allocation10 + $0x8d4] sm:$0xf]
        %v2719 = vld [vmem:[#allocation10 + $0x8d8] sm:$0xf]
        %v2720 = vld [vmem:[#allocation10 + $0x8dc] sm:$0xf]
        %v2721 = vld [vmem:[#allocation10 + $0x8e0] sm:$0xf]
        %v2722 = vld [vmem:[#allocation10 + $0x8e4] sm:$0xf]
        %v2723 = vld [vmem:[#allocation10 + $0x8e8] sm:$0xf]
        %v2724 = vld [vmem:[#allocation10 + $0x8ec] sm:$0xf]
        %v2725 = vld [vmem:[#allocation10 + $0x8f0] sm:$0xf]
        %v2726 = vld [vmem:[#allocation10 + $0x8f4] sm:$0xf]
        %v2727 = vld [vmem:[#allocation10 + $0x8f8] sm:$0xf]
        %v2728 = vld [vmem:[#allocation10 + $0x8fc] sm:$0xf]
        %v2729 = vld [vmem:[#allocation10 + $0x900] sm:$0xf]
        %v2730 = vld [vmem:[#allocation10 + $0x904] sm:$0xf]
        %v2731 = vld [vmem:[#allocation10 + $0x908] sm:$0xf]
        %v2732 = vld [vmem:[#allocation10 + $0x90c] sm:$0xf]
        %v2733 = vld [vmem:[#allocation10 + $0x910] sm:$0xf]
        %v2734 = vld [vmem:[#allocation10 + $0x914] sm:$0xf]
        %v2735 = vld [vmem:[#allocation10 + $0x918] sm:$0xf]
        %v2736 = vld [vmem:[#allocation10 + $0x91c] sm:$0xf]
        %v2737 = vld [vmem:[#allocation10 + $0x920] sm:$0xf]
        %v2738 = vld [vmem:[#allocation10 + $0x924] sm:$0xf]
        %v2739 = vld [vmem:[#allocation10 + $0x928] sm:$0xf]
        %v2740 = vld [vmem:[#allocation10 + $0x92c] sm:$0xf]
        %v2741 = vld [vmem:[#allocation10 + $0x930] sm:$0xf]
        %v2742 = vld [vmem:[#allocation10 + $0x934] sm:$0xf]
        %v2743 = vld [vmem:[#allocation10 + $0x938] sm:$0xf]
        %v2744 = vld [vmem:[#allocation10 + $0x93c] sm:$0xf]
        %v2745 = vld [vmem:[#allocation10 + $0x940] sm:$0xf]
        %v2746 = vld [vmem:[#allocation10 + $0x944] sm:$0xf]
        %v2747 = vld [vmem:[#allocation10 + $0x948] sm:$0xf]
        %v2748 = vld [vmem:[#allocation10 + $0x94c] sm:$0xf]
        %v2749 = vld [vmem:[#allocation10 + $0x950] sm:$0xf]
        %v2750 = vld [vmem:[#allocation10 + $0x954] sm:$0xf]
        %v2751 = vld [vmem:[#allocation10 + $0x958] sm:$0xf]
        %v2752 = vld [vmem:[#allocation10 + $0x95c] sm:$0xf]
        %v2753 = vld [vmem:[#allocation10 + $0x960] sm:$0xf]
        %v2754 = vld [vmem:[#allocation10 + $0x964] sm:$0xf]
        %v2755 = vld [vmem:[#allocation10 + $0x968] sm:$0xf]
        %v2756 = vld [vmem:[#allocation10 + $0x96c] sm:$0xf]
        %v2757 = vld [vmem:[#allocation10 + $0x970] sm:$0xf]
        %v2758 = vld [vmem:[#allocation10 + $0x974] sm:$0xf]
        %v2759 = vld [vmem:[#allocation10 + $0x978] sm:$0xf]
        %v2760 = vld [vmem:[#allocation10 + $0x97c] sm:$0xf]
        %v2761 = vld [vmem:[#allocation10 + $0x980] sm:$0xf]
        %v2762 = vld [vmem:[#allocation10 + $0x984] sm:$0xf]
        %v2763 = vld [vmem:[#allocation10 + $0x988] sm:$0xf]
        %v2764 = vld [vmem:[#allocation10 + $0x98c] sm:$0xf]
        %v2765 = vld [vmem:[#allocation10 + $0x990] sm:$0xf]
        %v2766 = vld [vmem:[#allocation10 + $0x994] sm:$0xf]
        %v2767 = vld [vmem:[#allocation10 + $0x998] sm:$0xf]
        %v2768 = vld [vmem:[#allocation10 + $0x99c] sm:$0xf]
        %v2769 = vld [vmem:[#allocation10 + $0x9a0] sm:$0xf]
        %v2770 = vld [vmem:[#allocation10 + $0x9a4] sm:$0xf]
        %v2771 = vld [vmem:[#allocation10 + $0x9a8] sm:$0xf]
        %v2772 = vld [vmem:[#allocation10 + $0x9ac] sm:$0xf]
        %v2773 = vld [vmem:[#allocation10 + $0x9b0] sm:$0xf]
        %v2774 = vld [vmem:[#allocation10 + $0x9b4] sm:$0xf]
        %v2775 = vld [vmem:[#allocation10 + $0x9b8] sm:$0xf]
        %v2776 = vld [vmem:[#allocation10 + $0x9bc] sm:$0xf]
        %v2777 = vld [vmem:[#allocation10 + $0x9c0] sm:$0xf]
        %v2778 = vld [vmem:[#allocation10 + $0x9c4] sm:$0xf]
        %v2779 = vld [vmem:[#allocation10 + $0x9c8] sm:$0xf]
        %v2780 = vld [vmem:[#allocation10 + $0x9cc] sm:$0xf]
        %v2781 = vld [vmem:[#allocation10 + $0x9d0] sm:$0xf]
        %v2782 = vld [vmem:[#allocation10 + $0x9d4] sm:$0xf]
        %v2783 = vld [vmem:[#allocation10 + $0x9d8] sm:$0xf]
        %v2784 = vld [vmem:[#allocation10 + $0x9dc] sm:$0xf]
        %v2785 = vld [vmem:[#allocation10 + $0x9e0] sm:$0xf]
        %v2786 = vld [vmem:[#allocation10 + $0x9e4] sm:$0xf]
        %v2787 = vld [vmem:[#allocation10 + $0x9e8] sm:$0xf]
        %v2788 = vld [vmem:[#allocation10 + $0x9ec] sm:$0xf]
        %v2789 = vld [vmem:[#allocation10 + $0x9f0] sm:$0xf]
        %v2790 = vld [vmem:[#allocation10 + $0x9f4] sm:$0xf]
        %v2791 = vld [vmem:[#allocation10 + $0x9f8] sm:$0xf]
        %v2792 = vld [vmem:[#allocation10 + $0x9fc] sm:$0xf]
        %v2793 = vld [vmem:[#allocation10 + $0xa00] sm:$0xf]
        %v2794 = vld [vmem:[#allocation10 + $0xa04] sm:$0xf]
        %v2795 = vld [vmem:[#allocation10 + $0xa08] sm:$0xf]
        %v2796 = vld [vmem:[#allocation10 + $0xa0c] sm:$0xf]
        %v2797 = vld [vmem:[#allocation10 + $0xa10] sm:$0xf]
        %v2798 = vld [vmem:[#allocation10 + $0xa14] sm:$0xf]
        %v2799 = vld [vmem:[#allocation10 + $0xa18] sm:$0xf]
        %v2800 = vld [vmem:[#allocation10 + $0xa1c] sm:$0xf]
        %v2801 = vld [vmem:[#allocation10 + $0xa20] sm:$0xf]
        %v2802 = vld [vmem:[#allocation10 + $0xa24] sm:$0xf]
        %v2803 = vld [vmem:[#allocation10 + $0xa28] sm:$0xf]
        %v2804 = vld [vmem:[#allocation10 + $0xa2c] sm:$0xf]
        %v2805 = vld [vmem:[#allocation10 + $0xa30] sm:$0xf]
        %v2806 = vld [vmem:[#allocation10 + $0xa34] sm:$0xf]
        %v2807 = vld [vmem:[#allocation10 + $0xa38] sm:$0xf]
        %v2808 = vld [vmem:[#allocation10 + $0xa3c] sm:$0xf]
        %v2809 = vld [vmem:[#allocation10 + $0xa40] sm:$0xf]
        %v2810 = vld [vmem:[#allocation10 + $0xa44] sm:$0xf]
        %v2811 = vld [vmem:[#allocation10 + $0xa48] sm:$0xf]
        %v2812 = vld [vmem:[#allocation10 + $0xa4c] sm:$0xf]
        %v2813 = vld [vmem:[#allocation10 + $0xa50] sm:$0xf]
        %v2814 = vld [vmem:[#allocation10 + $0xa54] sm:$0xf]
        %v2815 = vld [vmem:[#allocation10 + $0xa58] sm:$0xf]
        %v2816 = vld [vmem:[#allocation10 + $0xa5c] sm:$0xf]
        %v2817 = vld [vmem:[#allocation10 + $0xa60] sm:$0xf]
        %v2818 = vld [vmem:[#allocation10 + $0xa64] sm:$0xf]
        %v2819 = vld [vmem:[#allocation10 + $0xa68] sm:$0xf]
        %v2820 = vld [vmem:[#allocation10 + $0xa6c] sm:$0xf]
        %v2821 = vld [vmem:[#allocation10 + $0xa70] sm:$0xf]
        %v2822 = vld [vmem:[#allocation10 + $0xa74] sm:$0xf]
        %v2823 = vld [vmem:[#allocation10 + $0xa78] sm:$0xf]
        %v2824 = vld [vmem:[#allocation10 + $0xa7c] sm:$0xf]
        %v2825 = vld [vmem:[#allocation10 + $0xa80] sm:$0xf]
        %v2826 = vld [vmem:[#allocation10 + $0xa84] sm:$0xf]
        %v2827 = vld [vmem:[#allocation10 + $0xa88] sm:$0xf]
        %v2828 = vld [vmem:[#allocation10 + $0xa8c] sm:$0xf]
        %v2829 = vld [vmem:[#allocation10 + $0xa90] sm:$0xf]
        %v2830 = vld [vmem:[#allocation10 + $0xa94] sm:$0xf]
        %v2831 = vld [vmem:[#allocation10 + $0xa98] sm:$0xf]
        %v2832 = vld [vmem:[#allocation10 + $0xa9c] sm:$0xf]
        %v2833 = vld [vmem:[#allocation10 + $0xaa0] sm:$0xf]
        %v2834 = vld [vmem:[#allocation10 + $0xaa4] sm:$0xf]
        %v2835 = vld [vmem:[#allocation10 + $0xaa8] sm:$0xf]
        %v2836 = vld [vmem:[#allocation10 + $0xaac] sm:$0xf]
        %v2837 = vld [vmem:[#allocation10 + $0xab0] sm:$0xf]
        %v2838 = vld [vmem:[#allocation10 + $0xab4] sm:$0xf]
        %v2839 = vld [vmem:[#allocation10 + $0xab8] sm:$0xf]
        %v2840 = vld [vmem:[#allocation10 + $0xabc] sm:$0xf]
        %v2841 = vld [vmem:[#allocation10 + $0xac0] sm:$0xf]
        %v2842 = vld [vmem:[#allocation10 + $0xac4] sm:$0xf]
        %v2843 = vld [vmem:[#allocation10 + $0xac8] sm:$0xf]
        %v2844 = vld [vmem:[#allocation10 + $0xacc] sm:$0xf]
        %v2845 = vld [vmem:[#allocation10 + $0xad0] sm:$0xf]
        %v2846 = vld [vmem:[#allocation10 + $0xad4] sm:$0xf]
        %v2847 = vld [vmem:[#allocation10 + $0xad8] sm:$0xf]
        %v2848 = vld [vmem:[#allocation10 + $0xadc] sm:$0xf]
        %v2849 = vld [vmem:[#allocation10 + $0xae0] sm:$0xf]
        %v2850 = vld [vmem:[#allocation10 + $0xae4] sm:$0xf]
        %v2851 = vld [vmem:[#allocation10 + $0xae8] sm:$0xf]
        %v2852 = vld [vmem:[#allocation10 + $0xaec] sm:$0xf]
        %v2853 = vld [vmem:[#allocation10 + $0xaf0] sm:$0xf]
        %v2854 = vld [vmem:[#allocation10 + $0xaf4] sm:$0xf]
        %v2855 = vld [vmem:[#allocation10 + $0xaf8] sm:$0xf]
        %v2856 = vld [vmem:[#allocation10 + $0xafc] sm:$0xf]
        %v2857 = vld [vmem:[#allocation10 + $0xb00] sm:$0xf]
        %v2858 = vld [vmem:[#allocation10 + $0xb04] sm:$0xf]
        %v2859 = vld [vmem:[#allocation10 + $0xb08] sm:$0xf]
        %v2860 = vld [vmem:[#allocation10 + $0xb0c] sm:$0xf]
        %v2861 = vld [vmem:[#allocation10 + $0xb10] sm:$0xf]
        %v2862 = vld [vmem:[#allocation10 + $0xb14] sm:$0xf]
        %v2863 = vld [vmem:[#allocation10 + $0xb18] sm:$0xf]
        %v2864 = vld [vmem:[#allocation10 + $0xb1c] sm:$0xf]
        %v2865 = vld [vmem:[#allocation10 + $0xb20] sm:$0xf]
        %v2866 = vld [vmem:[#allocation10 + $0xb24] sm:$0xf]
        %v2867 = vld [vmem:[#allocation10 + $0xb28] sm:$0xf]
        %v2868 = vld [vmem:[#allocation10 + $0xb2c] sm:$0xf]
        %v2869 = vld [vmem:[#allocation10 + $0xb30] sm:$0xf]
        %v2870 = vld [vmem:[#allocation10 + $0xb34] sm:$0xf]
        %v2871 = vld [vmem:[#allocation10 + $0xb38] sm:$0xf]
        %v2872 = vld [vmem:[#allocation10 + $0xb3c] sm:$0xf]
        %v2873 = vld [vmem:[#allocation10 + $0xb40] sm:$0xf]
        %v2874 = vld [vmem:[#allocation10 + $0xb44] sm:$0xf]
        %v2875 = vld [vmem:[#allocation10 + $0xb48] sm:$0xf]
        %v2876 = vld [vmem:[#allocation10 + $0xb4c] sm:$0xf]
        %v2877 = vld [vmem:[#allocation10 + $0xb50] sm:$0xf]
        %v2878 = vld [vmem:[#allocation10 + $0xb54] sm:$0xf]
        %v2879 = vld [vmem:[#allocation10 + $0xb58] sm:$0xf]
        %v2880 = vld [vmem:[#allocation10 + $0xb5c] sm:$0xf]
        %v2881 = vld [vmem:[#allocation10 + $0xb60] sm:$0xf]
        %v2882 = vld [vmem:[#allocation10 + $0xb64] sm:$0xf]
        %v2883 = vld [vmem:[#allocation10 + $0xb68] sm:$0xf]
        %v2884 = vld [vmem:[#allocation10 + $0xb6c] sm:$0xf]
        %v2885 = vld [vmem:[#allocation10 + $0xb70] sm:$0xf]
        %v2886 = vld [vmem:[#allocation10 + $0xb74] sm:$0xf]
        %v2887 = vld [vmem:[#allocation10 + $0xb78] sm:$0xf]
        %v2888 = vld [vmem:[#allocation10 + $0xb7c] sm:$0xf]
        %v2889 = vld [vmem:[#allocation10 + $0xb80] sm:$0xf]
        %v2890 = vld [vmem:[#allocation10 + $0xb84] sm:$0xf]
        %v2891 = vld [vmem:[#allocation10 + $0xb88] sm:$0xf]
        %v2892 = vld [vmem:[#allocation10 + $0xb8c] sm:$0xf]
        %v2893 = vld [vmem:[#allocation10 + $0xb90] sm:$0xf]
        %v2894 = vld [vmem:[#allocation10 + $0xb94] sm:$0xf]
        %v2895 = vld [vmem:[#allocation10 + $0xb98] sm:$0xf]
        %v2896 = vld [vmem:[#allocation10 + $0xb9c] sm:$0xf]
        %v2897 = vld [vmem:[#allocation10 + $0xba0] sm:$0xf]
        %v2898 = vld [vmem:[#allocation10 + $0xba4] sm:$0xf]
        %v2899 = vld [vmem:[#allocation10 + $0xba8] sm:$0xf]
        %v2900 = vld [vmem:[#allocation10 + $0xbac] sm:$0xf]
        %v2901 = vld [vmem:[#allocation10 + $0xbb0] sm:$0xf]
        %v2902 = vld [vmem:[#allocation10 + $0xbb4] sm:$0xf]
        %v2903 = vld [vmem:[#allocation10 + $0xbb8] sm:$0xf]
        %v2904 = vld [vmem:[#allocation10 + $0xbbc] sm:$0xf]
        %v2905 = vld [vmem:[#allocation10 + $0xbc0] sm:$0xf]
        %v2906 = vld [vmem:[#allocation10 + $0xbc4] sm:$0xf]
        %v2907 = vld [vmem:[#allocation10 + $0xbc8] sm:$0xf]
        %v2908 = vld [vmem:[#allocation10 + $0xbcc] sm:$0xf]
        %v2909 = vld [vmem:[#allocation10 + $0xbd0] sm:$0xf]
        %v2910 = vld [vmem:[#allocation10 + $0xbd4] sm:$0xf]
        %v2911 = vld [vmem:[#allocation10 + $0xbd8] sm:$0xf]
        %v2912 = vld [vmem:[#allocation10 + $0xbdc] sm:$0xf]
        %v2913 = vld [vmem:[#allocation10 + $0xbe0] sm:$0xf]
        %v2914 = vld [vmem:[#allocation10 + $0xbe4] sm:$0xf]
        %v2915 = vld [vmem:[#allocation10 + $0xbe8] sm:$0xf]
        %v2916 = vld [vmem:[#allocation10 + $0xbec] sm:$0xf]
        %v2917 = vld [vmem:[#allocation10 + $0xbf0] sm:$0xf]
        %v2918 = vld [vmem:[#allocation10 + $0xbf4] sm:$0xf]
        %v2919 = vld [vmem:[#allocation10 + $0xbf8] sm:$0xf]
        %v2920 = vld [vmem:[#allocation10 + $0xbfc] sm:$0xf]
        %v2921 = vld [vmem:[#allocation10 + $0xc00] sm:$0xf]
        %v2922 = vld [vmem:[#allocation10 + $0xc04] sm:$0xf]
        %v2923 = vld [vmem:[#allocation10 + $0xc08] sm:$0xf]
        %v2924 = vld [vmem:[#allocation10 + $0xc0c] sm:$0xf]
        %v2925 = vld [vmem:[#allocation10 + $0xc10] sm:$0xf]
        %v2926 = vld [vmem:[#allocation10 + $0xc14] sm:$0xf]
        %v2927 = vld [vmem:[#allocation10 + $0xc18] sm:$0xf]
        %v2928 = vld [vmem:[#allocation10 + $0xc1c] sm:$0xf]
        %v2929 = vld [vmem:[#allocation10 + $0xc20] sm:$0xf]
        %v2930 = vld [vmem:[#allocation10 + $0xc24] sm:$0xf]
        %v2931 = vld [vmem:[#allocation10 + $0xc28] sm:$0xf]
        %v2932 = vld [vmem:[#allocation10 + $0xc2c] sm:$0xf]
        %v2933 = vld [vmem:[#allocation10 + $0xc30] sm:$0xf]
        %v2934 = vld [vmem:[#allocation10 + $0xc34] sm:$0xf]
        %v2935 = vld [vmem:[#allocation10 + $0xc38] sm:$0xf]
        %v2936 = vld [vmem:[#allocation10 + $0xc3c] sm:$0xf]
        %v2937 = vld [vmem:[#allocation10 + $0xc40] sm:$0xf]
        %v2938 = vld [vmem:[#allocation10 + $0xc44] sm:$0xf]
        %v2939 = vld [vmem:[#allocation10 + $0xc48] sm:$0xf]
        %v2940 = vld [vmem:[#allocation10 + $0xc4c] sm:$0xf]
        %v2941 = vld [vmem:[#allocation10 + $0xc50] sm:$0xf]
        %v2942 = vld [vmem:[#allocation10 + $0xc54] sm:$0xf]
        %v2943 = vld [vmem:[#allocation10 + $0xc58] sm:$0xf]
        %v2944 = vld [vmem:[#allocation10 + $0xc5c] sm:$0xf]
        %v2945 = vld [vmem:[#allocation10 + $0xc60] sm:$0xf]
        %v2946 = vld [vmem:[#allocation10 + $0xc64] sm:$0xf]
        %v2947 = vld [vmem:[#allocation10 + $0xc68] sm:$0xf]
        %v2948 = vld [vmem:[#allocation10 + $0xc6c] sm:$0xf]
        %v2949 = vld [vmem:[#allocation10 + $0xc70] sm:$0xf]
        %v2950 = vld [vmem:[#allocation10 + $0xc74] sm:$0xf]
        %v2951 = vld [vmem:[#allocation10 + $0xc78] sm:$0xf]
        %v2952 = vld [vmem:[#allocation10 + $0xc7c] sm:$0xf]
        %v2953 = vld [vmem:[#allocation10 + $0xc80] sm:$0xf]
        %v2954 = vld [vmem:[#allocation10 + $0xc84] sm:$0xf]
        %v2955 = vld [vmem:[#allocation10 + $0xc88] sm:$0xf]
        %v2956 = vld [vmem:[#allocation10 + $0xc8c] sm:$0xf]
        %v2957 = vld [vmem:[#allocation10 + $0xc90] sm:$0xf]
        %v2958 = vld [vmem:[#allocation10 + $0xc94] sm:$0xf]
        %v2959 = vld [vmem:[#allocation10 + $0xc98] sm:$0xf]
        %v2960 = vld [vmem:[#allocation10 + $0xc9c] sm:$0xf]
        %v2961 = vld [vmem:[#allocation10 + $0xca0] sm:$0xf]
        %v2962 = vld [vmem:[#allocation10 + $0xca4] sm:$0xf]
        %v2963 = vld [vmem:[#allocation10 + $0xca8] sm:$0xf]
        %v2964 = vld [vmem:[#allocation10 + $0xcac] sm:$0xf]
        %v2965 = vld [vmem:[#allocation10 + $0xcb0] sm:$0xf]
        %v2966 = vld [vmem:[#allocation10 + $0xcb4] sm:$0xf]
        %v2967 = vld [vmem:[#allocation10 + $0xcb8] sm:$0xf]
        %v2968 = vld [vmem:[#allocation10 + $0xcbc] sm:$0xf]
        %v2969 = vld [vmem:[#allocation10 + $0xcc0] sm:$0xf]
        %v2970 = vld [vmem:[#allocation10 + $0xcc4] sm:$0xf]
        %v2971 = vld [vmem:[#allocation10 + $0xcc8] sm:$0xf]
        %v2972 = vld [vmem:[#allocation10 + $0xccc] sm:$0xf]
        %v2973 = vld [vmem:[#allocation10 + $0xcd0] sm:$0xf]
        %v2974 = vld [vmem:[#allocation10 + $0xcd4] sm:$0xf]
        %v2975 = vld [vmem:[#allocation10 + $0xcd8] sm:$0xf]
        %v2976 = vld [vmem:[#allocation10 + $0xcdc] sm:$0xf]
        %v2977 = vld [vmem:[#allocation10 + $0xce0] sm:$0xf]
        %v2978 = vld [vmem:[#allocation10 + $0xce4] sm:$0xf]
        %v2979 = vld [vmem:[#allocation10 + $0xce8] sm:$0xf]
        %v2980 = vld [vmem:[#allocation10 + $0xcec] sm:$0xf]
        %v2981 = vld [vmem:[#allocation10 + $0xcf0] sm:$0xf]
        %v2982 = vld [vmem:[#allocation10 + $0xcf4] sm:$0xf]
        %v2983 = vld [vmem:[#allocation10 + $0xcf8] sm:$0xf]
        %v2984 = vld [vmem:[#allocation10 + $0xcfc] sm:$0xf]
        %v2985 = vld [vmem:[#allocation10 + $0xd00] sm:$0xf]
        %v2986 = vld [vmem:[#allocation10 + $0xd04] sm:$0xf]
        %v2987 = vld [vmem:[#allocation10 + $0xd08] sm:$0xf]
        %v2988 = vld [vmem:[#allocation10 + $0xd0c] sm:$0xf]
        %v2989 = vld [vmem:[#allocation10 + $0xd10] sm:$0xf]
        %v2990 = vld [vmem:[#allocation10 + $0xd14] sm:$0xf]
        %v2991 = vld [vmem:[#allocation10 + $0xd18] sm:$0xf]
        %v2992 = vld [vmem:[#allocation10 + $0xd1c] sm:$0xf]
        %v2993 = vld [vmem:[#allocation10 + $0xd20] sm:$0xf]
        %v2994 = vld [vmem:[#allocation10 + $0xd24] sm:$0xf]
        %v2995 = vld [vmem:[#allocation10 + $0xd28] sm:$0xf]
        %v2996 = vld [vmem:[#allocation10 + $0xd2c] sm:$0xf]
        %v2997 = vld [vmem:[#allocation10 + $0xd30] sm:$0xf]
        %v2998 = vld [vmem:[#allocation10 + $0xd34] sm:$0xf]
        %v2999 = vld [vmem:[#allocation10 + $0xd38] sm:$0xf]
        %v3000 = vld [vmem:[#allocation10 + $0xd3c] sm:$0xf]
        %v3001 = vld [vmem:[#allocation10 + $0xd40] sm:$0xf]
        %v3002 = vld [vmem:[#allocation10 + $0xd44] sm:$0xf]
        %v3003 = vld [vmem:[#allocation10 + $0xd48] sm:$0xf]
        %v3004 = vld [vmem:[#allocation10 + $0xd4c] sm:$0xf]
        %v3005 = vld [vmem:[#allocation10 + $0xd50] sm:$0xf]
        %v3006 = vld [vmem:[#allocation10 + $0xd54] sm:$0xf]
        %v3007 = vld [vmem:[#allocation10 + $0xd58] sm:$0xf]
        %v3008 = vld [vmem:[#allocation10 + $0xd5c] sm:$0xf]
        %v3009 = vld [vmem:[#allocation10 + $0xd60] sm:$0xf]
        %v3010 = vld [vmem:[#allocation10 + $0xd64] sm:$0xf]
        %v3011 = vld [vmem:[#allocation10 + $0xd68] sm:$0xf]
        %v3012 = vld [vmem:[#allocation10 + $0xd6c] sm:$0xf]
        %v3013 = vld [vmem:[#allocation10 + $0xd70] sm:$0xf]
        %v3014 = vld [vmem:[#allocation10 + $0xd74] sm:$0xf]
        %v3015 = vld [vmem:[#allocation10 + $0xd78] sm:$0xf]
        %v3016 = vld [vmem:[#allocation10 + $0xd7c] sm:$0xf]
        %v3017 = vld [vmem:[#allocation10 + $0xd80] sm:$0xf]
        %v3018 = vld [vmem:[#allocation10 + $0xd84] sm:$0xf]
        %v3019 = vld [vmem:[#allocation10 + $0xd88] sm:$0xf]
        %v3020 = vld [vmem:[#allocation10 + $0xd8c] sm:$0xf]
        %v3021 = vld [vmem:[#allocation10 + $0xd90] sm:$0xf]
        %v3022 = vld [vmem:[#allocation10 + $0xd94] sm:$0xf]
        %v3023 = vld [vmem:[#allocation10 + $0xd98] sm:$0xf]
        %v3024 = vld [vmem:[#allocation10 + $0xd9c] sm:$0xf]
        %v3025 = vld [vmem:[#allocation10 + $0xda0] sm:$0xf]
        %v3026 = vld [vmem:[#allocation10 + $0xda4] sm:$0xf]
        %v3027 = vld [vmem:[#allocation10 + $0xda8] sm:$0xf]
        %v3028 = vld [vmem:[#allocation10 + $0xdac] sm:$0xf]
        %v3029 = vld [vmem:[#allocation10 + $0xdb0] sm:$0xf]
        %v3030 = vld [vmem:[#allocation10 + $0xdb4] sm:$0xf]
        %v3031 = vld [vmem:[#allocation10 + $0xdb8] sm:$0xf]
        %v3032 = vld [vmem:[#allocation10 + $0xdbc] sm:$0xf]
        %v3033 = vld [vmem:[#allocation10 + $0xdc0] sm:$0xf]
        %v3034 = vld [vmem:[#allocation10 + $0xdc4] sm:$0xf]
        %v3035 = vld [vmem:[#allocation10 + $0xdc8] sm:$0xf]
        %v3036 = vld [vmem:[#allocation10 + $0xdcc] sm:$0xf]
        %v3037 = vld [vmem:[#allocation10 + $0xdd0] sm:$0xf]
        %v3038 = vld [vmem:[#allocation10 + $0xdd4] sm:$0xf]
        %v3039 = vld [vmem:[#allocation10 + $0xdd8] sm:$0xf]
        %v3040 = vld [vmem:[#allocation10 + $0xddc] sm:$0xf]
        %v3041 = vld [vmem:[#allocation10 + $0xde0] sm:$0xf]
        %v3042 = vld [vmem:[#allocation10 + $0xde4] sm:$0xf]
        %v3043 = vld [vmem:[#allocation10 + $0xde8] sm:$0xf]
        %v3044 = vld [vmem:[#allocation10 + $0xdec] sm:$0xf]
        %v3045 = vld [vmem:[#allocation10 + $0xdf0] sm:$0xf]
        %v3046 = vld [vmem:[#allocation10 + $0xdf4] sm:$0xf]
        %v3047 = vld [vmem:[#allocation10 + $0xdf8] sm:$0xf]
        %v3048 = vld [vmem:[#allocation10 + $0xdfc] sm:$0xf]
        %v3049 = vld [vmem:[#allocation10 + $0xe00] sm:$0xf]
        %v3050 = vld [vmem:[#allocation10 + $0xe04] sm:$0xf]
        %v3051 = vld [vmem:[#allocation10 + $0xe08] sm:$0xf]
        %v3052 = vld [vmem:[#allocation10 + $0xe0c] sm:$0xf]
        %v3053 = vld [vmem:[#allocation10 + $0xe10] sm:$0xf]
        %v3054 = vld [vmem:[#allocation10 + $0xe14] sm:$0xf]
        %v3055 = vld [vmem:[#allocation10 + $0xe18] sm:$0xf]
        %v3056 = vld [vmem:[#allocation10 + $0xe1c] sm:$0xf]
        %v3057 = vld [vmem:[#allocation10 + $0xe20] sm:$0xf]
        %v3058 = vld [vmem:[#allocation10 + $0xe24] sm:$0xf]
        %v3059 = vld [vmem:[#allocation10 + $0xe28] sm:$0xf]
        %v3060 = vld [vmem:[#allocation10 + $0xe2c] sm:$0xf]
        %v3061 = vld [vmem:[#allocation10 + $0xe30] sm:$0xf]
        %v3062 = vld [vmem:[#allocation10 + $0xe34] sm:$0xf]
        %v3063 = vld [vmem:[#allocation10 + $0xe38] sm:$0xf]
        %v3064 = vld [vmem:[#allocation10 + $0xe3c] sm:$0xf]
        %v3065 = vld [vmem:[#allocation10 + $0xe40] sm:$0xf]
        %v3066 = vld [vmem:[#allocation10 + $0xe44] sm:$0xf]
        %v3067 = vld [vmem:[#allocation10 + $0xe48] sm:$0xf]
        %v3068 = vld [vmem:[#allocation10 + $0xe4c] sm:$0xf]
        %v3069 = vld [vmem:[#allocation10 + $0xe50] sm:$0xf]
        %v3070 = vld [vmem:[#allocation10 + $0xe54] sm:$0xf]
        %v3071 = vld [vmem:[#allocation10 + $0xe58] sm:$0xf]
        %v3072 = vld [vmem:[#allocation10 + $0xe5c] sm:$0xf]
        %v3073 = vld [vmem:[#allocation10 + $0xe60] sm:$0xf]
        %v3074 = vld [vmem:[#allocation10 + $0xe64] sm:$0xf]
        %v3075 = vld [vmem:[#allocation10 + $0xe68] sm:$0xf]
        %v3076 = vld [vmem:[#allocation10 + $0xe6c] sm:$0xf]
        %v3077 = vld [vmem:[#allocation10 + $0xe70] sm:$0xf]
        %v3078 = vld [vmem:[#allocation10 + $0xe74] sm:$0xf]
        %v3079 = vld [vmem:[#allocation10 + $0xe78] sm:$0xf]
        %v3080 = vld [vmem:[#allocation10 + $0xe7c] sm:$0xf]
        %v3081 = vld [vmem:[#allocation10 + $0xe80] sm:$0xf]
        %v3082 = vld [vmem:[#allocation10 + $0xe84] sm:$0xf]
        %v3083 = vld [vmem:[#allocation10 + $0xe88] sm:$0xf]
        %v3084 = vld [vmem:[#allocation10 + $0xe8c] sm:$0xf]
        %v3085 = vld [vmem:[#allocation10 + $0xe90] sm:$0xf]
        %v3086 = vld [vmem:[#allocation10 + $0xe94] sm:$0xf]
        %v3087 = vld [vmem:[#allocation10 + $0xe98] sm:$0xf]
        %v3088 = vld [vmem:[#allocation10 + $0xe9c] sm:$0xf]
        %v3089 = vld [vmem:[#allocation10 + $0xea0] sm:$0xf]
        %v3090 = vld [vmem:[#allocation10 + $0xea4] sm:$0xf]
        %v3091 = vld [vmem:[#allocation10 + $0xea8] sm:$0xf]
        %v3092 = vld [vmem:[#allocation10 + $0xeac] sm:$0xf]
        %v3093 = vld [vmem:[#allocation10 + $0xeb0] sm:$0xf]
        %v3094 = vld [vmem:[#allocation10 + $0xeb4] sm:$0xf]
        %v3095 = vld [vmem:[#allocation10 + $0xeb8] sm:$0xf]
        %v3096 = vld [vmem:[#allocation10 + $0xebc] sm:$0xf]
        %v3097 = vld [vmem:[#allocation10 + $0xec0] sm:$0xf]
        %v3098 = vld [vmem:[#allocation10 + $0xec4] sm:$0xf]
        %v3099 = vld [vmem:[#allocation10 + $0xec8] sm:$0xf]
        %v3100 = vld [vmem:[#allocation10 + $0xecc] sm:$0xf]
        %v3101 = vld [vmem:[#allocation10 + $0xed0] sm:$0xf]
        %v3102 = vld [vmem:[#allocation10 + $0xed4] sm:$0xf]
        %v3103 = vld [vmem:[#allocation10 + $0xed8] sm:$0xf]
        %v3104 = vld [vmem:[#allocation10 + $0xedc] sm:$0xf]
        %v3105 = vld [vmem:[#allocation10 + $0xee0] sm:$0xf]
        %v3106 = vld [vmem:[#allocation10 + $0xee4] sm:$0xf]
        %v3107 = vld [vmem:[#allocation10 + $0xee8] sm:$0xf]
        %v3108 = vld [vmem:[#allocation10 + $0xeec] sm:$0xf]
        %v3109 = vld [vmem:[#allocation10 + $0xef0] sm:$0xf]
        %v3110 = vld [vmem:[#allocation10 + $0xef4] sm:$0xf]
        %v3111 = vld [vmem:[#allocation10 + $0xef8] sm:$0xf]
        %v3112 = vld [vmem:[#allocation10 + $0xefc] sm:$0xf]
        %v3113 = vld [vmem:[#allocation10 + $0xf00] sm:$0xf]
        %v3114 = vld [vmem:[#allocation10 + $0xf04] sm:$0xf]
        %v3115 = vld [vmem:[#allocation10 + $0xf08] sm:$0xf]
        %v3116 = vld [vmem:[#allocation10 + $0xf0c] sm:$0xf]
        %v3117 = vld [vmem:[#allocation10 + $0xf10] sm:$0xf]
        %v3118 = vld [vmem:[#allocation10 + $0xf14] sm:$0xf]
        %v3119 = vld [vmem:[#allocation10 + $0xf18] sm:$0xf]
        %v3120 = vld [vmem:[#allocation10 + $0xf1c] sm:$0xf]
        %v3121 = vld [vmem:[#allocation10 + $0xf20] sm:$0xf]
        %v3122 = vld [vmem:[#allocation10 + $0xf24] sm:$0xf]
        %v3123 = vld [vmem:[#allocation10 + $0xf28] sm:$0xf]
        %v3124 = vld [vmem:[#allocation10 + $0xf2c] sm:$0xf]
        %v3125 = vld [vmem:[#allocation10 + $0xf30] sm:$0xf]
        %v3126 = vld [vmem:[#allocation10 + $0xf34] sm:$0xf]
        %v3127 = vld [vmem:[#allocation10 + $0xf38] sm:$0xf]
        %v3128 = vld [vmem:[#allocation10 + $0xf3c] sm:$0xf]
        %v3129 = vld [vmem:[#allocation10 + $0xf40] sm:$0xf]
        %v3130 = vld [vmem:[#allocation10 + $0xf44] sm:$0xf]
        %v3131 = vld [vmem:[#allocation10 + $0xf48] sm:$0xf]
        %v3132 = vld [vmem:[#allocation10 + $0xf4c] sm:$0xf]
        %v3133 = vld [vmem:[#allocation10 + $0xf50] sm:$0xf]
        %v3134 = vld [vmem:[#allocation10 + $0xf54] sm:$0xf]
        %v3135 = vld [vmem:[#allocation10 + $0xf58] sm:$0xf]
        %v3136 = vld [vmem:[#allocation10 + $0xf5c] sm:$0xf]
        %v3137 = vld [vmem:[#allocation10 + $0xf60] sm:$0xf]
        %v3138 = vld [vmem:[#allocation10 + $0xf64] sm:$0xf]
        %v3139 = vld [vmem:[#allocation10 + $0xf68] sm:$0xf]
        %v3140 = vld [vmem:[#allocation10 + $0xf6c] sm:$0xf]
        %v3141 = vld [vmem:[#allocation10 + $0xf70] sm:$0xf]
        %v3142 = vld [vmem:[#allocation10 + $0xf74] sm:$0xf]
        %v3143 = vld [vmem:[#allocation10 + $0xf78] sm:$0xf]
        %v3144 = vld [vmem:[#allocation10 + $0xf7c] sm:$0xf]
        %v3145 = vld [vmem:[#allocation10 + $0xf80] sm:$0xf]
        %v3146 = vld [vmem:[#allocation10 + $0xf84] sm:$0xf]
        %v3147 = vld [vmem:[#allocation10 + $0xf88] sm:$0xf]
        %v3148 = vld [vmem:[#allocation10 + $0xf8c] sm:$0xf]
        %v3149 = vld [vmem:[#allocation10 + $0xf90] sm:$0xf]
        %v3150 = vld [vmem:[#allocation10 + $0xf94] sm:$0xf]
        %v3151 = vld [vmem:[#allocation10 + $0xf98] sm:$0xf]
        %v3152 = vld [vmem:[#allocation10 + $0xf9c] sm:$0xf]
        %v3153 = vld [vmem:[#allocation10 + $0xfa0] sm:$0xf]
        %v3154 = vld [vmem:[#allocation10 + $0xfa4] sm:$0xf]
        %v3155 = vld [vmem:[#allocation10 + $0xfa8] sm:$0xf]
        %v3156 = vld [vmem:[#allocation10 + $0xfac] sm:$0xf]
        %v3157 = vld [vmem:[#allocation10 + $0xfb0] sm:$0xf]
        %v3158 = vld [vmem:[#allocation10 + $0xfb4] sm:$0xf]
        %v3159 = vld [vmem:[#allocation10 + $0xfb8] sm:$0xf]
        %v3160 = vld [vmem:[#allocation10 + $0xfbc] sm:$0xf]
        %v3161 = vld [vmem:[#allocation10 + $0xfc0] sm:$0xf]
        %v3162 = vld [vmem:[#allocation10 + $0xfc4] sm:$0xf]
        %v3163 = vld [vmem:[#allocation10 + $0xfc8] sm:$0xf]
        %v3164 = vld [vmem:[#allocation10 + $0xfcc] sm:$0xf]
        %v3165 = vld [vmem:[#allocation10 + $0xfd0] sm:$0xf]
        %v3166 = vld [vmem:[#allocation10 + $0xfd4] sm:$0xf]
        %v3167 = vld [vmem:[#allocation10 + $0xfd8] sm:$0xf]
        %v3168 = vld [vmem:[#allocation10 + $0xfdc] sm:$0xf]
        %v3169 = vld [vmem:[#allocation10 + $0xfe0] sm:$0xf]
        %v3170 = vld [vmem:[#allocation10 + $0xfe4] sm:$0xf]
        %v3171 = vld [vmem:[#allocation10 + $0xfe8] sm:$0xf]
        %v3172 = vld [vmem:[#allocation10 + $0xfec] sm:$0xf]
        %v3173 = vld [vmem:[#allocation10 + $0xff0] sm:$0xf]
        %v3174 = vld [vmem:[#allocation10 + $0xff4] sm:$0xf]
        %v3175 = vld [vmem:[#allocation10 + $0xff8] sm:$0xf]
        %v3176 = vld [vmem:[#allocation10 + $0xffc] sm:$0xf]
        %v4201 = vunpack.c.l.b16 %v2153
        %v4202 = vunpack.c.l.b16 %v2154
        %v4203 = vunpack.c.l.b16 %v2155
        %v4204 = vunpack.c.l.b16 %v2156
        %v4205 = vunpack.c.l.b16 %v2157
        %v4206 = vunpack.c.l.b16 %v2158
        %v4207 = vunpack.c.l.b16 %v2159
        %v4208 = vunpack.c.l.b16 %v2160
        %v4209 = vunpack.c.l.b16 %v2161
        %v4210 = vunpack.c.l.b16 %v2162
        %v4211 = vunpack.c.l.b16 %v2163
        %v4212 = vunpack.c.l.b16 %v2164
        %v4213 = vunpack.c.l.b16 %v2165
        %v4214 = vunpack.c.l.b16 %v2166
        %v4215 = vunpack.c.l.b16 %v2167
        %v4216 = vunpack.c.l.b16 %v2168
        %v4217 = vunpack.c.l.b16 %v2169
        %v4218 = vunpack.c.l.b16 %v2170
        %v4219 = vunpack.c.l.b16 %v2171
        %v4220 = vunpack.c.l.b16 %v2172
        %v4221 = vunpack.c.l.b16 %v2173
        %v4222 = vunpack.c.l.b16 %v2174
        %v4223 = vunpack.c.l.b16 %v2175
        %v4224 = vunpack.c.l.b16 %v2176
        %v4225 = vunpack.c.l.b16 %v2177
        %v4226 = vunpack.c.l.b16 %v2178
        %v4227 = vunpack.c.l.b16 %v2179
        %v4228 = vunpack.c.l.b16 %v2180
        %v4229 = vunpack.c.l.b16 %v2181
        %v4230 = vunpack.c.l.b16 %v2182
        %v4231 = vunpack.c.l.b16 %v2183
        %v4232 = vunpack.c.l.b16 %v2184
        %v4233 = vunpack.c.l.b16 %v2185
        %v4234 = vunpack.c.l.b16 %v2186
        %v4235 = vunpack.c.l.b16 %v2187
        %v4236 = vunpack.c.l.b16 %v2188
        %v4237 = vunpack.c.l.b16 %v2189
        %v4238 = vunpack.c.l.b16 %v2190
        %v4239 = vunpack.c.l.b16 %v2191
        %v4240 = vunpack.c.l.b16 %v2192
        %v4241 = vunpack.c.l.b16 %v2193
        %v4242 = vunpack.c.l.b16 %v2194
        %v4243 = vunpack.c.l.b16 %v2195
        %v4244 = vunpack.c.l.b16 %v2196
        %v4245 = vunpack.c.l.b16 %v2197
        %v4246 = vunpack.c.l.b16 %v2198
        %v4247 = vunpack.c.l.b16 %v2199
        %v4248 = vunpack.c.l.b16 %v2200
        %v4249 = vunpack.c.l.b16 %v2201
        %v4250 = vunpack.c.l.b16 %v2202
        %v4251 = vunpack.c.l.b16 %v2203
        %v4252 = vunpack.c.l.b16 %v2204
        %v4253 = vunpack.c.l.b16 %v2205
        %v4254 = vunpack.c.l.b16 %v2206
        %v4255 = vunpack.c.l.b16 %v2207
        %v4256 = vunpack.c.l.b16 %v2208
        %v4257 = vunpack.c.l.b16 %v2209
        %v4258 = vunpack.c.l.b16 %v2210
        %v4259 = vunpack.c.l.b16 %v2211
        %v4260 = vunpack.c.l.b16 %v2212
        %v4261 = vunpack.c.l.b16 %v2213
        %v4262 = vunpack.c.l.b16 %v2214
        %v4263 = vunpack.c.l.b16 %v2215
        %v4264 = vunpack.c.l.b16 %v2216
        %v4265 = vunpack.c.l.b16 %v2217
        %v4266 = vunpack.c.l.b16 %v2218
        %v4267 = vunpack.c.l.b16 %v2219
        %v4268 = vunpack.c.l.b16 %v2220
        %v4269 = vunpack.c.l.b16 %v2221
        %v4270 = vunpack.c.l.b16 %v2222
        %v4271 = vunpack.c.l.b16 %v2223
        %v4272 = vunpack.c.l.b16 %v2224
        %v4273 = vunpack.c.l.b16 %v2225
        %v4274 = vunpack.c.l.b16 %v2226
        %v4275 = vunpack.c.l.b16 %v2227
        %v4276 = vunpack.c.l.b16 %v2228
        %v4277 = vunpack.c.l.b16 %v2229
        %v4278 = vunpack.c.l.b16 %v2230
        %v4279 = vunpack.c.l.b16 %v2231
        %v4280 = vunpack.c.l.b16 %v2232
        %v4281 = vunpack.c.l.b16 %v2233
        %v4282 = vunpack.c.l.b16 %v2234
        %v4283 = vunpack.c.l.b16 %v2235
        %v4284 = vunpack.c.l.b16 %v2236
        %v4285 = vunpack.c.l.b16 %v2237
        %v4286 = vunpack.c.l.b16 %v2238
        %v4287 = vunpack.c.l.b16 %v2239
        %v4288 = vunpack.c.l.b16 %v2240
        %v4289 = vunpack.c.l.b16 %v2241
        %v4290 = vunpack.c.l.b16 %v2242
        %v4291 = vunpack.c.l.b16 %v2243
        %v4292 = vunpack.c.l.b16 %v2244
        %v4293 = vunpack.c.l.b16 %v2245
        %v4294 = vunpack.c.l.b16 %v2246
        %v4295 = vunpack.c.l.b16 %v2247
        %v4296 = vunpack.c.l.b16 %v2248
        %v4297 = vunpack.c.l.b16 %v2249
        %v4298 = vunpack.c.l.b16 %v2250
        %v4299 = vunpack.c.l.b16 %v2251
        %v4300 = vunpack.c.l.b16 %v2252
        %v4301 = vunpack.c.l.b16 %v2253
        %v4302 = vunpack.c.l.b16 %v2254
        %v4303 = vunpack.c.l.b16 %v2255
        %v4304 = vunpack.c.l.b16 %v2256
        %v4305 = vunpack.c.l.b16 %v2257
        %v4306 = vunpack.c.l.b16 %v2258
        %v4307 = vunpack.c.l.b16 %v2259
        %v4308 = vunpack.c.l.b16 %v2260
        %v4309 = vunpack.c.l.b16 %v2261
        %v4310 = vunpack.c.l.b16 %v2262
        %v4311 = vunpack.c.l.b16 %v2263
        %v4312 = vunpack.c.l.b16 %v2264
        %v4313 = vunpack.c.l.b16 %v2265
        %v4314 = vunpack.c.l.b16 %v2266
        %v4315 = vunpack.c.l.b16 %v2267
        %v4316 = vunpack.c.l.b16 %v2268
        %v4317 = vunpack.c.l.b16 %v2269
        %v4318 = vunpack.c.l.b16 %v2270
        %v4319 = vunpack.c.l.b16 %v2271
        %v4320 = vunpack.c.l.b16 %v2272
        %v4321 = vunpack.c.l.b16 %v2273
        %v4322 = vunpack.c.l.b16 %v2274
        %v4323 = vunpack.c.l.b16 %v2275
        %v4324 = vunpack.c.l.b16 %v2276
        %v4325 = vunpack.c.l.b16 %v2277
        %v4326 = vunpack.c.l.b16 %v2278
        %v4327 = vunpack.c.l.b16 %v2279
        %v4328 = vunpack.c.l.b16 %v2280
        %v4329 = vunpack.c.l.b16 %v2281
        %v4330 = vunpack.c.l.b16 %v2282
        %v4331 = vunpack.c.l.b16 %v2283
        %v4332 = vunpack.c.l.b16 %v2284
        %v4333 = vunpack.c.l.b16 %v2285
        %v4334 = vunpack.c.l.b16 %v2286
        %v4335 = vunpack.c.l.b16 %v2287
        %v4336 = vunpack.c.l.b16 %v2288
        %v4337 = vunpack.c.l.b16 %v2289
        %v4338 = vunpack.c.l.b16 %v2290
        %v4339 = vunpack.c.l.b16 %v2291
        %v4340 = vunpack.c.l.b16 %v2292
        %v4341 = vunpack.c.l.b16 %v2293
        %v4342 = vunpack.c.l.b16 %v2294
        %v4343 = vunpack.c.l.b16 %v2295
        %v4344 = vunpack.c.l.b16 %v2296
        %v4345 = vunpack.c.l.b16 %v2297
        %v4346 = vunpack.c.l.b16 %v2298
        %v4347 = vunpack.c.l.b16 %v2299
        %v4348 = vunpack.c.l.b16 %v2300
        %v4349 = vunpack.c.l.b16 %v2301
        %v4350 = vunpack.c.l.b16 %v2302
        %v4351 = vunpack.c.l.b16 %v2303
        %v4352 = vunpack.c.l.b16 %v2304
        %v4353 = vunpack.c.l.b16 %v2305
        %v4354 = vunpack.c.l.b16 %v2306
        %v4355 = vunpack.c.l.b16 %v2307
        %v4356 = vunpack.c.l.b16 %v2308
        %v4357 = vunpack.c.l.b16 %v2309
        %v4358 = vunpack.c.l.b16 %v2310
        %v4359 = vunpack.c.l.b16 %v2311
        %v4360 = vunpack.c.l.b16 %v2312
        %v4361 = vunpack.c.l.b16 %v2313
        %v4362 = vunpack.c.l.b16 %v2314
        %v4363 = vunpack.c.l.b16 %v2315
        %v4364 = vunpack.c.l.b16 %v2316
        %v4365 = vunpack.c.l.b16 %v2317
        %v4366 = vunpack.c.l.b16 %v2318
        %v4367 = vunpack.c.l.b16 %v2319
        %v4368 = vunpack.c.l.b16 %v2320
        %v4369 = vunpack.c.l.b16 %v2321
        %v4370 = vunpack.c.l.b16 %v2322
        %v4371 = vunpack.c.l.b16 %v2323
        %v4372 = vunpack.c.l.b16 %v2324
        %v4373 = vunpack.c.l.b16 %v2325
        %v4374 = vunpack.c.l.b16 %v2326
        %v4375 = vunpack.c.l.b16 %v2327
        %v4376 = vunpack.c.l.b16 %v2328
        %v4377 = vunpack.c.l.b16 %v2329
        %v4378 = vunpack.c.l.b16 %v2330
        %v4379 = vunpack.c.l.b16 %v2331
        %v4380 = vunpack.c.l.b16 %v2332
        %v4381 = vunpack.c.l.b16 %v2333
        %v4382 = vunpack.c.l.b16 %v2334
        %v4383 = vunpack.c.l.b16 %v2335
        %v4384 = vunpack.c.l.b16 %v2336
        %v4385 = vunpack.c.l.b16 %v2337
        %v4386 = vunpack.c.l.b16 %v2338
        %v4387 = vunpack.c.l.b16 %v2339
        %v4388 = vunpack.c.l.b16 %v2340
        %v4389 = vunpack.c.l.b16 %v2341
        %v4390 = vunpack.c.l.b16 %v2342
        %v4391 = vunpack.c.l.b16 %v2343
        %v4392 = vunpack.c.l.b16 %v2344
        %v4393 = vunpack.c.l.b16 %v2345
        %v4394 = vunpack.c.l.b16 %v2346
        %v4395 = vunpack.c.l.b16 %v2347
        %v4396 = vunpack.c.l.b16 %v2348
        %v4397 = vunpack.c.l.b16 %v2349
        %v4398 = vunpack.c.l.b16 %v2350
        %v4399 = vunpack.c.l.b16 %v2351
        %v4400 = vunpack.c.l.b16 %v2352
        %v4401 = vunpack.c.l.b16 %v2353
        %v4402 = vunpack.c.l.b16 %v2354
        %v4403 = vunpack.c.l.b16 %v2355
        %v4404 = vunpack.c.l.b16 %v2356
        %v4405 = vunpack.c.l.b16 %v2357
        %v4406 = vunpack.c.l.b16 %v2358
        %v4407 = vunpack.c.l.b16 %v2359
        %v4408 = vunpack.c.l.b16 %v2360
        %v4409 = vunpack.c.l.b16 %v2361
        %v4410 = vunpack.c.l.b16 %v2362
        %v4411 = vunpack.c.l.b16 %v2363
        %v4412 = vunpack.c.l.b16 %v2364
        %v4413 = vunpack.c.l.b16 %v2365
        %v4414 = vunpack.c.l.b16 %v2366
        %v4415 = vunpack.c.l.b16 %v2367
        %v4416 = vunpack.c.l.b16 %v2368
        %v4417 = vunpack.c.l.b16 %v2369
        %v4418 = vunpack.c.l.b16 %v2370
        %v4419 = vunpack.c.l.b16 %v2371
        %v4420 = vunpack.c.l.b16 %v2372
        %v4421 = vunpack.c.l.b16 %v2373
        %v4422 = vunpack.c.l.b16 %v2374
        %v4423 = vunpack.c.l.b16 %v2375
        %v4424 = vunpack.c.l.b16 %v2376
        %v4425 = vunpack.c.l.b16 %v2377
        %v4426 = vunpack.c.l.b16 %v2378
        %v4427 = vunpack.c.l.b16 %v2379
        %v4428 = vunpack.c.l.b16 %v2380
        %v4429 = vunpack.c.l.b16 %v2381
        %v4430 = vunpack.c.l.b16 %v2382
        %v4431 = vunpack.c.l.b16 %v2383
        %v4432 = vunpack.c.l.b16 %v2384
        %v4433 = vunpack.c.l.b16 %v2385
        %v4434 = vunpack.c.l.b16 %v2386
        %v4435 = vunpack.c.l.b16 %v2387
        %v4436 = vunpack.c.l.b16 %v2388
        %v4437 = vunpack.c.l.b16 %v2389
        %v4438 = vunpack.c.l.b16 %v2390
        %v4439 = vunpack.c.l.b16 %v2391
        %v4440 = vunpack.c.l.b16 %v2392
        %v4441 = vunpack.c.l.b16 %v2393
        %v4442 = vunpack.c.l.b16 %v2394
        %v4443 = vunpack.c.l.b16 %v2395
        %v4444 = vunpack.c.l.b16 %v2396
        %v4445 = vunpack.c.l.b16 %v2397
        %v4446 = vunpack.c.l.b16 %v2398
        %v4447 = vunpack.c.l.b16 %v2399
        %v4448 = vunpack.c.l.b16 %v2400
        %v4449 = vunpack.c.l.b16 %v2401
        %v4450 = vunpack.c.l.b16 %v2402
        %v4451 = vunpack.c.l.b16 %v2403
        %v4452 = vunpack.c.l.b16 %v2404
        %v4453 = vunpack.c.l.b16 %v2405
        %v4454 = vunpack.c.l.b16 %v2406
        %v4455 = vunpack.c.l.b16 %v2407
        %v4456 = vunpack.c.l.b16 %v2408
        %v4457 = vunpack.c.l.b16 %v2409
        %v4458 = vunpack.c.l.b16 %v2410
        %v4459 = vunpack.c.l.b16 %v2411
        %v4460 = vunpack.c.l.b16 %v2412
        %v4461 = vunpack.c.l.b16 %v2413
        %v4462 = vunpack.c.l.b16 %v2414
        %v4463 = vunpack.c.l.b16 %v2415
        %v4464 = vunpack.c.l.b16 %v2416
        %v4465 = vunpack.c.l.b16 %v2417
        %v4466 = vunpack.c.l.b16 %v2418
        %v4467 = vunpack.c.l.b16 %v2419
        %v4468 = vunpack.c.l.b16 %v2420
        %v4469 = vunpack.c.l.b16 %v2421
        %v4470 = vunpack.c.l.b16 %v2422
        %v4471 = vunpack.c.l.b16 %v2423
        %v4472 = vunpack.c.l.b16 %v2424
        %v4473 = vunpack.c.l.b16 %v2425
        %v4474 = vunpack.c.l.b16 %v2426
        %v4475 = vunpack.c.l.b16 %v2427
        %v4476 = vunpack.c.l.b16 %v2428
        %v4477 = vunpack.c.l.b16 %v2429
        %v4478 = vunpack.c.l.b16 %v2430
        %v4479 = vunpack.c.l.b16 %v2431
        %v4480 = vunpack.c.l.b16 %v2432
        %v4481 = vunpack.c.l.b16 %v2433
        %v4482 = vunpack.c.l.b16 %v2434
        %v4483 = vunpack.c.l.b16 %v2435
        %v4484 = vunpack.c.l.b16 %v2436
        %v4485 = vunpack.c.l.b16 %v2437
        %v4486 = vunpack.c.l.b16 %v2438
        %v4487 = vunpack.c.l.b16 %v2439
        %v4488 = vunpack.c.l.b16 %v2440
        %v4489 = vunpack.c.l.b16 %v2441
        %v4490 = vunpack.c.l.b16 %v2442
        %v4491 = vunpack.c.l.b16 %v2443
        %v4492 = vunpack.c.l.b16 %v2444
        %v4493 = vunpack.c.l.b16 %v2445
        %v4494 = vunpack.c.l.b16 %v2446
        %v4495 = vunpack.c.l.b16 %v2447
        %v4496 = vunpack.c.l.b16 %v2448
        %v4497 = vunpack.c.l.b16 %v2449
        %v4498 = vunpack.c.l.b16 %v2450
        %v4499 = vunpack.c.l.b16 %v2451
        %v4500 = vunpack.c.l.b16 %v2452
        %v4501 = vunpack.c.l.b16 %v2453
        %v4502 = vunpack.c.l.b16 %v2454
        %v4503 = vunpack.c.l.b16 %v2455
        %v4504 = vunpack.c.l.b16 %v2456
        %v4505 = vunpack.c.l.b16 %v2457
        %v4506 = vunpack.c.l.b16 %v2458
        %v4507 = vunpack.c.l.b16 %v2459
        %v4508 = vunpack.c.l.b16 %v2460
        %v4509 = vunpack.c.l.b16 %v2461
        %v4510 = vunpack.c.l.b16 %v2462
        %v4511 = vunpack.c.l.b16 %v2463
        %v4512 = vunpack.c.l.b16 %v2464
        %v4513 = vunpack.c.l.b16 %v2465
        %v4514 = vunpack.c.l.b16 %v2466
        %v4515 = vunpack.c.l.b16 %v2467
        %v4516 = vunpack.c.l.b16 %v2468
        %v4517 = vunpack.c.l.b16 %v2469
        %v4518 = vunpack.c.l.b16 %v2470
        %v4519 = vunpack.c.l.b16 %v2471
        %v4520 = vunpack.c.l.b16 %v2472
        %v4521 = vunpack.c.l.b16 %v2473
        %v4522 = vunpack.c.l.b16 %v2474
        %v4523 = vunpack.c.l.b16 %v2475
        %v4524 = vunpack.c.l.b16 %v2476
        %v4525 = vunpack.c.l.b16 %v2477
        %v4526 = vunpack.c.l.b16 %v2478
        %v4527 = vunpack.c.l.b16 %v2479
        %v4528 = vunpack.c.l.b16 %v2480
        %v4529 = vunpack.c.l.b16 %v2481
        %v4530 = vunpack.c.l.b16 %v2482
        %v4531 = vunpack.c.l.b16 %v2483
        %v4532 = vunpack.c.l.b16 %v2484
        %v4533 = vunpack.c.l.b16 %v2485
        %v4534 = vunpack.c.l.b16 %v2486
        %v4535 = vunpack.c.l.b16 %v2487
        %v4536 = vunpack.c.l.b16 %v2488
        %v4537 = vunpack.c.l.b16 %v2489
        %v4538 = vunpack.c.l.b16 %v2490
        %v4539 = vunpack.c.l.b16 %v2491
        %v4540 = vunpack.c.l.b16 %v2492
        %v4541 = vunpack.c.l.b16 %v2493
        %v4542 = vunpack.c.l.b16 %v2494
        %v4543 = vunpack.c.l.b16 %v2495
        %v4544 = vunpack.c.l.b16 %v2496
        %v4545 = vunpack.c.l.b16 %v2497
        %v4546 = vunpack.c.l.b16 %v2498
        %v4547 = vunpack.c.l.b16 %v2499
        %v4548 = vunpack.c.l.b16 %v2500
        %v4549 = vunpack.c.l.b16 %v2501
        %v4550 = vunpack.c.l.b16 %v2502
        %v4551 = vunpack.c.l.b16 %v2503
        %v4552 = vunpack.c.l.b16 %v2504
        %v4553 = vunpack.c.l.b16 %v2505
        %v4554 = vunpack.c.l.b16 %v2506
        %v4555 = vunpack.c.l.b16 %v2507
        %v4556 = vunpack.c.l.b16 %v2508
        %v4557 = vunpack.c.l.b16 %v2509
        %v4558 = vunpack.c.l.b16 %v2510
        %v4559 = vunpack.c.l.b16 %v2511
        %v4560 = vunpack.c.l.b16 %v2512
        %v4561 = vunpack.c.l.b16 %v2513
        %v4562 = vunpack.c.l.b16 %v2514
        %v4563 = vunpack.c.l.b16 %v2515
        %v4564 = vunpack.c.l.b16 %v2516
        %v4565 = vunpack.c.l.b16 %v2517
        %v4566 = vunpack.c.l.b16 %v2518
        %v4567 = vunpack.c.l.b16 %v2519
        %v4568 = vunpack.c.l.b16 %v2520
        %v4569 = vunpack.c.l.b16 %v2521
        %v4570 = vunpack.c.l.b16 %v2522
        %v4571 = vunpack.c.l.b16 %v2523
        %v4572 = vunpack.c.l.b16 %v2524
        %v4573 = vunpack.c.l.b16 %v2525
        %v4574 = vunpack.c.l.b16 %v2526
        %v4575 = vunpack.c.l.b16 %v2527
        %v4576 = vunpack.c.l.b16 %v2528
        %v4577 = vunpack.c.l.b16 %v2529
        %v4578 = vunpack.c.l.b16 %v2530
        %v4579 = vunpack.c.l.b16 %v2531
        %v4580 = vunpack.c.l.b16 %v2532
        %v4581 = vunpack.c.l.b16 %v2533
        %v4582 = vunpack.c.l.b16 %v2534
        %v4583 = vunpack.c.l.b16 %v2535
        %v4584 = vunpack.c.l.b16 %v2536
        %v4585 = vunpack.c.l.b16 %v2537
        %v4586 = vunpack.c.l.b16 %v2538
        %v4587 = vunpack.c.l.b16 %v2539
        %v4588 = vunpack.c.l.b16 %v2540
        %v4589 = vunpack.c.l.b16 %v2541
        %v4590 = vunpack.c.l.b16 %v2542
        %v4591 = vunpack.c.l.b16 %v2543
        %v4592 = vunpack.c.l.b16 %v2544
        %v4593 = vunpack.c.l.b16 %v2545
        %v4594 = vunpack.c.l.b16 %v2546
        %v4595 = vunpack.c.l.b16 %v2547
        %v4596 = vunpack.c.l.b16 %v2548
        %v4597 = vunpack.c.l.b16 %v2549
        %v4598 = vunpack.c.l.b16 %v2550
        %v4599 = vunpack.c.l.b16 %v2551
        %v4600 = vunpack.c.l.b16 %v2552
        %v4601 = vunpack.c.l.b16 %v2553
        %v4602 = vunpack.c.l.b16 %v2554
        %v4603 = vunpack.c.l.b16 %v2555
        %v4604 = vunpack.c.l.b16 %v2556
        %v4605 = vunpack.c.l.b16 %v2557
        %v4606 = vunpack.c.l.b16 %v2558
        %v4607 = vunpack.c.l.b16 %v2559
        %v4608 = vunpack.c.l.b16 %v2560
        %v4609 = vunpack.c.l.b16 %v2561
        %v4610 = vunpack.c.l.b16 %v2562
        %v4611 = vunpack.c.l.b16 %v2563
        %v4612 = vunpack.c.l.b16 %v2564
        %v4613 = vunpack.c.l.b16 %v2565
        %v4614 = vunpack.c.l.b16 %v2566
        %v4615 = vunpack.c.l.b16 %v2567
        %v4616 = vunpack.c.l.b16 %v2568
        %v4617 = vunpack.c.l.b16 %v2569
        %v4618 = vunpack.c.l.b16 %v2570
        %v4619 = vunpack.c.l.b16 %v2571
        %v4620 = vunpack.c.l.b16 %v2572
        %v4621 = vunpack.c.l.b16 %v2573
        %v4622 = vunpack.c.l.b16 %v2574
        %v4623 = vunpack.c.l.b16 %v2575
        %v4624 = vunpack.c.l.b16 %v2576
        %v4625 = vunpack.c.l.b16 %v2577
        %v4626 = vunpack.c.l.b16 %v2578
        %v4627 = vunpack.c.l.b16 %v2579
        %v4628 = vunpack.c.l.b16 %v2580
        %v4629 = vunpack.c.l.b16 %v2581
        %v4630 = vunpack.c.l.b16 %v2582
        %v4631 = vunpack.c.l.b16 %v2583
        %v4632 = vunpack.c.l.b16 %v2584
        %v4633 = vunpack.c.l.b16 %v2585
        %v4634 = vunpack.c.l.b16 %v2586
        %v4635 = vunpack.c.l.b16 %v2587
        %v4636 = vunpack.c.l.b16 %v2588
        %v4637 = vunpack.c.l.b16 %v2589
        %v4638 = vunpack.c.l.b16 %v2590
        %v4639 = vunpack.c.l.b16 %v2591
        %v4640 = vunpack.c.l.b16 %v2592
        %v4641 = vunpack.c.l.b16 %v2593
        %v4642 = vunpack.c.l.b16 %v2594
        %v4643 = vunpack.c.l.b16 %v2595
        %v4644 = vunpack.c.l.b16 %v2596
        %v4645 = vunpack.c.l.b16 %v2597
        %v4646 = vunpack.c.l.b16 %v2598
        %v4647 = vunpack.c.l.b16 %v2599
        %v4648 = vunpack.c.l.b16 %v2600
        %v4649 = vunpack.c.l.b16 %v2601
        %v4650 = vunpack.c.l.b16 %v2602
        %v4651 = vunpack.c.l.b16 %v2603
        %v4652 = vunpack.c.l.b16 %v2604
        %v4653 = vunpack.c.l.b16 %v2605
        %v4654 = vunpack.c.l.b16 %v2606
        %v4655 = vunpack.c.l.b16 %v2607
        %v4656 = vunpack.c.l.b16 %v2608
        %v4657 = vunpack.c.l.b16 %v2609
        %v4658 = vunpack.c.l.b16 %v2610
        %v4659 = vunpack.c.l.b16 %v2611
        %v4660 = vunpack.c.l.b16 %v2612
        %v4661 = vunpack.c.l.b16 %v2613
        %v4662 = vunpack.c.l.b16 %v2614
        %v4663 = vunpack.c.l.b16 %v2615
        %v4664 = vunpack.c.l.b16 %v2616
        %v4665 = vunpack.c.l.b16 %v2617
        %v4666 = vunpack.c.l.b16 %v2618
        %v4667 = vunpack.c.l.b16 %v2619
        %v4668 = vunpack.c.l.b16 %v2620
        %v4669 = vunpack.c.l.b16 %v2621
        %v4670 = vunpack.c.l.b16 %v2622
        %v4671 = vunpack.c.l.b16 %v2623
        %v4672 = vunpack.c.l.b16 %v2624
        %v4673 = vunpack.c.l.b16 %v2625
        %v4674 = vunpack.c.l.b16 %v2626
        %v4675 = vunpack.c.l.b16 %v2627
        %v4676 = vunpack.c.l.b16 %v2628
        %v4677 = vunpack.c.l.b16 %v2629
        %v4678 = vunpack.c.l.b16 %v2630
        %v4679 = vunpack.c.l.b16 %v2631
        %v4680 = vunpack.c.l.b16 %v2632
        %v4681 = vunpack.c.l.b16 %v2633
        %v4682 = vunpack.c.l.b16 %v2634
        %v4683 = vunpack.c.l.b16 %v2635
        %v4684 = vunpack.c.l.b16 %v2636
        %v4685 = vunpack.c.l.b16 %v2637
        %v4686 = vunpack.c.l.b16 %v2638
        %v4687 = vunpack.c.l.b16 %v2639
        %v4688 = vunpack.c.l.b16 %v2640
        %v4689 = vunpack.c.l.b16 %v2641
        %v4690 = vunpack.c.l.b16 %v2642
        %v4691 = vunpack.c.l.b16 %v2643
        %v4692 = vunpack.c.l.b16 %v2644
        %v4693 = vunpack.c.l.b16 %v2645
        %v4694 = vunpack.c.l.b16 %v2646
        %v4695 = vunpack.c.l.b16 %v2647
        %v4696 = vunpack.c.l.b16 %v2648
        %v4697 = vunpack.c.l.b16 %v2649
        %v4698 = vunpack.c.l.b16 %v2650
        %v4699 = vunpack.c.l.b16 %v2651
        %v4700 = vunpack.c.l.b16 %v2652
        %v4701 = vunpack.c.l.b16 %v2653
        %v4702 = vunpack.c.l.b16 %v2654
        %v4703 = vunpack.c.l.b16 %v2655
        %v4704 = vunpack.c.l.b16 %v2656
        %v4705 = vunpack.c.l.b16 %v2657
        %v4706 = vunpack.c.l.b16 %v2658
        %v4707 = vunpack.c.l.b16 %v2659
        %v4708 = vunpack.c.l.b16 %v2660
        %v4709 = vunpack.c.l.b16 %v2661
        %v4710 = vunpack.c.l.b16 %v2662
        %v4711 = vunpack.c.l.b16 %v2663
        %v4712 = vunpack.c.l.b16 %v2664
        %v4713 = vunpack.c.l.b16 %v2665
        %v4714 = vunpack.c.l.b16 %v2666
        %v4715 = vunpack.c.l.b16 %v2667
        %v4716 = vunpack.c.l.b16 %v2668
        %v4717 = vunpack.c.l.b16 %v2669
        %v4718 = vunpack.c.l.b16 %v2670
        %v4719 = vunpack.c.l.b16 %v2671
        %v4720 = vunpack.c.l.b16 %v2672
        %v4721 = vunpack.c.l.b16 %v2673
        %v4722 = vunpack.c.l.b16 %v2674
        %v4723 = vunpack.c.l.b16 %v2675
        %v4724 = vunpack.c.l.b16 %v2676
        %v4725 = vunpack.c.l.b16 %v2677
        %v4726 = vunpack.c.l.b16 %v2678
        %v4727 = vunpack.c.l.b16 %v2679
        %v4728 = vunpack.c.l.b16 %v2680
        %v4729 = vunpack.c.l.b16 %v2681
        %v4730 = vunpack.c.l.b16 %v2682
        %v4731 = vunpack.c.l.b16 %v2683
        %v4732 = vunpack.c.l.b16 %v2684
        %v4733 = vunpack.c.l.b16 %v2685
        %v4734 = vunpack.c.l.b16 %v2686
        %v4735 = vunpack.c.l.b16 %v2687
        %v4736 = vunpack.c.l.b16 %v2688
        %v4737 = vunpack.c.l.b16 %v2689
        %v4738 = vunpack.c.l.b16 %v2690
        %v4739 = vunpack.c.l.b16 %v2691
        %v4740 = vunpack.c.l.b16 %v2692
        %v4741 = vunpack.c.l.b16 %v2693
        %v4742 = vunpack.c.l.b16 %v2694
        %v4743 = vunpack.c.l.b16 %v2695
        %v4744 = vunpack.c.l.b16 %v2696
        %v4745 = vunpack.c.l.b16 %v2697
        %v4746 = vunpack.c.l.b16 %v2698
        %v4747 = vunpack.c.l.b16 %v2699
        %v4748 = vunpack.c.l.b16 %v2700
        %v4749 = vunpack.c.l.b16 %v2701
        %v4750 = vunpack.c.l.b16 %v2702
        %v4751 = vunpack.c.l.b16 %v2703
        %v4752 = vunpack.c.l.b16 %v2704
        %v4753 = vunpack.c.l.b16 %v2705
        %v4754 = vunpack.c.l.b16 %v2706
        %v4755 = vunpack.c.l.b16 %v2707
        %v4756 = vunpack.c.l.b16 %v2708
        %v4757 = vunpack.c.l.b16 %v2709
        %v4758 = vunpack.c.l.b16 %v2710
        %v4759 = vunpack.c.l.b16 %v2711
        %v4760 = vunpack.c.l.b16 %v2712
        %v4761 = vunpack.c.l.b16 %v2713
        %v4762 = vunpack.c.l.b16 %v2714
        %v4763 = vunpack.c.l.b16 %v2715
        %v4764 = vunpack.c.l.b16 %v2716
        %v4765 = vunpack.c.l.b16 %v2717
        %v4766 = vunpack.c.l.b16 %v2718
        %v4767 = vunpack.c.l.b16 %v2719
        %v4768 = vunpack.c.l.b16 %v2720
        %v4769 = vunpack.c.l.b16 %v2721
        %v4770 = vunpack.c.l.b16 %v2722
        %v4771 = vunpack.c.l.b16 %v2723
        %v4772 = vunpack.c.l.b16 %v2724
        %v4773 = vunpack.c.l.b16 %v2725
        %v4774 = vunpack.c.l.b16 %v2726
        %v4775 = vunpack.c.l.b16 %v2727
        %v4776 = vunpack.c.l.b16 %v2728
        %v4777 = vunpack.c.l.b16 %v2729
        %v4778 = vunpack.c.l.b16 %v2730
        %v4779 = vunpack.c.l.b16 %v2731
        %v4780 = vunpack.c.l.b16 %v2732
        %v4781 = vunpack.c.l.b16 %v2733
        %v4782 = vunpack.c.l.b16 %v2734
        %v4783 = vunpack.c.l.b16 %v2735
        %v4784 = vunpack.c.l.b16 %v2736
        %v4785 = vunpack.c.l.b16 %v2737
        %v4786 = vunpack.c.l.b16 %v2738
        %v4787 = vunpack.c.l.b16 %v2739
        %v4788 = vunpack.c.l.b16 %v2740
        %v4789 = vunpack.c.l.b16 %v2741
        %v4790 = vunpack.c.l.b16 %v2742
        %v4791 = vunpack.c.l.b16 %v2743
        %v4792 = vunpack.c.l.b16 %v2744
        %v4793 = vunpack.c.l.b16 %v2745
        %v4794 = vunpack.c.l.b16 %v2746
        %v4795 = vunpack.c.l.b16 %v2747
        %v4796 = vunpack.c.l.b16 %v2748
        %v4797 = vunpack.c.l.b16 %v2749
        %v4798 = vunpack.c.l.b16 %v2750
        %v4799 = vunpack.c.l.b16 %v2751
        %v4800 = vunpack.c.l.b16 %v2752
        %v4801 = vunpack.c.l.b16 %v2753
        %v4802 = vunpack.c.l.b16 %v2754
        %v4803 = vunpack.c.l.b16 %v2755
        %v4804 = vunpack.c.l.b16 %v2756
        %v4805 = vunpack.c.l.b16 %v2757
        %v4806 = vunpack.c.l.b16 %v2758
        %v4807 = vunpack.c.l.b16 %v2759
        %v4808 = vunpack.c.l.b16 %v2760
        %v4809 = vunpack.c.l.b16 %v2761
        %v4810 = vunpack.c.l.b16 %v2762
        %v4811 = vunpack.c.l.b16 %v2763
        %v4812 = vunpack.c.l.b16 %v2764
        %v4813 = vunpack.c.l.b16 %v2765
        %v4814 = vunpack.c.l.b16 %v2766
        %v4815 = vunpack.c.l.b16 %v2767
        %v4816 = vunpack.c.l.b16 %v2768
        %v4817 = vunpack.c.l.b16 %v2769
        %v4818 = vunpack.c.l.b16 %v2770
        %v4819 = vunpack.c.l.b16 %v2771
        %v4820 = vunpack.c.l.b16 %v2772
        %v4821 = vunpack.c.l.b16 %v2773
        %v4822 = vunpack.c.l.b16 %v2774
        %v4823 = vunpack.c.l.b16 %v2775
        %v4824 = vunpack.c.l.b16 %v2776
        %v4825 = vunpack.c.l.b16 %v2777
        %v4826 = vunpack.c.l.b16 %v2778
        %v4827 = vunpack.c.l.b16 %v2779
        %v4828 = vunpack.c.l.b16 %v2780
        %v4829 = vunpack.c.l.b16 %v2781
        %v4830 = vunpack.c.l.b16 %v2782
        %v4831 = vunpack.c.l.b16 %v2783
        %v4832 = vunpack.c.l.b16 %v2784
        %v4833 = vunpack.c.l.b16 %v2785
        %v4834 = vunpack.c.l.b16 %v2786
        %v4835 = vunpack.c.l.b16 %v2787
        %v4836 = vunpack.c.l.b16 %v2788
        %v4837 = vunpack.c.l.b16 %v2789
        %v4838 = vunpack.c.l.b16 %v2790
        %v4839 = vunpack.c.l.b16 %v2791
        %v4840 = vunpack.c.l.b16 %v2792
        %v4841 = vunpack.c.l.b16 %v2793
        %v4842 = vunpack.c.l.b16 %v2794
        %v4843 = vunpack.c.l.b16 %v2795
        %v4844 = vunpack.c.l.b16 %v2796
        %v4845 = vunpack.c.l.b16 %v2797
        %v4846 = vunpack.c.l.b16 %v2798
        %v4847 = vunpack.c.l.b16 %v2799
        %v4848 = vunpack.c.l.b16 %v2800
        %v4849 = vunpack.c.l.b16 %v2801
        %v4850 = vunpack.c.l.b16 %v2802
        %v4851 = vunpack.c.l.b16 %v2803
        %v4852 = vunpack.c.l.b16 %v2804
        %v4853 = vunpack.c.l.b16 %v2805
        %v4854 = vunpack.c.l.b16 %v2806
        %v4855 = vunpack.c.l.b16 %v2807
        %v4856 = vunpack.c.l.b16 %v2808
        %v4857 = vunpack.c.l.b16 %v2809
        %v4858 = vunpack.c.l.b16 %v2810
        %v4859 = vunpack.c.l.b16 %v2811
        %v4860 = vunpack.c.l.b16 %v2812
        %v4861 = vunpack.c.l.b16 %v2813
        %v4862 = vunpack.c.l.b16 %v2814
        %v4863 = vunpack.c.l.b16 %v2815
        %v4864 = vunpack.c.l.b16 %v2816
        %v4865 = vunpack.c.l.b16 %v2817
        %v4866 = vunpack.c.l.b16 %v2818
        %v4867 = vunpack.c.l.b16 %v2819
        %v4868 = vunpack.c.l.b16 %v2820
        %v4869 = vunpack.c.l.b16 %v2821
        %v4870 = vunpack.c.l.b16 %v2822
        %v4871 = vunpack.c.l.b16 %v2823
        %v4872 = vunpack.c.l.b16 %v2824
        %v4873 = vunpack.c.l.b16 %v2825
        %v4874 = vunpack.c.l.b16 %v2826
        %v4875 = vunpack.c.l.b16 %v2827
        %v4876 = vunpack.c.l.b16 %v2828
        %v4877 = vunpack.c.l.b16 %v2829
        %v4878 = vunpack.c.l.b16 %v2830
        %v4879 = vunpack.c.l.b16 %v2831
        %v4880 = vunpack.c.l.b16 %v2832
        %v4881 = vunpack.c.l.b16 %v2833
        %v4882 = vunpack.c.l.b16 %v2834
        %v4883 = vunpack.c.l.b16 %v2835
        %v4884 = vunpack.c.l.b16 %v2836
        %v4885 = vunpack.c.l.b16 %v2837
        %v4886 = vunpack.c.l.b16 %v2838
        %v4887 = vunpack.c.l.b16 %v2839
        %v4888 = vunpack.c.l.b16 %v2840
        %v4889 = vunpack.c.l.b16 %v2841
        %v4890 = vunpack.c.l.b16 %v2842
        %v4891 = vunpack.c.l.b16 %v2843
        %v4892 = vunpack.c.l.b16 %v2844
        %v4893 = vunpack.c.l.b16 %v2845
        %v4894 = vunpack.c.l.b16 %v2846
        %v4895 = vunpack.c.l.b16 %v2847
        %v4896 = vunpack.c.l.b16 %v2848
        %v4897 = vunpack.c.l.b16 %v2849
        %v4898 = vunpack.c.l.b16 %v2850
        %v4899 = vunpack.c.l.b16 %v2851
        %v4900 = vunpack.c.l.b16 %v2852
        %v4901 = vunpack.c.l.b16 %v2853
        %v4902 = vunpack.c.l.b16 %v2854
        %v4903 = vunpack.c.l.b16 %v2855
        %v4904 = vunpack.c.l.b16 %v2856
        %v4905 = vunpack.c.l.b16 %v2857
        %v4906 = vunpack.c.l.b16 %v2858
        %v4907 = vunpack.c.l.b16 %v2859
        %v4908 = vunpack.c.l.b16 %v2860
        %v4909 = vunpack.c.l.b16 %v2861
        %v4910 = vunpack.c.l.b16 %v2862
        %v4911 = vunpack.c.l.b16 %v2863
        %v4912 = vunpack.c.l.b16 %v2864
        %v4913 = vunpack.c.l.b16 %v2865
        %v4914 = vunpack.c.l.b16 %v2866
        %v4915 = vunpack.c.l.b16 %v2867
        %v4916 = vunpack.c.l.b16 %v2868
        %v4917 = vunpack.c.l.b16 %v2869
        %v4918 = vunpack.c.l.b16 %v2870
        %v4919 = vunpack.c.l.b16 %v2871
        %v4920 = vunpack.c.l.b16 %v2872
        %v4921 = vunpack.c.l.b16 %v2873
        %v4922 = vunpack.c.l.b16 %v2874
        %v4923 = vunpack.c.l.b16 %v2875
        %v4924 = vunpack.c.l.b16 %v2876
        %v4925 = vunpack.c.l.b16 %v2877
        %v4926 = vunpack.c.l.b16 %v2878
        %v4927 = vunpack.c.l.b16 %v2879
        %v4928 = vunpack.c.l.b16 %v2880
        %v4929 = vunpack.c.l.b16 %v2881
        %v4930 = vunpack.c.l.b16 %v2882
        %v4931 = vunpack.c.l.b16 %v2883
        %v4932 = vunpack.c.l.b16 %v2884
        %v4933 = vunpack.c.l.b16 %v2885
        %v4934 = vunpack.c.l.b16 %v2886
        %v4935 = vunpack.c.l.b16 %v2887
        %v4936 = vunpack.c.l.b16 %v2888
        %v4937 = vunpack.c.l.b16 %v2889
        %v4938 = vunpack.c.l.b16 %v2890
        %v4939 = vunpack.c.l.b16 %v2891
        %v4940 = vunpack.c.l.b16 %v2892
        %v4941 = vunpack.c.l.b16 %v2893
        %v4942 = vunpack.c.l.b16 %v2894
        %v4943 = vunpack.c.l.b16 %v2895
        %v4944 = vunpack.c.l.b16 %v2896
        %v4945 = vunpack.c.l.b16 %v2897
        %v4946 = vunpack.c.l.b16 %v2898
        %v4947 = vunpack.c.l.b16 %v2899
        %v4948 = vunpack.c.l.b16 %v2900
        %v4949 = vunpack.c.l.b16 %v2901
        %v4950 = vunpack.c.l.b16 %v2902
        %v4951 = vunpack.c.l.b16 %v2903
        %v4952 = vunpack.c.l.b16 %v2904
        %v4953 = vunpack.c.l.b16 %v2905
        %v4954 = vunpack.c.l.b16 %v2906
        %v4955 = vunpack.c.l.b16 %v2907
        %v4956 = vunpack.c.l.b16 %v2908
        %v4957 = vunpack.c.l.b16 %v2909
        %v4958 = vunpack.c.l.b16 %v2910
        %v4959 = vunpack.c.l.b16 %v2911
        %v4960 = vunpack.c.l.b16 %v2912
        %v4961 = vunpack.c.l.b16 %v2913
        %v4962 = vunpack.c.l.b16 %v2914
        %v4963 = vunpack.c.l.b16 %v2915
        %v4964 = vunpack.c.l.b16 %v2916
        %v4965 = vunpack.c.l.b16 %v2917
        %v4966 = vunpack.c.l.b16 %v2918
        %v4967 = vunpack.c.l.b16 %v2919
        %v4968 = vunpack.c.l.b16 %v2920
        %v4969 = vunpack.c.l.b16 %v2921
        %v4970 = vunpack.c.l.b16 %v2922
        %v4971 = vunpack.c.l.b16 %v2923
        %v4972 = vunpack.c.l.b16 %v2924
        %v4973 = vunpack.c.l.b16 %v2925
        %v4974 = vunpack.c.l.b16 %v2926
        %v4975 = vunpack.c.l.b16 %v2927
        %v4976 = vunpack.c.l.b16 %v2928
        %v4977 = vunpack.c.l.b16 %v2929
        %v4978 = vunpack.c.l.b16 %v2930
        %v4979 = vunpack.c.l.b16 %v2931
        %v4980 = vunpack.c.l.b16 %v2932
        %v4981 = vunpack.c.l.b16 %v2933
        %v4982 = vunpack.c.l.b16 %v2934
        %v4983 = vunpack.c.l.b16 %v2935
        %v4984 = vunpack.c.l.b16 %v2936
        %v4985 = vunpack.c.l.b16 %v2937
        %v4986 = vunpack.c.l.b16 %v2938
        %v4987 = vunpack.c.l.b16 %v2939
        %v4988 = vunpack.c.l.b16 %v2940
        %v4989 = vunpack.c.l.b16 %v2941
        %v4990 = vunpack.c.l.b16 %v2942
        %v4991 = vunpack.c.l.b16 %v2943
        %v4992 = vunpack.c.l.b16 %v2944
        %v4993 = vunpack.c.l.b16 %v2945
        %v4994 = vunpack.c.l.b16 %v2946
        %v4995 = vunpack.c.l.b16 %v2947
        %v4996 = vunpack.c.l.b16 %v2948
        %v4997 = vunpack.c.l.b16 %v2949
        %v4998 = vunpack.c.l.b16 %v2950
        %v4999 = vunpack.c.l.b16 %v2951
        %v5000 = vunpack.c.l.b16 %v2952
        %v5001 = vunpack.c.l.b16 %v2953
        %v5002 = vunpack.c.l.b16 %v2954
        %v5003 = vunpack.c.l.b16 %v2955
        %v5004 = vunpack.c.l.b16 %v2956
        %v5005 = vunpack.c.l.b16 %v2957
        %v5006 = vunpack.c.l.b16 %v2958
        %v5007 = vunpack.c.l.b16 %v2959
        %v5008 = vunpack.c.l.b16 %v2960
        %v5009 = vunpack.c.l.b16 %v2961
        %v5010 = vunpack.c.l.b16 %v2962
        %v5011 = vunpack.c.l.b16 %v2963
        %v5012 = vunpack.c.l.b16 %v2964
        %v5013 = vunpack.c.l.b16 %v2965
        %v5014 = vunpack.c.l.b16 %v2966
        %v5015 = vunpack.c.l.b16 %v2967
        %v5016 = vunpack.c.l.b16 %v2968
        %v5017 = vunpack.c.l.b16 %v2969
        %v5018 = vunpack.c.l.b16 %v2970
        %v5019 = vunpack.c.l.b16 %v2971
        %v5020 = vunpack.c.l.b16 %v2972
        %v5021 = vunpack.c.l.b16 %v2973
        %v5022 = vunpack.c.l.b16 %v2974
        %v5023 = vunpack.c.l.b16 %v2975
        %v5024 = vunpack.c.l.b16 %v2976
        %v5025 = vunpack.c.l.b16 %v2977
        %v5026 = vunpack.c.l.b16 %v2978
        %v5027 = vunpack.c.l.b16 %v2979
        %v5028 = vunpack.c.l.b16 %v2980
        %v5029 = vunpack.c.l.b16 %v2981
        %v5030 = vunpack.c.l.b16 %v2982
        %v5031 = vunpack.c.l.b16 %v2983
        %v5032 = vunpack.c.l.b16 %v2984
        %v5033 = vunpack.c.l.b16 %v2985
        %v5034 = vunpack.c.l.b16 %v2986
        %v5035 = vunpack.c.l.b16 %v2987
        %v5036 = vunpack.c.l.b16 %v2988
        %v5037 = vunpack.c.l.b16 %v2989
        %v5038 = vunpack.c.l.b16 %v2990
        %v5039 = vunpack.c.l.b16 %v2991
        %v5040 = vunpack.c.l.b16 %v2992
        %v5041 = vunpack.c.l.b16 %v2993
        %v5042 = vunpack.c.l.b16 %v2994
        %v5043 = vunpack.c.l.b16 %v2995
        %v5044 = vunpack.c.l.b16 %v2996
        %v5045 = vunpack.c.l.b16 %v2997
        %v5046 = vunpack.c.l.b16 %v2998
        %v5047 = vunpack.c.l.b16 %v2999
        %v5048 = vunpack.c.l.b16 %v3000
        %v5049 = vunpack.c.l.b16 %v3001
        %v5050 = vunpack.c.l.b16 %v3002
        %v5051 = vunpack.c.l.b16 %v3003
        %v5052 = vunpack.c.l.b16 %v3004
        %v5053 = vunpack.c.l.b16 %v3005
        %v5054 = vunpack.c.l.b16 %v3006
        %v5055 = vunpack.c.l.b16 %v3007
        %v5056 = vunpack.c.l.b16 %v3008
        %v5057 = vunpack.c.l.b16 %v3009
        %v5058 = vunpack.c.l.b16 %v3010
        %v5059 = vunpack.c.l.b16 %v3011
        %v5060 = vunpack.c.l.b16 %v3012
        %v5061 = vunpack.c.l.b16 %v3013
        %v5062 = vunpack.c.l.b16 %v3014
        %v5063 = vunpack.c.l.b16 %v3015
        %v5064 = vunpack.c.l.b16 %v3016
        %v5065 = vunpack.c.l.b16 %v3017
        %v5066 = vunpack.c.l.b16 %v3018
        %v5067 = vunpack.c.l.b16 %v3019
        %v5068 = vunpack.c.l.b16 %v3020
        %v5069 = vunpack.c.l.b16 %v3021
        %v5070 = vunpack.c.l.b16 %v3022
        %v5071 = vunpack.c.l.b16 %v3023
        %v5072 = vunpack.c.l.b16 %v3024
        %v5073 = vunpack.c.l.b16 %v3025
        %v5074 = vunpack.c.l.b16 %v3026
        %v5075 = vunpack.c.l.b16 %v3027
        %v5076 = vunpack.c.l.b16 %v3028
        %v5077 = vunpack.c.l.b16 %v3029
        %v5078 = vunpack.c.l.b16 %v3030
        %v5079 = vunpack.c.l.b16 %v3031
        %v5080 = vunpack.c.l.b16 %v3032
        %v5081 = vunpack.c.l.b16 %v3033
        %v5082 = vunpack.c.l.b16 %v3034
        %v5083 = vunpack.c.l.b16 %v3035
        %v5084 = vunpack.c.l.b16 %v3036
        %v5085 = vunpack.c.l.b16 %v3037
        %v5086 = vunpack.c.l.b16 %v3038
        %v5087 = vunpack.c.l.b16 %v3039
        %v5088 = vunpack.c.l.b16 %v3040
        %v5089 = vunpack.c.l.b16 %v3041
        %v5090 = vunpack.c.l.b16 %v3042
        %v5091 = vunpack.c.l.b16 %v3043
        %v5092 = vunpack.c.l.b16 %v3044
        %v5093 = vunpack.c.l.b16 %v3045
        %v5094 = vunpack.c.l.b16 %v3046
        %v5095 = vunpack.c.l.b16 %v3047
        %v5096 = vunpack.c.l.b16 %v3048
        %v5097 = vunpack.c.l.b16 %v3049
        %v5098 = vunpack.c.l.b16 %v3050
        %v5099 = vunpack.c.l.b16 %v3051
        %v5100 = vunpack.c.l.b16 %v3052
        %v5101 = vunpack.c.l.b16 %v3053
        %v5102 = vunpack.c.l.b16 %v3054
        %v5103 = vunpack.c.l.b16 %v3055
        %v5104 = vunpack.c.l.b16 %v3056
        %v5105 = vunpack.c.l.b16 %v3057
        %v5106 = vunpack.c.l.b16 %v3058
        %v5107 = vunpack.c.l.b16 %v3059
        %v5108 = vunpack.c.l.b16 %v3060
        %v5109 = vunpack.c.l.b16 %v3061
        %v5110 = vunpack.c.l.b16 %v3062
        %v5111 = vunpack.c.l.b16 %v3063
        %v5112 = vunpack.c.l.b16 %v3064
        %v5113 = vunpack.c.l.b16 %v3065
        %v5114 = vunpack.c.l.b16 %v3066
        %v5115 = vunpack.c.l.b16 %v3067
        %v5116 = vunpack.c.l.b16 %v3068
        %v5117 = vunpack.c.l.b16 %v3069
        %v5118 = vunpack.c.l.b16 %v3070
        %v5119 = vunpack.c.l.b16 %v3071
        %v5120 = vunpack.c.l.b16 %v3072
        %v5121 = vunpack.c.l.b16 %v3073
        %v5122 = vunpack.c.l.b16 %v3074
        %v5123 = vunpack.c.l.b16 %v3075
        %v5124 = vunpack.c.l.b16 %v3076
        %v5125 = vunpack.c.l.b16 %v3077
        %v5126 = vunpack.c.l.b16 %v3078
        %v5127 = vunpack.c.l.b16 %v3079
        %v5128 = vunpack.c.l.b16 %v3080
        %v5129 = vunpack.c.l.b16 %v3081
        %v5130 = vunpack.c.l.b16 %v3082
        %v5131 = vunpack.c.l.b16 %v3083
        %v5132 = vunpack.c.l.b16 %v3084
        %v5133 = vunpack.c.l.b16 %v3085
        %v5134 = vunpack.c.l.b16 %v3086
        %v5135 = vunpack.c.l.b16 %v3087
        %v5136 = vunpack.c.l.b16 %v3088
        %v5137 = vunpack.c.l.b16 %v3089
        %v5138 = vunpack.c.l.b16 %v3090
        %v5139 = vunpack.c.l.b16 %v3091
        %v5140 = vunpack.c.l.b16 %v3092
        %v5141 = vunpack.c.l.b16 %v3093
        %v5142 = vunpack.c.l.b16 %v3094
        %v5143 = vunpack.c.l.b16 %v3095
        %v5144 = vunpack.c.l.b16 %v3096
        %v5145 = vunpack.c.l.b16 %v3097
        %v5146 = vunpack.c.l.b16 %v3098
        %v5147 = vunpack.c.l.b16 %v3099
        %v5148 = vunpack.c.l.b16 %v3100
        %v5149 = vunpack.c.l.b16 %v3101
        %v5150 = vunpack.c.l.b16 %v3102
        %v5151 = vunpack.c.l.b16 %v3103
        %v5152 = vunpack.c.l.b16 %v3104
        %v5153 = vunpack.c.l.b16 %v3105
        %v5154 = vunpack.c.l.b16 %v3106
        %v5155 = vunpack.c.l.b16 %v3107
        %v5156 = vunpack.c.l.b16 %v3108
        %v5157 = vunpack.c.l.b16 %v3109
        %v5158 = vunpack.c.l.b16 %v3110
        %v5159 = vunpack.c.l.b16 %v3111
        %v5160 = vunpack.c.l.b16 %v3112
        %v5161 = vunpack.c.l.b16 %v3113
        %v5162 = vunpack.c.l.b16 %v3114
        %v5163 = vunpack.c.l.b16 %v3115
        %v5164 = vunpack.c.l.b16 %v3116
        %v5165 = vunpack.c.l.b16 %v3117
        %v5166 = vunpack.c.l.b16 %v3118
        %v5167 = vunpack.c.l.b16 %v3119
        %v5168 = vunpack.c.l.b16 %v3120
        %v5169 = vunpack.c.l.b16 %v3121
        %v5170 = vunpack.c.l.b16 %v3122
        %v5171 = vunpack.c.l.b16 %v3123
        %v5172 = vunpack.c.l.b16 %v3124
        %v5173 = vunpack.c.l.b16 %v3125
        %v5174 = vunpack.c.l.b16 %v3126
        %v5175 = vunpack.c.l.b16 %v3127
        %v5176 = vunpack.c.l.b16 %v3128
        %v5177 = vunpack.c.l.b16 %v3129
        %v5178 = vunpack.c.l.b16 %v3130
        %v5179 = vunpack.c.l.b16 %v3131
        %v5180 = vunpack.c.l.b16 %v3132
        %v5181 = vunpack.c.l.b16 %v3133
        %v5182 = vunpack.c.l.b16 %v3134
        %v5183 = vunpack.c.l.b16 %v3135
        %v5184 = vunpack.c.l.b16 %v3136
        %v5185 = vunpack.c.l.b16 %v3137
        %v5186 = vunpack.c.l.b16 %v3138
        %v5187 = vunpack.c.l.b16 %v3139
        %v5188 = vunpack.c.l.b16 %v3140
        %v5189 = vunpack.c.l.b16 %v3141
        %v5190 = vunpack.c.l.b16 %v3142
        %v5191 = vunpack.c.l.b16 %v3143
        %v5192 = vunpack.c.l.b16 %v3144
        %v5193 = vunpack.c.l.b16 %v3145
        %v5194 = vunpack.c.l.b16 %v3146
        %v5195 = vunpack.c.l.b16 %v3147
        %v5196 = vunpack.c.l.b16 %v3148
        %v5197 = vunpack.c.l.b16 %v3149
        %v5198 = vunpack.c.l.b16 %v3150
        %v5199 = vunpack.c.l.b16 %v3151
        %v5200 = vunpack.c.l.b16 %v3152
        %v5201 = vunpack.c.l.b16 %v3153
        %v5202 = vunpack.c.l.b16 %v3154
        %v5203 = vunpack.c.l.b16 %v3155
        %v5204 = vunpack.c.l.b16 %v3156
        %v5205 = vunpack.c.l.b16 %v3157
        %v5206 = vunpack.c.l.b16 %v3158
        %v5207 = vunpack.c.l.b16 %v3159
        %v5208 = vunpack.c.l.b16 %v3160
        %v5209 = vunpack.c.l.b16 %v3161
        %v5210 = vunpack.c.l.b16 %v3162
        %v5211 = vunpack.c.l.b16 %v3163
        %v5212 = vunpack.c.l.b16 %v3164
        %v5213 = vunpack.c.l.b16 %v3165
        %v5214 = vunpack.c.l.b16 %v3166
        %v5215 = vunpack.c.l.b16 %v3167
        %v5216 = vunpack.c.l.b16 %v3168
        %v5217 = vunpack.c.l.b16 %v3169
        %v5218 = vunpack.c.l.b16 %v3170
        %v5219 = vunpack.c.l.b16 %v3171
        %v5220 = vunpack.c.l.b16 %v3172
        %v5221 = vunpack.c.l.b16 %v3173
        %v5222 = vunpack.c.l.b16 %v3174
        %v5223 = vunpack.c.l.b16 %v3175
        %v5224 = vunpack.c.l.b16 %v3176
        %v5225 = vpack.c.b16 %v4202, %v4201
        %v5226 = vpack.c.b16 %v4204, %v4203
        %v5227 = vpack.c.b16 %v4206, %v4205
        %v5228 = vpack.c.b16 %v4208, %v4207
        %v5229 = vpack.c.b16 %v4210, %v4209
        %v5230 = vpack.c.b16 %v4212, %v4211
        %v5231 = vpack.c.b16 %v4214, %v4213
        %v5232 = vpack.c.b16 %v4216, %v4215
        %v5233 = vpack.c.b16 %v4218, %v4217
        %v5234 = vpack.c.b16 %v4220, %v4219
        %v5235 = vpack.c.b16 %v4222, %v4221
        %v5236 = vpack.c.b16 %v4224, %v4223
        %v5237 = vpack.c.b16 %v4226, %v4225
        %v5238 = vpack.c.b16 %v4228, %v4227
        %v5239 = vpack.c.b16 %v4230, %v4229
        %v5240 = vpack.c.b16 %v4232, %v4231
        %v5241 = vpack.c.b16 %v4234, %v4233
        %v5242 = vpack.c.b16 %v4236, %v4235
        %v5243 = vpack.c.b16 %v4238, %v4237
        %v5244 = vpack.c.b16 %v4240, %v4239
        %v5245 = vpack.c.b16 %v4242, %v4241
        %v5246 = vpack.c.b16 %v4244, %v4243
        %v5247 = vpack.c.b16 %v4246, %v4245
        %v5248 = vpack.c.b16 %v4248, %v4247
        %v5249 = vpack.c.b16 %v4250, %v4249
        %v5250 = vpack.c.b16 %v4252, %v4251
        %v5251 = vpack.c.b16 %v4254, %v4253
        %v5252 = vpack.c.b16 %v4256, %v4255
        %v5253 = vpack.c.b16 %v4258, %v4257
        %v5254 = vpack.c.b16 %v4260, %v4259
        %v5255 = vpack.c.b16 %v4262, %v4261
        %v5256 = vpack.c.b16 %v4264, %v4263
        %v5257 = vpack.c.b16 %v4266, %v4265
        %v5258 = vpack.c.b16 %v4268, %v4267
        %v5259 = vpack.c.b16 %v4270, %v4269
        %v5260 = vpack.c.b16 %v4272, %v4271
        %v5261 = vpack.c.b16 %v4274, %v4273
        %v5262 = vpack.c.b16 %v4276, %v4275
        %v5263 = vpack.c.b16 %v4278, %v4277
        %v5264 = vpack.c.b16 %v4280, %v4279
        %v5265 = vpack.c.b16 %v4282, %v4281
        %v5266 = vpack.c.b16 %v4284, %v4283
        %v5267 = vpack.c.b16 %v4286, %v4285
        %v5268 = vpack.c.b16 %v4288, %v4287
        %v5269 = vpack.c.b16 %v4290, %v4289
        %v5270 = vpack.c.b16 %v4292, %v4291
        %v5271 = vpack.c.b16 %v4294, %v4293
        %v5272 = vpack.c.b16 %v4296, %v4295
        %v5273 = vpack.c.b16 %v4298, %v4297
        %v5274 = vpack.c.b16 %v4300, %v4299
        %v5275 = vpack.c.b16 %v4302, %v4301
        %v5276 = vpack.c.b16 %v4304, %v4303
        %v5277 = vpack.c.b16 %v4306, %v4305
        %v5278 = vpack.c.b16 %v4308, %v4307
        %v5279 = vpack.c.b16 %v4310, %v4309
        %v5280 = vpack.c.b16 %v4312, %v4311
        %v5281 = vpack.c.b16 %v4314, %v4313
        %v5282 = vpack.c.b16 %v4316, %v4315
        %v5283 = vpack.c.b16 %v4318, %v4317
        %v5284 = vpack.c.b16 %v4320, %v4319
        %v5285 = vpack.c.b16 %v4322, %v4321
        %v5286 = vpack.c.b16 %v4324, %v4323
        %v5287 = vpack.c.b16 %v4326, %v4325
        %v5288 = vpack.c.b16 %v4328, %v4327
        %v5289 = vpack.c.b16 %v4330, %v4329
        %v5290 = vpack.c.b16 %v4332, %v4331
        %v5291 = vpack.c.b16 %v4334, %v4333
        %v5292 = vpack.c.b16 %v4336, %v4335
        %v5293 = vpack.c.b16 %v4338, %v4337
        %v5294 = vpack.c.b16 %v4340, %v4339
        %v5295 = vpack.c.b16 %v4342, %v4341
        %v5296 = vpack.c.b16 %v4344, %v4343
        %v5297 = vpack.c.b16 %v4346, %v4345
        %v5298 = vpack.c.b16 %v4348, %v4347
        %v5299 = vpack.c.b16 %v4350, %v4349
        %v5300 = vpack.c.b16 %v4352, %v4351
        %v5301 = vpack.c.b16 %v4354, %v4353
        %v5302 = vpack.c.b16 %v4356, %v4355
        %v5303 = vpack.c.b16 %v4358, %v4357
        %v5304 = vpack.c.b16 %v4360, %v4359
        %v5305 = vpack.c.b16 %v4362, %v4361
        %v5306 = vpack.c.b16 %v4364, %v4363
        %v5307 = vpack.c.b16 %v4366, %v4365
        %v5308 = vpack.c.b16 %v4368, %v4367
        %v5309 = vpack.c.b16 %v4370, %v4369
        %v5310 = vpack.c.b16 %v4372, %v4371
        %v5311 = vpack.c.b16 %v4374, %v4373
        %v5312 = vpack.c.b16 %v4376, %v4375
        %v5313 = vpack.c.b16 %v4378, %v4377
        %v5314 = vpack.c.b16 %v4380, %v4379
        %v5315 = vpack.c.b16 %v4382, %v4381
        %v5316 = vpack.c.b16 %v4384, %v4383
        %v5317 = vpack.c.b16 %v4386, %v4385
        %v5318 = vpack.c.b16 %v4388, %v4387
        %v5319 = vpack.c.b16 %v4390, %v4389
        %v5320 = vpack.c.b16 %v4392, %v4391
        %v5321 = vpack.c.b16 %v4394, %v4393
        %v5322 = vpack.c.b16 %v4396, %v4395
        %v5323 = vpack.c.b16 %v4398, %v4397
        %v5324 = vpack.c.b16 %v4400, %v4399
        %v5325 = vpack.c.b16 %v4402, %v4401
        %v5326 = vpack.c.b16 %v4404, %v4403
        %v5327 = vpack.c.b16 %v4406, %v4405
        %v5328 = vpack.c.b16 %v4408, %v4407
        %v5329 = vpack.c.b16 %v4410, %v4409
        %v5330 = vpack.c.b16 %v4412, %v4411
        %v5331 = vpack.c.b16 %v4414, %v4413
        %v5332 = vpack.c.b16 %v4416, %v4415
        %v5333 = vpack.c.b16 %v4418, %v4417
        %v5334 = vpack.c.b16 %v4420, %v4419
        %v5335 = vpack.c.b16 %v4422, %v4421
        %v5336 = vpack.c.b16 %v4424, %v4423
        %v5337 = vpack.c.b16 %v4426, %v4425
        %v5338 = vpack.c.b16 %v4428, %v4427
        %v5339 = vpack.c.b16 %v4430, %v4429
        %v5340 = vpack.c.b16 %v4432, %v4431
        %v5341 = vpack.c.b16 %v4434, %v4433
        %v5342 = vpack.c.b16 %v4436, %v4435
        %v5343 = vpack.c.b16 %v4438, %v4437
        %v5344 = vpack.c.b16 %v4440, %v4439
        %v5345 = vpack.c.b16 %v4442, %v4441
        %v5346 = vpack.c.b16 %v4444, %v4443
        %v5347 = vpack.c.b16 %v4446, %v4445
        %v5348 = vpack.c.b16 %v4448, %v4447
        %v5349 = vpack.c.b16 %v4450, %v4449
        %v5350 = vpack.c.b16 %v4452, %v4451
        %v5351 = vpack.c.b16 %v4454, %v4453
        %v5352 = vpack.c.b16 %v4456, %v4455
        %v5353 = vpack.c.b16 %v4458, %v4457
        %v5354 = vpack.c.b16 %v4460, %v4459
        %v5355 = vpack.c.b16 %v4462, %v4461
        %v5356 = vpack.c.b16 %v4464, %v4463
        %v5357 = vpack.c.b16 %v4466, %v4465
        %v5358 = vpack.c.b16 %v4468, %v4467
        %v5359 = vpack.c.b16 %v4470, %v4469
        %v5360 = vpack.c.b16 %v4472, %v4471
        %v5361 = vpack.c.b16 %v4474, %v4473
        %v5362 = vpack.c.b16 %v4476, %v4475
        %v5363 = vpack.c.b16 %v4478, %v4477
        %v5364 = vpack.c.b16 %v4480, %v4479
        %v5365 = vpack.c.b16 %v4482, %v4481
        %v5366 = vpack.c.b16 %v4484, %v4483
        %v5367 = vpack.c.b16 %v4486, %v4485
        %v5368 = vpack.c.b16 %v4488, %v4487
        %v5369 = vpack.c.b16 %v4490, %v4489
        %v5370 = vpack.c.b16 %v4492, %v4491
        %v5371 = vpack.c.b16 %v4494, %v4493
        %v5372 = vpack.c.b16 %v4496, %v4495
        %v5373 = vpack.c.b16 %v4498, %v4497
        %v5374 = vpack.c.b16 %v4500, %v4499
        %v5375 = vpack.c.b16 %v4502, %v4501
        %v5376 = vpack.c.b16 %v4504, %v4503
        %v5377 = vpack.c.b16 %v4506, %v4505
        %v5378 = vpack.c.b16 %v4508, %v4507
        %v5379 = vpack.c.b16 %v4510, %v4509
        %v5380 = vpack.c.b16 %v4512, %v4511
        %v5381 = vpack.c.b16 %v4514, %v4513
        %v5382 = vpack.c.b16 %v4516, %v4515
        %v5383 = vpack.c.b16 %v4518, %v4517
        %v5384 = vpack.c.b16 %v4520, %v4519
        %v5385 = vpack.c.b16 %v4522, %v4521
        %v5386 = vpack.c.b16 %v4524, %v4523
        %v5387 = vpack.c.b16 %v4526, %v4525
        %v5388 = vpack.c.b16 %v4528, %v4527
        %v5389 = vpack.c.b16 %v4530, %v4529
        %v5390 = vpack.c.b16 %v4532, %v4531
        %v5391 = vpack.c.b16 %v4534, %v4533
        %v5392 = vpack.c.b16 %v4536, %v4535
        %v5393 = vpack.c.b16 %v4538, %v4537
        %v5394 = vpack.c.b16 %v4540, %v4539
        %v5395 = vpack.c.b16 %v4542, %v4541
        %v5396 = vpack.c.b16 %v4544, %v4543
        %v5397 = vpack.c.b16 %v4546, %v4545
        %v5398 = vpack.c.b16 %v4548, %v4547
        %v5399 = vpack.c.b16 %v4550, %v4549
        %v5400 = vpack.c.b16 %v4552, %v4551
        %v5401 = vpack.c.b16 %v4554, %v4553
        %v5402 = vpack.c.b16 %v4556, %v4555
        %v5403 = vpack.c.b16 %v4558, %v4557
        %v5404 = vpack.c.b16 %v4560, %v4559
        %v5405 = vpack.c.b16 %v4562, %v4561
        %v5406 = vpack.c.b16 %v4564, %v4563
        %v5407 = vpack.c.b16 %v4566, %v4565
        %v5408 = vpack.c.b16 %v4568, %v4567
        %v5409 = vpack.c.b16 %v4570, %v4569
        %v5410 = vpack.c.b16 %v4572, %v4571
        %v5411 = vpack.c.b16 %v4574, %v4573
        %v5412 = vpack.c.b16 %v4576, %v4575
        %v5413 = vpack.c.b16 %v4578, %v4577
        %v5414 = vpack.c.b16 %v4580, %v4579
        %v5415 = vpack.c.b16 %v4582, %v4581
        %v5416 = vpack.c.b16 %v4584, %v4583
        %v5417 = vpack.c.b16 %v4586, %v4585
        %v5418 = vpack.c.b16 %v4588, %v4587
        %v5419 = vpack.c.b16 %v4590, %v4589
        %v5420 = vpack.c.b16 %v4592, %v4591
        %v5421 = vpack.c.b16 %v4594, %v4593
        %v5422 = vpack.c.b16 %v4596, %v4595
        %v5423 = vpack.c.b16 %v4598, %v4597
        %v5424 = vpack.c.b16 %v4600, %v4599
        %v5425 = vpack.c.b16 %v4602, %v4601
        %v5426 = vpack.c.b16 %v4604, %v4603
        %v5427 = vpack.c.b16 %v4606, %v4605
        %v5428 = vpack.c.b16 %v4608, %v4607
        %v5429 = vpack.c.b16 %v4610, %v4609
        %v5430 = vpack.c.b16 %v4612, %v4611
        %v5431 = vpack.c.b16 %v4614, %v4613
        %v5432 = vpack.c.b16 %v4616, %v4615
        %v5433 = vpack.c.b16 %v4618, %v4617
        %v5434 = vpack.c.b16 %v4620, %v4619
        %v5435 = vpack.c.b16 %v4622, %v4621
        %v5436 = vpack.c.b16 %v4624, %v4623
        %v5437 = vpack.c.b16 %v4626, %v4625
        %v5438 = vpack.c.b16 %v4628, %v4627
        %v5439 = vpack.c.b16 %v4630, %v4629
        %v5440 = vpack.c.b16 %v4632, %v4631
        %v5441 = vpack.c.b16 %v4634, %v4633
        %v5442 = vpack.c.b16 %v4636, %v4635
        %v5443 = vpack.c.b16 %v4638, %v4637
        %v5444 = vpack.c.b16 %v4640, %v4639
        %v5445 = vpack.c.b16 %v4642, %v4641
        %v5446 = vpack.c.b16 %v4644, %v4643
        %v5447 = vpack.c.b16 %v4646, %v4645
        %v5448 = vpack.c.b16 %v4648, %v4647
        %v5449 = vpack.c.b16 %v4650, %v4649
        %v5450 = vpack.c.b16 %v4652, %v4651
        %v5451 = vpack.c.b16 %v4654, %v4653
        %v5452 = vpack.c.b16 %v4656, %v4655
        %v5453 = vpack.c.b16 %v4658, %v4657
        %v5454 = vpack.c.b16 %v4660, %v4659
        %v5455 = vpack.c.b16 %v4662, %v4661
        %v5456 = vpack.c.b16 %v4664, %v4663
        %v5457 = vpack.c.b16 %v4666, %v4665
        %v5458 = vpack.c.b16 %v4668, %v4667
        %v5459 = vpack.c.b16 %v4670, %v4669
        %v5460 = vpack.c.b16 %v4672, %v4671
        %v5461 = vpack.c.b16 %v4674, %v4673
        %v5462 = vpack.c.b16 %v4676, %v4675
        %v5463 = vpack.c.b16 %v4678, %v4677
        %v5464 = vpack.c.b16 %v4680, %v4679
        %v5465 = vpack.c.b16 %v4682, %v4681
        %v5466 = vpack.c.b16 %v4684, %v4683
        %v5467 = vpack.c.b16 %v4686, %v4685
        %v5468 = vpack.c.b16 %v4688, %v4687
        %v5469 = vpack.c.b16 %v4690, %v4689
        %v5470 = vpack.c.b16 %v4692, %v4691
        %v5471 = vpack.c.b16 %v4694, %v4693
        %v5472 = vpack.c.b16 %v4696, %v4695
        %v5473 = vpack.c.b16 %v4698, %v4697
        %v5474 = vpack.c.b16 %v4700, %v4699
        %v5475 = vpack.c.b16 %v4702, %v4701
        %v5476 = vpack.c.b16 %v4704, %v4703
        %v5477 = vpack.c.b16 %v4706, %v4705
        %v5478 = vpack.c.b16 %v4708, %v4707
        %v5479 = vpack.c.b16 %v4710, %v4709
        %v5480 = vpack.c.b16 %v4712, %v4711
        %v5481 = vpack.c.b16 %v4714, %v4713
        %v5482 = vpack.c.b16 %v4716, %v4715
        %v5483 = vpack.c.b16 %v4718, %v4717
        %v5484 = vpack.c.b16 %v4720, %v4719
        %v5485 = vpack.c.b16 %v4722, %v4721
        %v5486 = vpack.c.b16 %v4724, %v4723
        %v5487 = vpack.c.b16 %v4726, %v4725
        %v5488 = vpack.c.b16 %v4728, %v4727
        %v5489 = vpack.c.b16 %v4730, %v4729
        %v5490 = vpack.c.b16 %v4732, %v4731
        %v5491 = vpack.c.b16 %v4734, %v4733
        %v5492 = vpack.c.b16 %v4736, %v4735
        %v5493 = vpack.c.b16 %v4738, %v4737
        %v5494 = vpack.c.b16 %v4740, %v4739
        %v5495 = vpack.c.b16 %v4742, %v4741
        %v5496 = vpack.c.b16 %v4744, %v4743
        %v5497 = vpack.c.b16 %v4746, %v4745
        %v5498 = vpack.c.b16 %v4748, %v4747
        %v5499 = vpack.c.b16 %v4750, %v4749
        %v5500 = vpack.c.b16 %v4752, %v4751
        %v5501 = vpack.c.b16 %v4754, %v4753
        %v5502 = vpack.c.b16 %v4756, %v4755
        %v5503 = vpack.c.b16 %v4758, %v4757
        %v5504 = vpack.c.b16 %v4760, %v4759
        %v5505 = vpack.c.b16 %v4762, %v4761
        %v5506 = vpack.c.b16 %v4764, %v4763
        %v5507 = vpack.c.b16 %v4766, %v4765
        %v5508 = vpack.c.b16 %v4768, %v4767
        %v5509 = vpack.c.b16 %v4770, %v4769
        %v5510 = vpack.c.b16 %v4772, %v4771
        %v5511 = vpack.c.b16 %v4774, %v4773
        %v5512 = vpack.c.b16 %v4776, %v4775
        %v5513 = vpack.c.b16 %v4778, %v4777
        %v5514 = vpack.c.b16 %v4780, %v4779
        %v5515 = vpack.c.b16 %v4782, %v4781
        %v5516 = vpack.c.b16 %v4784, %v4783
        %v5517 = vpack.c.b16 %v4786, %v4785
        %v5518 = vpack.c.b16 %v4788, %v4787
        %v5519 = vpack.c.b16 %v4790, %v4789
        %v5520 = vpack.c.b16 %v4792, %v4791
        %v5521 = vpack.c.b16 %v4794, %v4793
        %v5522 = vpack.c.b16 %v4796, %v4795
        %v5523 = vpack.c.b16 %v4798, %v4797
        %v5524 = vpack.c.b16 %v4800, %v4799
        %v5525 = vpack.c.b16 %v4802, %v4801
        %v5526 = vpack.c.b16 %v4804, %v4803
        %v5527 = vpack.c.b16 %v4806, %v4805
        %v5528 = vpack.c.b16 %v4808, %v4807
        %v5529 = vpack.c.b16 %v4810, %v4809
        %v5530 = vpack.c.b16 %v4812, %v4811
        %v5531 = vpack.c.b16 %v4814, %v4813
        %v5532 = vpack.c.b16 %v4816, %v4815
        %v5533 = vpack.c.b16 %v4818, %v4817
        %v5534 = vpack.c.b16 %v4820, %v4819
        %v5535 = vpack.c.b16 %v4822, %v4821
        %v5536 = vpack.c.b16 %v4824, %v4823
        %v5537 = vpack.c.b16 %v4826, %v4825
        %v5538 = vpack.c.b16 %v4828, %v4827
        %v5539 = vpack.c.b16 %v4830, %v4829
        %v5540 = vpack.c.b16 %v4832, %v4831
        %v5541 = vpack.c.b16 %v4834, %v4833
        %v5542 = vpack.c.b16 %v4836, %v4835
        %v5543 = vpack.c.b16 %v4838, %v4837
        %v5544 = vpack.c.b16 %v4840, %v4839
        %v5545 = vpack.c.b16 %v4842, %v4841
        %v5546 = vpack.c.b16 %v4844, %v4843
        %v5547 = vpack.c.b16 %v4846, %v4845
        %v5548 = vpack.c.b16 %v4848, %v4847
        %v5549 = vpack.c.b16 %v4850, %v4849
        %v5550 = vpack.c.b16 %v4852, %v4851
        %v5551 = vpack.c.b16 %v4854, %v4853
        %v5552 = vpack.c.b16 %v4856, %v4855
        %v5553 = vpack.c.b16 %v4858, %v4857
        %v5554 = vpack.c.b16 %v4860, %v4859
        %v5555 = vpack.c.b16 %v4862, %v4861
        %v5556 = vpack.c.b16 %v4864, %v4863
        %v5557 = vpack.c.b16 %v4866, %v4865
        %v5558 = vpack.c.b16 %v4868, %v4867
        %v5559 = vpack.c.b16 %v4870, %v4869
        %v5560 = vpack.c.b16 %v4872, %v4871
        %v5561 = vpack.c.b16 %v4874, %v4873
        %v5562 = vpack.c.b16 %v4876, %v4875
        %v5563 = vpack.c.b16 %v4878, %v4877
        %v5564 = vpack.c.b16 %v4880, %v4879
        %v5565 = vpack.c.b16 %v4882, %v4881
        %v5566 = vpack.c.b16 %v4884, %v4883
        %v5567 = vpack.c.b16 %v4886, %v4885
        %v5568 = vpack.c.b16 %v4888, %v4887
        %v5569 = vpack.c.b16 %v4890, %v4889
        %v5570 = vpack.c.b16 %v4892, %v4891
        %v5571 = vpack.c.b16 %v4894, %v4893
        %v5572 = vpack.c.b16 %v4896, %v4895
        %v5573 = vpack.c.b16 %v4898, %v4897
        %v5574 = vpack.c.b16 %v4900, %v4899
        %v5575 = vpack.c.b16 %v4902, %v4901
        %v5576 = vpack.c.b16 %v4904, %v4903
        %v5577 = vpack.c.b16 %v4906, %v4905
        %v5578 = vpack.c.b16 %v4908, %v4907
        %v5579 = vpack.c.b16 %v4910, %v4909
        %v5580 = vpack.c.b16 %v4912, %v4911
        %v5581 = vpack.c.b16 %v4914, %v4913
        %v5582 = vpack.c.b16 %v4916, %v4915
        %v5583 = vpack.c.b16 %v4918, %v4917
        %v5584 = vpack.c.b16 %v4920, %v4919
        %v5585 = vpack.c.b16 %v4922, %v4921
        %v5586 = vpack.c.b16 %v4924, %v4923
        %v5587 = vpack.c.b16 %v4926, %v4925
        %v5588 = vpack.c.b16 %v4928, %v4927
        %v5589 = vpack.c.b16 %v4930, %v4929
        %v5590 = vpack.c.b16 %v4932, %v4931
        %v5591 = vpack.c.b16 %v4934, %v4933
        %v5592 = vpack.c.b16 %v4936, %v4935
        %v5593 = vpack.c.b16 %v4938, %v4937
        %v5594 = vpack.c.b16 %v4940, %v4939
        %v5595 = vpack.c.b16 %v4942, %v4941
        %v5596 = vpack.c.b16 %v4944, %v4943
        %v5597 = vpack.c.b16 %v4946, %v4945
        %v5598 = vpack.c.b16 %v4948, %v4947
        %v5599 = vpack.c.b16 %v4950, %v4949
        %v5600 = vpack.c.b16 %v4952, %v4951
        %v5601 = vpack.c.b16 %v4954, %v4953
        %v5602 = vpack.c.b16 %v4956, %v4955
        %v5603 = vpack.c.b16 %v4958, %v4957
        %v5604 = vpack.c.b16 %v4960, %v4959
        %v5605 = vpack.c.b16 %v4962, %v4961
        %v5606 = vpack.c.b16 %v4964, %v4963
        %v5607 = vpack.c.b16 %v4966, %v4965
        %v5608 = vpack.c.b16 %v4968, %v4967
        %v5609 = vpack.c.b16 %v4970, %v4969
        %v5610 = vpack.c.b16 %v4972, %v4971
        %v5611 = vpack.c.b16 %v4974, %v4973
        %v5612 = vpack.c.b16 %v4976, %v4975
        %v5613 = vpack.c.b16 %v4978, %v4977
        %v5614 = vpack.c.b16 %v4980, %v4979
        %v5615 = vpack.c.b16 %v4982, %v4981
        %v5616 = vpack.c.b16 %v4984, %v4983
        %v5617 = vpack.c.b16 %v4986, %v4985
        %v5618 = vpack.c.b16 %v4988, %v4987
        %v5619 = vpack.c.b16 %v4990, %v4989
        %v5620 = vpack.c.b16 %v4992, %v4991
        %v5621 = vpack.c.b16 %v4994, %v4993
        %v5622 = vpack.c.b16 %v4996, %v4995
        %v5623 = vpack.c.b16 %v4998, %v4997
        %v5624 = vpack.c.b16 %v5000, %v4999
        %v5625 = vpack.c.b16 %v5002, %v5001
        %v5626 = vpack.c.b16 %v5004, %v5003
        %v5627 = vpack.c.b16 %v5006, %v5005
        %v5628 = vpack.c.b16 %v5008, %v5007
        %v5629 = vpack.c.b16 %v5010, %v5009
        %v5630 = vpack.c.b16 %v5012, %v5011
        %v5631 = vpack.c.b16 %v5014, %v5013
        %v5632 = vpack.c.b16 %v5016, %v5015
        %v5633 = vpack.c.b16 %v5018, %v5017
        %v5634 = vpack.c.b16 %v5020, %v5019
        %v5635 = vpack.c.b16 %v5022, %v5021
        %v5636 = vpack.c.b16 %v5024, %v5023
        %v5637 = vpack.c.b16 %v5026, %v5025
        %v5638 = vpack.c.b16 %v5028, %v5027
        %v5639 = vpack.c.b16 %v5030, %v5029
        %v5640 = vpack.c.b16 %v5032, %v5031
        %v5641 = vpack.c.b16 %v5034, %v5033
        %v5642 = vpack.c.b16 %v5036, %v5035
        %v5643 = vpack.c.b16 %v5038, %v5037
        %v5644 = vpack.c.b16 %v5040, %v5039
        %v5645 = vpack.c.b16 %v5042, %v5041
        %v5646 = vpack.c.b16 %v5044, %v5043
        %v5647 = vpack.c.b16 %v5046, %v5045
        %v5648 = vpack.c.b16 %v5048, %v5047
        %v5649 = vpack.c.b16 %v5050, %v5049
        %v5650 = vpack.c.b16 %v5052, %v5051
        %v5651 = vpack.c.b16 %v5054, %v5053
        %v5652 = vpack.c.b16 %v5056, %v5055
        %v5653 = vpack.c.b16 %v5058, %v5057
        %v5654 = vpack.c.b16 %v5060, %v5059
        %v5655 = vpack.c.b16 %v5062, %v5061
        %v5656 = vpack.c.b16 %v5064, %v5063
        %v5657 = vpack.c.b16 %v5066, %v5065
        %v5658 = vpack.c.b16 %v5068, %v5067
        %v5659 = vpack.c.b16 %v5070, %v5069
        %v5660 = vpack.c.b16 %v5072, %v5071
        %v5661 = vpack.c.b16 %v5074, %v5073
        %v5662 = vpack.c.b16 %v5076, %v5075
        %v5663 = vpack.c.b16 %v5078, %v5077
        %v5664 = vpack.c.b16 %v5080, %v5079
        %v5665 = vpack.c.b16 %v5082, %v5081
        %v5666 = vpack.c.b16 %v5084, %v5083
        %v5667 = vpack.c.b16 %v5086, %v5085
        %v5668 = vpack.c.b16 %v5088, %v5087
        %v5669 = vpack.c.b16 %v5090, %v5089
        %v5670 = vpack.c.b16 %v5092, %v5091
        %v5671 = vpack.c.b16 %v5094, %v5093
        %v5672 = vpack.c.b16 %v5096, %v5095
        %v5673 = vpack.c.b16 %v5098, %v5097
        %v5674 = vpack.c.b16 %v5100, %v5099
        %v5675 = vpack.c.b16 %v5102, %v5101
        %v5676 = vpack.c.b16 %v5104, %v5103
        %v5677 = vpack.c.b16 %v5106, %v5105
        %v5678 = vpack.c.b16 %v5108, %v5107
        %v5679 = vpack.c.b16 %v5110, %v5109
        %v5680 = vpack.c.b16 %v5112, %v5111
        %v5681 = vpack.c.b16 %v5114, %v5113
        %v5682 = vpack.c.b16 %v5116, %v5115
        %v5683 = vpack.c.b16 %v5118, %v5117
        %v5684 = vpack.c.b16 %v5120, %v5119
        %v5685 = vpack.c.b16 %v5122, %v5121
        %v5686 = vpack.c.b16 %v5124, %v5123
        %v5687 = vpack.c.b16 %v5126, %v5125
        %v5688 = vpack.c.b16 %v5128, %v5127
        %v5689 = vpack.c.b16 %v5130, %v5129
        %v5690 = vpack.c.b16 %v5132, %v5131
        %v5691 = vpack.c.b16 %v5134, %v5133
        %v5692 = vpack.c.b16 %v5136, %v5135
        %v5693 = vpack.c.b16 %v5138, %v5137
        %v5694 = vpack.c.b16 %v5140, %v5139
        %v5695 = vpack.c.b16 %v5142, %v5141
        %v5696 = vpack.c.b16 %v5144, %v5143
        %v5697 = vpack.c.b16 %v5146, %v5145
        %v5698 = vpack.c.b16 %v5148, %v5147
        %v5699 = vpack.c.b16 %v5150, %v5149
        %v5700 = vpack.c.b16 %v5152, %v5151
        %v5701 = vpack.c.b16 %v5154, %v5153
        %v5702 = vpack.c.b16 %v5156, %v5155
        %v5703 = vpack.c.b16 %v5158, %v5157
        %v5704 = vpack.c.b16 %v5160, %v5159
        %v5705 = vpack.c.b16 %v5162, %v5161
        %v5706 = vpack.c.b16 %v5164, %v5163
        %v5707 = vpack.c.b16 %v5166, %v5165
        %v5708 = vpack.c.b16 %v5168, %v5167
        %v5709 = vpack.c.b16 %v5170, %v5169
        %v5710 = vpack.c.b16 %v5172, %v5171
        %v5711 = vpack.c.b16 %v5174, %v5173
        %v5712 = vpack.c.b16 %v5176, %v5175
        %v5713 = vpack.c.b16 %v5178, %v5177
        %v5714 = vpack.c.b16 %v5180, %v5179
        %v5715 = vpack.c.b16 %v5182, %v5181
        %v5716 = vpack.c.b16 %v5184, %v5183
        %v5717 = vpack.c.b16 %v5186, %v5185
        %v5718 = vpack.c.b16 %v5188, %v5187
        %v5719 = vpack.c.b16 %v5190, %v5189
        %v5720 = vpack.c.b16 %v5192, %v5191
        %v5721 = vpack.c.b16 %v5194, %v5193
        %v5722 = vpack.c.b16 %v5196, %v5195
        %v5723 = vpack.c.b16 %v5198, %v5197
        %v5724 = vpack.c.b16 %v5200, %v5199
        %v5725 = vpack.c.b16 %v5202, %v5201
        %v5726 = vpack.c.b16 %v5204, %v5203
        %v5727 = vpack.c.b16 %v5206, %v5205
        %v5728 = vpack.c.b16 %v5208, %v5207
        %v5729 = vpack.c.b16 %v5210, %v5209
        %v5730 = vpack.c.b16 %v5212, %v5211
        %v5731 = vpack.c.b16 %v5214, %v5213
        %v5732 = vpack.c.b16 %v5216, %v5215
        %v5733 = vpack.c.b16 %v5218, %v5217
        %v5734 = vpack.c.b16 %v5220, %v5219
        %v5735 = vpack.c.b16 %v5222, %v5221
        %v5736 = vpack.c.b16 %v5224, %v5223
        %6249 = vmatprep.subr.bf16.mxu0 0
        %6250 = vmatpush1.bf16.msra.mxu0 %v5232
        %6251 = vmatprep.subr.bf16.mxu0 0
        %6252 = vmatpush1.bf16.msra.mxu0 %v5231
        %6253 = vmatprep.subr.bf16.mxu0 0
        %6254 = vmatpush1.bf16.msra.mxu0 %v5230
        %6255 = vmatprep.subr.bf16.mxu0 0
        %6256 = vmatpush1.bf16.msra.mxu0 %v5229
        %6257 = vmatprep.subr.bf16.mxu0 0
        %6258 = vmatpush1.bf16.msra.mxu0 %v5228
        %6259 = vmatprep.subr.bf16.mxu0 0
        %6260 = vmatpush1.bf16.msra.mxu0 %v5227
        %6261 = vmatprep.subr.bf16.mxu0 0
        %6262 = vmatpush1.bf16.msra.mxu0 %v5226
        %6263 = vmatprep.subr.bf16.mxu0 0
        %6264 = vmatpush1.bf16.msra.mxu0 %v5225
        %6265 = vmatprep.subr.bf16.mxu0 0
        %6266 = vmatpush2.bf16.msra.mxu0 %v5240
        %6267 = vmatprep.subr.bf16.mxu0 0
        %6268 = vmatpush2.bf16.msra.mxu0 %v5239
        %6269 = vmatprep.subr.bf16.mxu0 0
        %6270 = vmatpush2.bf16.msra.mxu0 %v5238
        %6271 = vmatprep.subr.bf16.mxu0 0
        %6272 = vmatpush2.bf16.msra.mxu0 %v5237
        %6273 = vmatprep.subr.bf16.mxu0 0
        %6274 = vmatpush2.bf16.msra.mxu0 %v5236
        %6275 = vmatprep.subr.bf16.mxu0 0
        %6276 = vmatpush2.bf16.msra.mxu0 %v5235
        %6277 = vmatprep.subr.bf16.mxu0 0
        %6278 = vmatpush2.bf16.msra.mxu0 %v5234
        %6279 = vmatprep.subr.bf16.mxu0 0
        %6280 = vmatpush2.bf16.msra.mxu0 %v5233
        %6281 = vmatprep.mubr.bf16.mxu0 %v2090
        %6282 = vmatmul.mubr.bf16.gmra.mxu0 %v2089
        %v6283 = vpop.f32.mrf.mxu0
        %v6284 = vadd.f32 0.0, %v6283
        %v6285 = vpop.f32.mrf.mxu0
        %v6286 = vpop.f32.mrf.mxu0
        %v6287 = vpop.f32.mrf.mxu0
        %6288 = vdwg.mxu0
        %6289 = vmatprep.subr.bf16.mxu0 0
        %6290 = vmatpush1.bf16.msra.mxu0 %v5248
        %6291 = vmatprep.subr.bf16.mxu0 0
        %6292 = vmatpush1.bf16.msra.mxu0 %v5247
        %6293 = vmatprep.subr.bf16.mxu0 0
        %6294 = vmatpush1.bf16.msra.mxu0 %v5246
        %6295 = vmatprep.subr.bf16.mxu0 0
        %6296 = vmatpush1.bf16.msra.mxu0 %v5245
        %6297 = vmatprep.subr.bf16.mxu0 0
        %6298 = vmatpush1.bf16.msra.mxu0 %v5244
        %6299 = vmatprep.subr.bf16.mxu0 0
        %6300 = vmatpush1.bf16.msra.mxu0 %v5243
        %6301 = vmatprep.subr.bf16.mxu0 0
        %6302 = vmatpush1.bf16.msra.mxu0 %v5242
        %6303 = vmatprep.subr.bf16.mxu0 0
        %6304 = vmatpush1.bf16.msra.mxu0 %v5241
        %6305 = vmatprep.subr.bf16.mxu0 0
        %6306 = vmatpush2.bf16.msra.mxu0 %v5256
        %6307 = vmatprep.subr.bf16.mxu0 0
        %6308 = vmatpush2.bf16.msra.mxu0 %v5255
        %6309 = vmatprep.subr.bf16.mxu0 0
        %6310 = vmatpush2.bf16.msra.mxu0 %v5254
        %6311 = vmatprep.subr.bf16.mxu0 0
        %6312 = vmatpush2.bf16.msra.mxu0 %v5253
        %6313 = vmatprep.subr.bf16.mxu0 0
        %6314 = vmatpush2.bf16.msra.mxu0 %v5252
        %6315 = vmatprep.subr.bf16.mxu0 0
        %6316 = vmatpush2.bf16.msra.mxu0 %v5251
        %6317 = vmatprep.subr.bf16.mxu0 0
        %6318 = vmatpush2.bf16.msra.mxu0 %v5250
        %6319 = vmatprep.subr.bf16.mxu0 0
        %6320 = vmatpush2.bf16.msra.mxu0 %v5249
        %6321 = vmatprep.mubr.bf16.mxu0 %v2092
        %6322 = vmatmul.mubr.bf16.gmra.mxu0 %v2091
        %v6323 = vpop.f32.mrf.mxu0
        %v6324 = vadd.f32 %v6284, %v6323
        %v6325 = vpop.f32.mrf.mxu0
        %v6326 = vpop.f32.mrf.mxu0
        %v6327 = vpop.f32.mrf.mxu0
        %6328 = vdwg.mxu0
        %6329 = vmatprep.subr.bf16.mxu0 0
        %6330 = vmatpush1.bf16.msra.mxu0 %v5264
        %6331 = vmatprep.subr.bf16.mxu0 0
        %6332 = vmatpush1.bf16.msra.mxu0 %v5263
        %6333 = vmatprep.subr.bf16.mxu0 0
        %6334 = vmatpush1.bf16.msra.mxu0 %v5262
        %6335 = vmatprep.subr.bf16.mxu0 0
        %6336 = vmatpush1.bf16.msra.mxu0 %v5261
        %6337 = vmatprep.subr.bf16.mxu0 0
        %6338 = vmatpush1.bf16.msra.mxu0 %v5260
        %6339 = vmatprep.subr.bf16.mxu0 0
        %6340 = vmatpush1.bf16.msra.mxu0 %v5259
        %6341 = vmatprep.subr.bf16.mxu0 0
        %6342 = vmatpush1.bf16.msra.mxu0 %v5258
        %6343 = vmatprep.subr.bf16.mxu0 0
        %6344 = vmatpush1.bf16.msra.mxu0 %v5257
        %6345 = vmatprep.subr.bf16.mxu0 0
        %6346 = vmatpush2.bf16.msra.mxu0 %v5272
        %6347 = vmatprep.subr.bf16.mxu0 0
        %6348 = vmatpush2.bf16.msra.mxu0 %v5271
        %6349 = vmatprep.subr.bf16.mxu0 0
        %6350 = vmatpush2.bf16.msra.mxu0 %v5270
        %6351 = vmatprep.subr.bf16.mxu0 0
        %6352 = vmatpush2.bf16.msra.mxu0 %v5269
        %6353 = vmatprep.subr.bf16.mxu0 0
        %6354 = vmatpush2.bf16.msra.mxu0 %v5268
        %6355 = vmatprep.subr.bf16.mxu0 0
        %6356 = vmatpush2.bf16.msra.mxu0 %v5267
        %6357 = vmatprep.subr.bf16.mxu0 0
        %6358 = vmatpush2.bf16.msra.mxu0 %v5266
        %6359 = vmatprep.subr.bf16.mxu0 0
        %6360 = vmatpush2.bf16.msra.mxu0 %v5265
        %6361 = vmatprep.mubr.bf16.mxu0 %v2094
        %6362 = vmatmul.mubr.bf16.gmra.mxu0 %v2093
        %v6363 = vpop.f32.mrf.mxu0
        %v6364 = vadd.f32 %v6324, %v6363
        %v6365 = vpop.f32.mrf.mxu0
        %v6366 = vpop.f32.mrf.mxu0
        %v6367 = vpop.f32.mrf.mxu0
        %6368 = vdwg.mxu0
        %6369 = vmatprep.subr.bf16.mxu0 0
        %6370 = vmatpush1.bf16.msra.mxu0 %v5280
        %6371 = vmatprep.subr.bf16.mxu0 0
        %6372 = vmatpush1.bf16.msra.mxu0 %v5279
        %6373 = vmatprep.subr.bf16.mxu0 0
        %6374 = vmatpush1.bf16.msra.mxu0 %v5278
        %6375 = vmatprep.subr.bf16.mxu0 0
        %6376 = vmatpush1.bf16.msra.mxu0 %v5277
        %6377 = vmatprep.subr.bf16.mxu0 0
        %6378 = vmatpush1.bf16.msra.mxu0 %v5276
        %6379 = vmatprep.subr.bf16.mxu0 0
        %6380 = vmatpush1.bf16.msra.mxu0 %v5275
        %6381 = vmatprep.subr.bf16.mxu0 0
        %6382 = vmatpush1.bf16.msra.mxu0 %v5274
        %6383 = vmatprep.subr.bf16.mxu0 0
        %6384 = vmatpush1.bf16.msra.mxu0 %v5273
        %6385 = vmatprep.subr.bf16.mxu0 0
        %6386 = vmatpush2.bf16.msra.mxu0 %v5288
        %6387 = vmatprep.subr.bf16.mxu0 0
        %6388 = vmatpush2.bf16.msra.mxu0 %v5287
        %6389 = vmatprep.subr.bf16.mxu0 0
        %6390 = vmatpush2.bf16.msra.mxu0 %v5286
        %6391 = vmatprep.subr.bf16.mxu0 0
        %6392 = vmatpush2.bf16.msra.mxu0 %v5285
        %6393 = vmatprep.subr.bf16.mxu0 0
        %6394 = vmatpush2.bf16.msra.mxu0 %v5284
        %6395 = vmatprep.subr.bf16.mxu0 0
        %6396 = vmatpush2.bf16.msra.mxu0 %v5283
        %6397 = vmatprep.subr.bf16.mxu0 0
        %6398 = vmatpush2.bf16.msra.mxu0 %v5282
        %6399 = vmatprep.subr.bf16.mxu0 0
        %6400 = vmatpush2.bf16.msra.mxu0 %v5281
        %6401 = vmatprep.mubr.bf16.mxu0 %v2096
        %6402 = vmatmul.mubr.bf16.gmra.mxu0 %v2095
        %v6403 = vpop.f32.mrf.mxu0
        %v6404 = vadd.f32 %v6364, %v6403
        %v6405 = vpop.f32.mrf.mxu0
        %v6406 = vpop.f32.mrf.mxu0
        %v6407 = vpop.f32.mrf.mxu0
        %6408 = vdwg.mxu0
        %6409 = vmatprep.subr.bf16.mxu0 0
        %6410 = vmatpush1.bf16.msra.mxu0 %v5296
        %6411 = vmatprep.subr.bf16.mxu0 0
        %6412 = vmatpush1.bf16.msra.mxu0 %v5295
        %6413 = vmatprep.subr.bf16.mxu0 0
        %6414 = vmatpush1.bf16.msra.mxu0 %v5294
        %6415 = vmatprep.subr.bf16.mxu0 0
        %6416 = vmatpush1.bf16.msra.mxu0 %v5293
        %6417 = vmatprep.subr.bf16.mxu0 0
        %6418 = vmatpush1.bf16.msra.mxu0 %v5292
        %6419 = vmatprep.subr.bf16.mxu0 0
        %6420 = vmatpush1.bf16.msra.mxu0 %v5291
        %6421 = vmatprep.subr.bf16.mxu0 0
        %6422 = vmatpush1.bf16.msra.mxu0 %v5290
        %6423 = vmatprep.subr.bf16.mxu0 0
        %6424 = vmatpush1.bf16.msra.mxu0 %v5289
        %6425 = vmatprep.subr.bf16.mxu0 0
        %6426 = vmatpush2.bf16.msra.mxu0 %v5304
        %6427 = vmatprep.subr.bf16.mxu0 0
        %6428 = vmatpush2.bf16.msra.mxu0 %v5303
        %6429 = vmatprep.subr.bf16.mxu0 0
        %6430 = vmatpush2.bf16.msra.mxu0 %v5302
        %6431 = vmatprep.subr.bf16.mxu0 0
        %6432 = vmatpush2.bf16.msra.mxu0 %v5301
        %6433 = vmatprep.subr.bf16.mxu0 0
        %6434 = vmatpush2.bf16.msra.mxu0 %v5300
        %6435 = vmatprep.subr.bf16.mxu0 0
        %6436 = vmatpush2.bf16.msra.mxu0 %v5299
        %6437 = vmatprep.subr.bf16.mxu0 0
        %6438 = vmatpush2.bf16.msra.mxu0 %v5298
        %6439 = vmatprep.subr.bf16.mxu0 0
        %6440 = vmatpush2.bf16.msra.mxu0 %v5297
        %6441 = vmatprep.mubr.bf16.mxu0 %v2098
        %6442 = vmatmul.mubr.bf16.gmra.mxu0 %v2097
        %v6443 = vpop.f32.mrf.mxu0
        %v6444 = vadd.f32 %v6404, %v6443
        %v6445 = vpop.f32.mrf.mxu0
        %v6446 = vpop.f32.mrf.mxu0
        %v6447 = vpop.f32.mrf.mxu0
        %6448 = vdwg.mxu0
        %6449 = vmatprep.subr.bf16.mxu0 0
        %6450 = vmatpush1.bf16.msra.mxu0 %v5312
        %6451 = vmatprep.subr.bf16.mxu0 0
        %6452 = vmatpush1.bf16.msra.mxu0 %v5311
        %6453 = vmatprep.subr.bf16.mxu0 0
        %6454 = vmatpush1.bf16.msra.mxu0 %v5310
        %6455 = vmatprep.subr.bf16.mxu0 0
        %6456 = vmatpush1.bf16.msra.mxu0 %v5309
        %6457 = vmatprep.subr.bf16.mxu0 0
        %6458 = vmatpush1.bf16.msra.mxu0 %v5308
        %6459 = vmatprep.subr.bf16.mxu0 0
        %6460 = vmatpush1.bf16.msra.mxu0 %v5307
        %6461 = vmatprep.subr.bf16.mxu0 0
        %6462 = vmatpush1.bf16.msra.mxu0 %v5306
        %6463 = vmatprep.subr.bf16.mxu0 0
        %6464 = vmatpush1.bf16.msra.mxu0 %v5305
        %6465 = vmatprep.subr.bf16.mxu0 0
        %6466 = vmatpush2.bf16.msra.mxu0 %v5320
        %6467 = vmatprep.subr.bf16.mxu0 0
        %6468 = vmatpush2.bf16.msra.mxu0 %v5319
        %6469 = vmatprep.subr.bf16.mxu0 0
        %6470 = vmatpush2.bf16.msra.mxu0 %v5318
        %6471 = vmatprep.subr.bf16.mxu0 0
        %6472 = vmatpush2.bf16.msra.mxu0 %v5317
        %6473 = vmatprep.subr.bf16.mxu0 0
        %6474 = vmatpush2.bf16.msra.mxu0 %v5316
        %6475 = vmatprep.subr.bf16.mxu0 0
        %6476 = vmatpush2.bf16.msra.mxu0 %v5315
        %6477 = vmatprep.subr.bf16.mxu0 0
        %6478 = vmatpush2.bf16.msra.mxu0 %v5314
        %6479 = vmatprep.subr.bf16.mxu0 0
        %6480 = vmatpush2.bf16.msra.mxu0 %v5313
        %6481 = vmatprep.mubr.bf16.mxu0 %v2100
        %6482 = vmatmul.mubr.bf16.gmra.mxu0 %v2099
        %v6483 = vpop.f32.mrf.mxu0
        %v6484 = vadd.f32 %v6444, %v6483
        %v6485 = vpop.f32.mrf.mxu0
        %v6486 = vpop.f32.mrf.mxu0
        %v6487 = vpop.f32.mrf.mxu0
        %6488 = vdwg.mxu0
        %6489 = vmatprep.subr.bf16.mxu0 0
        %6490 = vmatpush1.bf16.msra.mxu0 %v5328
        %6491 = vmatprep.subr.bf16.mxu0 0
        %6492 = vmatpush1.bf16.msra.mxu0 %v5327
        %6493 = vmatprep.subr.bf16.mxu0 0
        %6494 = vmatpush1.bf16.msra.mxu0 %v5326
        %6495 = vmatprep.subr.bf16.mxu0 0
        %6496 = vmatpush1.bf16.msra.mxu0 %v5325
        %6497 = vmatprep.subr.bf16.mxu0 0
        %6498 = vmatpush1.bf16.msra.mxu0 %v5324
        %6499 = vmatprep.subr.bf16.mxu0 0
        %6500 = vmatpush1.bf16.msra.mxu0 %v5323
        %6501 = vmatprep.subr.bf16.mxu0 0
        %6502 = vmatpush1.bf16.msra.mxu0 %v5322
        %6503 = vmatprep.subr.bf16.mxu0 0
        %6504 = vmatpush1.bf16.msra.mxu0 %v5321
        %6505 = vmatprep.subr.bf16.mxu0 0
        %6506 = vmatpush2.bf16.msra.mxu0 %v5336
        %6507 = vmatprep.subr.bf16.mxu0 0
        %6508 = vmatpush2.bf16.msra.mxu0 %v5335
        %6509 = vmatprep.subr.bf16.mxu0 0
        %6510 = vmatpush2.bf16.msra.mxu0 %v5334
        %6511 = vmatprep.subr.bf16.mxu0 0
        %6512 = vmatpush2.bf16.msra.mxu0 %v5333
        %6513 = vmatprep.subr.bf16.mxu0 0
        %6514 = vmatpush2.bf16.msra.mxu0 %v5332
        %6515 = vmatprep.subr.bf16.mxu0 0
        %6516 = vmatpush2.bf16.msra.mxu0 %v5331
        %6517 = vmatprep.subr.bf16.mxu0 0
        %6518 = vmatpush2.bf16.msra.mxu0 %v5330
        %6519 = vmatprep.subr.bf16.mxu0 0
        %6520 = vmatpush2.bf16.msra.mxu0 %v5329
        %6521 = vmatprep.mubr.bf16.mxu0 %v2102
        %6522 = vmatmul.mubr.bf16.gmra.mxu0 %v2101
        %v6523 = vpop.f32.mrf.mxu0
        %v6524 = vadd.f32 %v6484, %v6523
        %v6525 = vpop.f32.mrf.mxu0
        %v6526 = vpop.f32.mrf.mxu0
        %v6527 = vpop.f32.mrf.mxu0
        %6528 = vdwg.mxu0
        %6529 = vmatprep.subr.bf16.mxu0 0
        %6530 = vmatpush1.bf16.msra.mxu0 %v5344
        %6531 = vmatprep.subr.bf16.mxu0 0
        %6532 = vmatpush1.bf16.msra.mxu0 %v5343
        %6533 = vmatprep.subr.bf16.mxu0 0
        %6534 = vmatpush1.bf16.msra.mxu0 %v5342
        %6535 = vmatprep.subr.bf16.mxu0 0
        %6536 = vmatpush1.bf16.msra.mxu0 %v5341
        %6537 = vmatprep.subr.bf16.mxu0 0
        %6538 = vmatpush1.bf16.msra.mxu0 %v5340
        %6539 = vmatprep.subr.bf16.mxu0 0
        %6540 = vmatpush1.bf16.msra.mxu0 %v5339
        %6541 = vmatprep.subr.bf16.mxu0 0
        %6542 = vmatpush1.bf16.msra.mxu0 %v5338
        %6543 = vmatprep.subr.bf16.mxu0 0
        %6544 = vmatpush1.bf16.msra.mxu0 %v5337
        %6545 = vmatprep.subr.bf16.mxu0 0
        %6546 = vmatpush2.bf16.msra.mxu0 %v5352
        %6547 = vmatprep.subr.bf16.mxu0 0
        %6548 = vmatpush2.bf16.msra.mxu0 %v5351
        %6549 = vmatprep.subr.bf16.mxu0 0
        %6550 = vmatpush2.bf16.msra.mxu0 %v5350
        %6551 = vmatprep.subr.bf16.mxu0 0
        %6552 = vmatpush2.bf16.msra.mxu0 %v5349
        %6553 = vmatprep.subr.bf16.mxu0 0
        %6554 = vmatpush2.bf16.msra.mxu0 %v5348
        %6555 = vmatprep.subr.bf16.mxu0 0
        %6556 = vmatpush2.bf16.msra.mxu0 %v5347
        %6557 = vmatprep.subr.bf16.mxu0 0
        %6558 = vmatpush2.bf16.msra.mxu0 %v5346
        %6559 = vmatprep.subr.bf16.mxu0 0
        %6560 = vmatpush2.bf16.msra.mxu0 %v5345
        %6561 = vmatprep.mubr.bf16.mxu0 %v2104
        %6562 = vmatmul.mubr.bf16.gmra.mxu0 %v2103
        %v6563 = vpop.f32.mrf.mxu0
        %v6564 = vadd.f32 %v6524, %v6563
        %v6565 = vpop.f32.mrf.mxu0
        %v6566 = vpop.f32.mrf.mxu0
        %v6567 = vpop.f32.mrf.mxu0
        %6568 = vdwg.mxu0
        %6569 = vmatprep.subr.bf16.mxu0 0
        %6570 = vmatpush1.bf16.msra.mxu0 %v5360
        %6571 = vmatprep.subr.bf16.mxu0 0
        %6572 = vmatpush1.bf16.msra.mxu0 %v5359
        %6573 = vmatprep.subr.bf16.mxu0 0
        %6574 = vmatpush1.bf16.msra.mxu0 %v5358
        %6575 = vmatprep.subr.bf16.mxu0 0
        %6576 = vmatpush1.bf16.msra.mxu0 %v5357
        %6577 = vmatprep.subr.bf16.mxu0 0
        %6578 = vmatpush1.bf16.msra.mxu0 %v5356
        %6579 = vmatprep.subr.bf16.mxu0 0
        %6580 = vmatpush1.bf16.msra.mxu0 %v5355
        %6581 = vmatprep.subr.bf16.mxu0 0
        %6582 = vmatpush1.bf16.msra.mxu0 %v5354
        %6583 = vmatprep.subr.bf16.mxu0 0
        %6584 = vmatpush1.bf16.msra.mxu0 %v5353
        %6585 = vmatprep.subr.bf16.mxu0 0
        %6586 = vmatpush2.bf16.msra.mxu0 %v5368
        %6587 = vmatprep.subr.bf16.mxu0 0
        %6588 = vmatpush2.bf16.msra.mxu0 %v5367
        %6589 = vmatprep.subr.bf16.mxu0 0
        %6590 = vmatpush2.bf16.msra.mxu0 %v5366
        %6591 = vmatprep.subr.bf16.mxu0 0
        %6592 = vmatpush2.bf16.msra.mxu0 %v5365
        %6593 = vmatprep.subr.bf16.mxu0 0
        %6594 = vmatpush2.bf16.msra.mxu0 %v5364
        %6595 = vmatprep.subr.bf16.mxu0 0
        %6596 = vmatpush2.bf16.msra.mxu0 %v5363
        %6597 = vmatprep.subr.bf16.mxu0 0
        %6598 = vmatpush2.bf16.msra.mxu0 %v5362
        %6599 = vmatprep.subr.bf16.mxu0 0
        %6600 = vmatpush2.bf16.msra.mxu0 %v5361
        %6601 = vmatprep.mubr.bf16.mxu0 %v2106
        %6602 = vmatmul.mubr.bf16.gmra.mxu0 %v2105
        %v6603 = vpop.f32.mrf.mxu0
        %v6604 = vadd.f32 %v6564, %v6603
        %v6605 = vpop.f32.mrf.mxu0
        %v6606 = vpop.f32.mrf.mxu0
        %v6607 = vpop.f32.mrf.mxu0
        %6608 = vdwg.mxu0
        %6609 = vmatprep.subr.bf16.mxu0 0
        %6610 = vmatpush1.bf16.msra.mxu0 %v5376
        %6611 = vmatprep.subr.bf16.mxu0 0
        %6612 = vmatpush1.bf16.msra.mxu0 %v5375
        %6613 = vmatprep.subr.bf16.mxu0 0
        %6614 = vmatpush1.bf16.msra.mxu0 %v5374
        %6615 = vmatprep.subr.bf16.mxu0 0
        %6616 = vmatpush1.bf16.msra.mxu0 %v5373
        %6617 = vmatprep.subr.bf16.mxu0 0
        %6618 = vmatpush1.bf16.msra.mxu0 %v5372
        %6619 = vmatprep.subr.bf16.mxu0 0
        %6620 = vmatpush1.bf16.msra.mxu0 %v5371
        %6621 = vmatprep.subr.bf16.mxu0 0
        %6622 = vmatpush1.bf16.msra.mxu0 %v5370
        %6623 = vmatprep.subr.bf16.mxu0 0
        %6624 = vmatpush1.bf16.msra.mxu0 %v5369
        %6625 = vmatprep.subr.bf16.mxu0 0
        %6626 = vmatpush2.bf16.msra.mxu0 %v5384
        %6627 = vmatprep.subr.bf16.mxu0 0
        %6628 = vmatpush2.bf16.msra.mxu0 %v5383
        %6629 = vmatprep.subr.bf16.mxu0 0
        %6630 = vmatpush2.bf16.msra.mxu0 %v5382
        %6631 = vmatprep.subr.bf16.mxu0 0
        %6632 = vmatpush2.bf16.msra.mxu0 %v5381
        %6633 = vmatprep.subr.bf16.mxu0 0
        %6634 = vmatpush2.bf16.msra.mxu0 %v5380
        %6635 = vmatprep.subr.bf16.mxu0 0
        %6636 = vmatpush2.bf16.msra.mxu0 %v5379
        %6637 = vmatprep.subr.bf16.mxu0 0
        %6638 = vmatpush2.bf16.msra.mxu0 %v5378
        %6639 = vmatprep.subr.bf16.mxu0 0
        %6640 = vmatpush2.bf16.msra.mxu0 %v5377
        %6641 = vmatprep.mubr.bf16.mxu0 %v2108
        %6642 = vmatmul.mubr.bf16.gmra.mxu0 %v2107
        %v6643 = vpop.f32.mrf.mxu0
        %v6644 = vadd.f32 %v6604, %v6643
        %v6645 = vpop.f32.mrf.mxu0
        %v6646 = vpop.f32.mrf.mxu0
        %v6647 = vpop.f32.mrf.mxu0
        %6648 = vdwg.mxu0
        %6649 = vmatprep.subr.bf16.mxu0 0
        %6650 = vmatpush1.bf16.msra.mxu0 %v5392
        %6651 = vmatprep.subr.bf16.mxu0 0
        %6652 = vmatpush1.bf16.msra.mxu0 %v5391
        %6653 = vmatprep.subr.bf16.mxu0 0
        %6654 = vmatpush1.bf16.msra.mxu0 %v5390
        %6655 = vmatprep.subr.bf16.mxu0 0
        %6656 = vmatpush1.bf16.msra.mxu0 %v5389
        %6657 = vmatprep.subr.bf16.mxu0 0
        %6658 = vmatpush1.bf16.msra.mxu0 %v5388
        %6659 = vmatprep.subr.bf16.mxu0 0
        %6660 = vmatpush1.bf16.msra.mxu0 %v5387
        %6661 = vmatprep.subr.bf16.mxu0 0
        %6662 = vmatpush1.bf16.msra.mxu0 %v5386
        %6663 = vmatprep.subr.bf16.mxu0 0
        %6664 = vmatpush1.bf16.msra.mxu0 %v5385
        %6665 = vmatprep.subr.bf16.mxu0 0
        %6666 = vmatpush2.bf16.msra.mxu0 %v5400
        %6667 = vmatprep.subr.bf16.mxu0 0
        %6668 = vmatpush2.bf16.msra.mxu0 %v5399
        %6669 = vmatprep.subr.bf16.mxu0 0
        %6670 = vmatpush2.bf16.msra.mxu0 %v5398
        %6671 = vmatprep.subr.bf16.mxu0 0
        %6672 = vmatpush2.bf16.msra.mxu0 %v5397
        %6673 = vmatprep.subr.bf16.mxu0 0
        %6674 = vmatpush2.bf16.msra.mxu0 %v5396
        %6675 = vmatprep.subr.bf16.mxu0 0
        %6676 = vmatpush2.bf16.msra.mxu0 %v5395
        %6677 = vmatprep.subr.bf16.mxu0 0
        %6678 = vmatpush2.bf16.msra.mxu0 %v5394
        %6679 = vmatprep.subr.bf16.mxu0 0
        %6680 = vmatpush2.bf16.msra.mxu0 %v5393
        %6681 = vmatprep.mubr.bf16.mxu0 %v2110
        %6682 = vmatmul.mubr.bf16.gmra.mxu0 %v2109
        %v6683 = vpop.f32.mrf.mxu0
        %v6684 = vadd.f32 %v6644, %v6683
        %v6685 = vpop.f32.mrf.mxu0
        %v6686 = vpop.f32.mrf.mxu0
        %v6687 = vpop.f32.mrf.mxu0
        %6688 = vdwg.mxu0
        %6689 = vmatprep.subr.bf16.mxu0 0
        %6690 = vmatpush1.bf16.msra.mxu0 %v5408
        %6691 = vmatprep.subr.bf16.mxu0 0
        %6692 = vmatpush1.bf16.msra.mxu0 %v5407
        %6693 = vmatprep.subr.bf16.mxu0 0
        %6694 = vmatpush1.bf16.msra.mxu0 %v5406
        %6695 = vmatprep.subr.bf16.mxu0 0
        %6696 = vmatpush1.bf16.msra.mxu0 %v5405
        %6697 = vmatprep.subr.bf16.mxu0 0
        %6698 = vmatpush1.bf16.msra.mxu0 %v5404
        %6699 = vmatprep.subr.bf16.mxu0 0
        %6700 = vmatpush1.bf16.msra.mxu0 %v5403
        %6701 = vmatprep.subr.bf16.mxu0 0
        %6702 = vmatpush1.bf16.msra.mxu0 %v5402
        %6703 = vmatprep.subr.bf16.mxu0 0
        %6704 = vmatpush1.bf16.msra.mxu0 %v5401
        %6705 = vmatprep.subr.bf16.mxu0 0
        %6706 = vmatpush2.bf16.msra.mxu0 %v5416
        %6707 = vmatprep.subr.bf16.mxu0 0
        %6708 = vmatpush2.bf16.msra.mxu0 %v5415
        %6709 = vmatprep.subr.bf16.mxu0 0
        %6710 = vmatpush2.bf16.msra.mxu0 %v5414
        %6711 = vmatprep.subr.bf16.mxu0 0
        %6712 = vmatpush2.bf16.msra.mxu0 %v5413
        %6713 = vmatprep.subr.bf16.mxu0 0
        %6714 = vmatpush2.bf16.msra.mxu0 %v5412
        %6715 = vmatprep.subr.bf16.mxu0 0
        %6716 = vmatpush2.bf16.msra.mxu0 %v5411
        %6717 = vmatprep.subr.bf16.mxu0 0
        %6718 = vmatpush2.bf16.msra.mxu0 %v5410
        %6719 = vmatprep.subr.bf16.mxu0 0
        %6720 = vmatpush2.bf16.msra.mxu0 %v5409
        %6721 = vmatprep.mubr.bf16.mxu0 %v2112
        %6722 = vmatmul.mubr.bf16.gmra.mxu0 %v2111
        %v6723 = vpop.f32.mrf.mxu0
        %v6724 = vadd.f32 %v6684, %v6723
        %v6725 = vpop.f32.mrf.mxu0
        %v6726 = vpop.f32.mrf.mxu0
        %v6727 = vpop.f32.mrf.mxu0
        %6728 = vdwg.mxu0
        %6729 = vmatprep.subr.bf16.mxu0 0
        %6730 = vmatpush1.bf16.msra.mxu0 %v5424
        %6731 = vmatprep.subr.bf16.mxu0 0
        %6732 = vmatpush1.bf16.msra.mxu0 %v5423
        %6733 = vmatprep.subr.bf16.mxu0 0
        %6734 = vmatpush1.bf16.msra.mxu0 %v5422
        %6735 = vmatprep.subr.bf16.mxu0 0
        %6736 = vmatpush1.bf16.msra.mxu0 %v5421
        %6737 = vmatprep.subr.bf16.mxu0 0
        %6738 = vmatpush1.bf16.msra.mxu0 %v5420
        %6739 = vmatprep.subr.bf16.mxu0 0
        %6740 = vmatpush1.bf16.msra.mxu0 %v5419
        %6741 = vmatprep.subr.bf16.mxu0 0
        %6742 = vmatpush1.bf16.msra.mxu0 %v5418
        %6743 = vmatprep.subr.bf16.mxu0 0
        %6744 = vmatpush1.bf16.msra.mxu0 %v5417
        %6745 = vmatprep.subr.bf16.mxu0 0
        %6746 = vmatpush2.bf16.msra.mxu0 %v5432
        %6747 = vmatprep.subr.bf16.mxu0 0
        %6748 = vmatpush2.bf16.msra.mxu0 %v5431
        %6749 = vmatprep.subr.bf16.mxu0 0
        %6750 = vmatpush2.bf16.msra.mxu0 %v5430
        %6751 = vmatprep.subr.bf16.mxu0 0
        %6752 = vmatpush2.bf16.msra.mxu0 %v5429
        %6753 = vmatprep.subr.bf16.mxu0 0
        %6754 = vmatpush2.bf16.msra.mxu0 %v5428
        %6755 = vmatprep.subr.bf16.mxu0 0
        %6756 = vmatpush2.bf16.msra.mxu0 %v5427
        %6757 = vmatprep.subr.bf16.mxu0 0
        %6758 = vmatpush2.bf16.msra.mxu0 %v5426
        %6759 = vmatprep.subr.bf16.mxu0 0
        %6760 = vmatpush2.bf16.msra.mxu0 %v5425
        %6761 = vmatprep.mubr.bf16.mxu0 %v2114
        %6762 = vmatmul.mubr.bf16.gmra.mxu0 %v2113
        %v6763 = vpop.f32.mrf.mxu0
        %v6764 = vadd.f32 %v6724, %v6763
        %v6765 = vpop.f32.mrf.mxu0
        %v6766 = vpop.f32.mrf.mxu0
        %v6767 = vpop.f32.mrf.mxu0
        %6768 = vdwg.mxu0
        %6769 = vmatprep.subr.bf16.mxu0 0
        %6770 = vmatpush1.bf16.msra.mxu0 %v5440
        %6771 = vmatprep.subr.bf16.mxu0 0
        %6772 = vmatpush1.bf16.msra.mxu0 %v5439
        %6773 = vmatprep.subr.bf16.mxu0 0
        %6774 = vmatpush1.bf16.msra.mxu0 %v5438
        %6775 = vmatprep.subr.bf16.mxu0 0
        %6776 = vmatpush1.bf16.msra.mxu0 %v5437
        %6777 = vmatprep.subr.bf16.mxu0 0
        %6778 = vmatpush1.bf16.msra.mxu0 %v5436
        %6779 = vmatprep.subr.bf16.mxu0 0
        %6780 = vmatpush1.bf16.msra.mxu0 %v5435
        %6781 = vmatprep.subr.bf16.mxu0 0
        %6782 = vmatpush1.bf16.msra.mxu0 %v5434
        %6783 = vmatprep.subr.bf16.mxu0 0
        %6784 = vmatpush1.bf16.msra.mxu0 %v5433
        %6785 = vmatprep.subr.bf16.mxu0 0
        %6786 = vmatpush2.bf16.msra.mxu0 %v5448
        %6787 = vmatprep.subr.bf16.mxu0 0
        %6788 = vmatpush2.bf16.msra.mxu0 %v5447
        %6789 = vmatprep.subr.bf16.mxu0 0
        %6790 = vmatpush2.bf16.msra.mxu0 %v5446
        %6791 = vmatprep.subr.bf16.mxu0 0
        %6792 = vmatpush2.bf16.msra.mxu0 %v5445
        %6793 = vmatprep.subr.bf16.mxu0 0
        %6794 = vmatpush2.bf16.msra.mxu0 %v5444
        %6795 = vmatprep.subr.bf16.mxu0 0
        %6796 = vmatpush2.bf16.msra.mxu0 %v5443
        %6797 = vmatprep.subr.bf16.mxu0 0
        %6798 = vmatpush2.bf16.msra.mxu0 %v5442
        %6799 = vmatprep.subr.bf16.mxu0 0
        %6800 = vmatpush2.bf16.msra.mxu0 %v5441
        %6801 = vmatprep.mubr.bf16.mxu0 %v2116
        %6802 = vmatmul.mubr.bf16.gmra.mxu0 %v2115
        %v6803 = vpop.f32.mrf.mxu0
        %v6804 = vadd.f32 %v6764, %v6803
        %v6805 = vpop.f32.mrf.mxu0
        %v6806 = vpop.f32.mrf.mxu0
        %v6807 = vpop.f32.mrf.mxu0
        %6808 = vdwg.mxu0
        %6809 = vmatprep.subr.bf16.mxu0 0
        %6810 = vmatpush1.bf16.msra.mxu0 %v5456
        %6811 = vmatprep.subr.bf16.mxu0 0
        %6812 = vmatpush1.bf16.msra.mxu0 %v5455
        %6813 = vmatprep.subr.bf16.mxu0 0
        %6814 = vmatpush1.bf16.msra.mxu0 %v5454
        %6815 = vmatprep.subr.bf16.mxu0 0
        %6816 = vmatpush1.bf16.msra.mxu0 %v5453
        %6817 = vmatprep.subr.bf16.mxu0 0
        %6818 = vmatpush1.bf16.msra.mxu0 %v5452
        %6819 = vmatprep.subr.bf16.mxu0 0
        %6820 = vmatpush1.bf16.msra.mxu0 %v5451
        %6821 = vmatprep.subr.bf16.mxu0 0
        %6822 = vmatpush1.bf16.msra.mxu0 %v5450
        %6823 = vmatprep.subr.bf16.mxu0 0
        %6824 = vmatpush1.bf16.msra.mxu0 %v5449
        %6825 = vmatprep.subr.bf16.mxu0 0
        %6826 = vmatpush2.bf16.msra.mxu0 %v5464
        %6827 = vmatprep.subr.bf16.mxu0 0
        %6828 = vmatpush2.bf16.msra.mxu0 %v5463
        %6829 = vmatprep.subr.bf16.mxu0 0
        %6830 = vmatpush2.bf16.msra.mxu0 %v5462
        %6831 = vmatprep.subr.bf16.mxu0 0
        %6832 = vmatpush2.bf16.msra.mxu0 %v5461
        %6833 = vmatprep.subr.bf16.mxu0 0
        %6834 = vmatpush2.bf16.msra.mxu0 %v5460
        %6835 = vmatprep.subr.bf16.mxu0 0
        %6836 = vmatpush2.bf16.msra.mxu0 %v5459
        %6837 = vmatprep.subr.bf16.mxu0 0
        %6838 = vmatpush2.bf16.msra.mxu0 %v5458
        %6839 = vmatprep.subr.bf16.mxu0 0
        %6840 = vmatpush2.bf16.msra.mxu0 %v5457
        %6841 = vmatprep.mubr.bf16.mxu0 %v2118
        %6842 = vmatmul.mubr.bf16.gmra.mxu0 %v2117
        %v6843 = vpop.f32.mrf.mxu0
        %v6844 = vadd.f32 %v6804, %v6843
        %v6845 = vpop.f32.mrf.mxu0
        %v6846 = vpop.f32.mrf.mxu0
        %v6847 = vpop.f32.mrf.mxu0
        %6848 = vdwg.mxu0
        %6849 = vmatprep.subr.bf16.mxu0 0
        %6850 = vmatpush1.bf16.msra.mxu0 %v5472
        %6851 = vmatprep.subr.bf16.mxu0 0
        %6852 = vmatpush1.bf16.msra.mxu0 %v5471
        %6853 = vmatprep.subr.bf16.mxu0 0
        %6854 = vmatpush1.bf16.msra.mxu0 %v5470
        %6855 = vmatprep.subr.bf16.mxu0 0
        %6856 = vmatpush1.bf16.msra.mxu0 %v5469
        %6857 = vmatprep.subr.bf16.mxu0 0
        %6858 = vmatpush1.bf16.msra.mxu0 %v5468
        %6859 = vmatprep.subr.bf16.mxu0 0
        %6860 = vmatpush1.bf16.msra.mxu0 %v5467
        %6861 = vmatprep.subr.bf16.mxu0 0
        %6862 = vmatpush1.bf16.msra.mxu0 %v5466
        %6863 = vmatprep.subr.bf16.mxu0 0
        %6864 = vmatpush1.bf16.msra.mxu0 %v5465
        %6865 = vmatprep.subr.bf16.mxu0 0
        %6866 = vmatpush2.bf16.msra.mxu0 %v5480
        %6867 = vmatprep.subr.bf16.mxu0 0
        %6868 = vmatpush2.bf16.msra.mxu0 %v5479
        %6869 = vmatprep.subr.bf16.mxu0 0
        %6870 = vmatpush2.bf16.msra.mxu0 %v5478
        %6871 = vmatprep.subr.bf16.mxu0 0
        %6872 = vmatpush2.bf16.msra.mxu0 %v5477
        %6873 = vmatprep.subr.bf16.mxu0 0
        %6874 = vmatpush2.bf16.msra.mxu0 %v5476
        %6875 = vmatprep.subr.bf16.mxu0 0
        %6876 = vmatpush2.bf16.msra.mxu0 %v5475
        %6877 = vmatprep.subr.bf16.mxu0 0
        %6878 = vmatpush2.bf16.msra.mxu0 %v5474
        %6879 = vmatprep.subr.bf16.mxu0 0
        %6880 = vmatpush2.bf16.msra.mxu0 %v5473
        %6881 = vmatprep.mubr.bf16.mxu0 %v2120
        %6882 = vmatmul.mubr.bf16.gmra.mxu0 %v2119
        %v6883 = vpop.f32.mrf.mxu0
        %v6884 = vadd.f32 %v6844, %v6883
        %v6885 = vpop.f32.mrf.mxu0
        %v6886 = vpop.f32.mrf.mxu0
        %v6887 = vpop.f32.mrf.mxu0
        %6888 = vdwg.mxu0
        %6889 = vmatprep.subr.bf16.mxu0 0
        %6890 = vmatpush1.bf16.msra.mxu0 %v5488
        %6891 = vmatprep.subr.bf16.mxu0 0
        %6892 = vmatpush1.bf16.msra.mxu0 %v5487
        %6893 = vmatprep.subr.bf16.mxu0 0
        %6894 = vmatpush1.bf16.msra.mxu0 %v5486
        %6895 = vmatprep.subr.bf16.mxu0 0
        %6896 = vmatpush1.bf16.msra.mxu0 %v5485
        %6897 = vmatprep.subr.bf16.mxu0 0
        %6898 = vmatpush1.bf16.msra.mxu0 %v5484
        %6899 = vmatprep.subr.bf16.mxu0 0
        %6900 = vmatpush1.bf16.msra.mxu0 %v5483
        %6901 = vmatprep.subr.bf16.mxu0 0
        %6902 = vmatpush1.bf16.msra.mxu0 %v5482
        %6903 = vmatprep.subr.bf16.mxu0 0
        %6904 = vmatpush1.bf16.msra.mxu0 %v5481
        %6905 = vmatprep.subr.bf16.mxu0 0
        %6906 = vmatpush2.bf16.msra.mxu0 %v5496
        %6907 = vmatprep.subr.bf16.mxu0 0
        %6908 = vmatpush2.bf16.msra.mxu0 %v5495
        %6909 = vmatprep.subr.bf16.mxu0 0
        %6910 = vmatpush2.bf16.msra.mxu0 %v5494
        %6911 = vmatprep.subr.bf16.mxu0 0
        %6912 = vmatpush2.bf16.msra.mxu0 %v5493
        %6913 = vmatprep.subr.bf16.mxu0 0
        %6914 = vmatpush2.bf16.msra.mxu0 %v5492
        %6915 = vmatprep.subr.bf16.mxu0 0
        %6916 = vmatpush2.bf16.msra.mxu0 %v5491
        %6917 = vmatprep.subr.bf16.mxu0 0
        %6918 = vmatpush2.bf16.msra.mxu0 %v5490
        %6919 = vmatprep.subr.bf16.mxu0 0
        %6920 = vmatpush2.bf16.msra.mxu0 %v5489
        %6921 = vmatprep.mubr.bf16.mxu0 %v2122
        %6922 = vmatmul.mubr.bf16.gmra.mxu0 %v2121
        %v6923 = vpop.f32.mrf.mxu0
        %v6924 = vadd.f32 %v6884, %v6923
        %v6925 = vpop.f32.mrf.mxu0
        %v6926 = vpop.f32.mrf.mxu0
        %v6927 = vpop.f32.mrf.mxu0
        %6928 = vdwg.mxu0
        %6929 = vmatprep.subr.bf16.mxu0 0
        %6930 = vmatpush1.bf16.msra.mxu0 %v5504
        %6931 = vmatprep.subr.bf16.mxu0 0
        %6932 = vmatpush1.bf16.msra.mxu0 %v5503
        %6933 = vmatprep.subr.bf16.mxu0 0
        %6934 = vmatpush1.bf16.msra.mxu0 %v5502
        %6935 = vmatprep.subr.bf16.mxu0 0
        %6936 = vmatpush1.bf16.msra.mxu0 %v5501
        %6937 = vmatprep.subr.bf16.mxu0 0
        %6938 = vmatpush1.bf16.msra.mxu0 %v5500
        %6939 = vmatprep.subr.bf16.mxu0 0
        %6940 = vmatpush1.bf16.msra.mxu0 %v5499
        %6941 = vmatprep.subr.bf16.mxu0 0
        %6942 = vmatpush1.bf16.msra.mxu0 %v5498
        %6943 = vmatprep.subr.bf16.mxu0 0
        %6944 = vmatpush1.bf16.msra.mxu0 %v5497
        %6945 = vmatprep.subr.bf16.mxu0 0
        %6946 = vmatpush2.bf16.msra.mxu0 %v5512
        %6947 = vmatprep.subr.bf16.mxu0 0
        %6948 = vmatpush2.bf16.msra.mxu0 %v5511
        %6949 = vmatprep.subr.bf16.mxu0 0
        %6950 = vmatpush2.bf16.msra.mxu0 %v5510
        %6951 = vmatprep.subr.bf16.mxu0 0
        %6952 = vmatpush2.bf16.msra.mxu0 %v5509
        %6953 = vmatprep.subr.bf16.mxu0 0
        %6954 = vmatpush2.bf16.msra.mxu0 %v5508
        %6955 = vmatprep.subr.bf16.mxu0 0
        %6956 = vmatpush2.bf16.msra.mxu0 %v5507
        %6957 = vmatprep.subr.bf16.mxu0 0
        %6958 = vmatpush2.bf16.msra.mxu0 %v5506
        %6959 = vmatprep.subr.bf16.mxu0 0
        %6960 = vmatpush2.bf16.msra.mxu0 %v5505
        %6961 = vmatprep.mubr.bf16.mxu0 %v2124
        %6962 = vmatmul.mubr.bf16.gmra.mxu0 %v2123
        %v6963 = vpop.f32.mrf.mxu0
        %v6964 = vadd.f32 %v6924, %v6963
        %v6965 = vpop.f32.mrf.mxu0
        %v6966 = vpop.f32.mrf.mxu0
        %v6967 = vpop.f32.mrf.mxu0
        %6968 = vdwg.mxu0
        %6969 = vmatprep.subr.bf16.mxu0 0
        %6970 = vmatpush1.bf16.msra.mxu0 %v5520
        %6971 = vmatprep.subr.bf16.mxu0 0
        %6972 = vmatpush1.bf16.msra.mxu0 %v5519
        %6973 = vmatprep.subr.bf16.mxu0 0
        %6974 = vmatpush1.bf16.msra.mxu0 %v5518
        %6975 = vmatprep.subr.bf16.mxu0 0
        %6976 = vmatpush1.bf16.msra.mxu0 %v5517
        %6977 = vmatprep.subr.bf16.mxu0 0
        %6978 = vmatpush1.bf16.msra.mxu0 %v5516
        %6979 = vmatprep.subr.bf16.mxu0 0
        %6980 = vmatpush1.bf16.msra.mxu0 %v5515
        %6981 = vmatprep.subr.bf16.mxu0 0
        %6982 = vmatpush1.bf16.msra.mxu0 %v5514
        %6983 = vmatprep.subr.bf16.mxu0 0
        %6984 = vmatpush1.bf16.msra.mxu0 %v5513
        %6985 = vmatprep.subr.bf16.mxu0 0
        %6986 = vmatpush2.bf16.msra.mxu0 %v5528
        %6987 = vmatprep.subr.bf16.mxu0 0
        %6988 = vmatpush2.bf16.msra.mxu0 %v5527
        %6989 = vmatprep.subr.bf16.mxu0 0
        %6990 = vmatpush2.bf16.msra.mxu0 %v5526
        %6991 = vmatprep.subr.bf16.mxu0 0
        %6992 = vmatpush2.bf16.msra.mxu0 %v5525
        %6993 = vmatprep.subr.bf16.mxu0 0
        %6994 = vmatpush2.bf16.msra.mxu0 %v5524
        %6995 = vmatprep.subr.bf16.mxu0 0
        %6996 = vmatpush2.bf16.msra.mxu0 %v5523
        %6997 = vmatprep.subr.bf16.mxu0 0
        %6998 = vmatpush2.bf16.msra.mxu0 %v5522
        %6999 = vmatprep.subr.bf16.mxu0 0
        %7000 = vmatpush2.bf16.msra.mxu0 %v5521
        %7001 = vmatprep.mubr.bf16.mxu0 %v2126
        %7002 = vmatmul.mubr.bf16.gmra.mxu0 %v2125
        %v7003 = vpop.f32.mrf.mxu0
        %v7004 = vadd.f32 %v6964, %v7003
        %v7005 = vpop.f32.mrf.mxu0
        %v7006 = vpop.f32.mrf.mxu0
        %v7007 = vpop.f32.mrf.mxu0
        %7008 = vdwg.mxu0
        %7009 = vmatprep.subr.bf16.mxu0 0
        %7010 = vmatpush1.bf16.msra.mxu0 %v5536
        %7011 = vmatprep.subr.bf16.mxu0 0
        %7012 = vmatpush1.bf16.msra.mxu0 %v5535
        %7013 = vmatprep.subr.bf16.mxu0 0
        %7014 = vmatpush1.bf16.msra.mxu0 %v5534
        %7015 = vmatprep.subr.bf16.mxu0 0
        %7016 = vmatpush1.bf16.msra.mxu0 %v5533
        %7017 = vmatprep.subr.bf16.mxu0 0
        %7018 = vmatpush1.bf16.msra.mxu0 %v5532
        %7019 = vmatprep.subr.bf16.mxu0 0
        %7020 = vmatpush1.bf16.msra.mxu0 %v5531
        %7021 = vmatprep.subr.bf16.mxu0 0
        %7022 = vmatpush1.bf16.msra.mxu0 %v5530
        %7023 = vmatprep.subr.bf16.mxu0 0
        %7024 = vmatpush1.bf16.msra.mxu0 %v5529
        %7025 = vmatprep.subr.bf16.mxu0 0
        %7026 = vmatpush2.bf16.msra.mxu0 %v5544
        %7027 = vmatprep.subr.bf16.mxu0 0
        %7028 = vmatpush2.bf16.msra.mxu0 %v5543
        %7029 = vmatprep.subr.bf16.mxu0 0
        %7030 = vmatpush2.bf16.msra.mxu0 %v5542
        %7031 = vmatprep.subr.bf16.mxu0 0
        %7032 = vmatpush2.bf16.msra.mxu0 %v5541
        %7033 = vmatprep.subr.bf16.mxu0 0
        %7034 = vmatpush2.bf16.msra.mxu0 %v5540
        %7035 = vmatprep.subr.bf16.mxu0 0
        %7036 = vmatpush2.bf16.msra.mxu0 %v5539
        %7037 = vmatprep.subr.bf16.mxu0 0
        %7038 = vmatpush2.bf16.msra.mxu0 %v5538
        %7039 = vmatprep.subr.bf16.mxu0 0
        %7040 = vmatpush2.bf16.msra.mxu0 %v5537
        %7041 = vmatprep.mubr.bf16.mxu0 %v2128
        %7042 = vmatmul.mubr.bf16.gmra.mxu0 %v2127
        %v7043 = vpop.f32.mrf.mxu0
        %v7044 = vadd.f32 %v7004, %v7043
        %v7045 = vpop.f32.mrf.mxu0
        %v7046 = vpop.f32.mrf.mxu0
        %v7047 = vpop.f32.mrf.mxu0
        %7048 = vdwg.mxu0
        %7049 = vmatprep.subr.bf16.mxu0 0
        %7050 = vmatpush1.bf16.msra.mxu0 %v5552
        %7051 = vmatprep.subr.bf16.mxu0 0
        %7052 = vmatpush1.bf16.msra.mxu0 %v5551
        %7053 = vmatprep.subr.bf16.mxu0 0
        %7054 = vmatpush1.bf16.msra.mxu0 %v5550
        %7055 = vmatprep.subr.bf16.mxu0 0
        %7056 = vmatpush1.bf16.msra.mxu0 %v5549
        %7057 = vmatprep.subr.bf16.mxu0 0
        %7058 = vmatpush1.bf16.msra.mxu0 %v5548
        %7059 = vmatprep.subr.bf16.mxu0 0
        %7060 = vmatpush1.bf16.msra.mxu0 %v5547
        %7061 = vmatprep.subr.bf16.mxu0 0
        %7062 = vmatpush1.bf16.msra.mxu0 %v5546
        %7063 = vmatprep.subr.bf16.mxu0 0
        %7064 = vmatpush1.bf16.msra.mxu0 %v5545
        %7065 = vmatprep.subr.bf16.mxu0 0
        %7066 = vmatpush2.bf16.msra.mxu0 %v5560
        %7067 = vmatprep.subr.bf16.mxu0 0
        %7068 = vmatpush2.bf16.msra.mxu0 %v5559
        %7069 = vmatprep.subr.bf16.mxu0 0
        %7070 = vmatpush2.bf16.msra.mxu0 %v5558
        %7071 = vmatprep.subr.bf16.mxu0 0
        %7072 = vmatpush2.bf16.msra.mxu0 %v5557
        %7073 = vmatprep.subr.bf16.mxu0 0
        %7074 = vmatpush2.bf16.msra.mxu0 %v5556
        %7075 = vmatprep.subr.bf16.mxu0 0
        %7076 = vmatpush2.bf16.msra.mxu0 %v5555
        %7077 = vmatprep.subr.bf16.mxu0 0
        %7078 = vmatpush2.bf16.msra.mxu0 %v5554
        %7079 = vmatprep.subr.bf16.mxu0 0
        %7080 = vmatpush2.bf16.msra.mxu0 %v5553
        %7081 = vmatprep.mubr.bf16.mxu0 %v2130
        %7082 = vmatmul.mubr.bf16.gmra.mxu0 %v2129
        %v7083 = vpop.f32.mrf.mxu0
        %v7084 = vadd.f32 %v7044, %v7083
        %v7085 = vpop.f32.mrf.mxu0
        %v7086 = vpop.f32.mrf.mxu0
        %v7087 = vpop.f32.mrf.mxu0
        %7088 = vdwg.mxu0
        %7089 = vmatprep.subr.bf16.mxu0 0
        %7090 = vmatpush1.bf16.msra.mxu0 %v5568
        %7091 = vmatprep.subr.bf16.mxu0 0
        %7092 = vmatpush1.bf16.msra.mxu0 %v5567
        %7093 = vmatprep.subr.bf16.mxu0 0
        %7094 = vmatpush1.bf16.msra.mxu0 %v5566
        %7095 = vmatprep.subr.bf16.mxu0 0
        %7096 = vmatpush1.bf16.msra.mxu0 %v5565
        %7097 = vmatprep.subr.bf16.mxu0 0
        %7098 = vmatpush1.bf16.msra.mxu0 %v5564
        %7099 = vmatprep.subr.bf16.mxu0 0
        %7100 = vmatpush1.bf16.msra.mxu0 %v5563
        %7101 = vmatprep.subr.bf16.mxu0 0
        %7102 = vmatpush1.bf16.msra.mxu0 %v5562
        %7103 = vmatprep.subr.bf16.mxu0 0
        %7104 = vmatpush1.bf16.msra.mxu0 %v5561
        %7105 = vmatprep.subr.bf16.mxu0 0
        %7106 = vmatpush2.bf16.msra.mxu0 %v5576
        %7107 = vmatprep.subr.bf16.mxu0 0
        %7108 = vmatpush2.bf16.msra.mxu0 %v5575
        %7109 = vmatprep.subr.bf16.mxu0 0
        %7110 = vmatpush2.bf16.msra.mxu0 %v5574
        %7111 = vmatprep.subr.bf16.mxu0 0
        %7112 = vmatpush2.bf16.msra.mxu0 %v5573
        %7113 = vmatprep.subr.bf16.mxu0 0
        %7114 = vmatpush2.bf16.msra.mxu0 %v5572
        %7115 = vmatprep.subr.bf16.mxu0 0
        %7116 = vmatpush2.bf16.msra.mxu0 %v5571
        %7117 = vmatprep.subr.bf16.mxu0 0
        %7118 = vmatpush2.bf16.msra.mxu0 %v5570
        %7119 = vmatprep.subr.bf16.mxu0 0
        %7120 = vmatpush2.bf16.msra.mxu0 %v5569
        %7121 = vmatprep.mubr.bf16.mxu0 %v2132
        %7122 = vmatmul.mubr.bf16.gmra.mxu0 %v2131
        %v7123 = vpop.f32.mrf.mxu0
        %v7124 = vadd.f32 %v7084, %v7123
        %v7125 = vpop.f32.mrf.mxu0
        %v7126 = vpop.f32.mrf.mxu0
        %v7127 = vpop.f32.mrf.mxu0
        %7128 = vdwg.mxu0
        %7129 = vmatprep.subr.bf16.mxu0 0
        %7130 = vmatpush1.bf16.msra.mxu0 %v5584
        %7131 = vmatprep.subr.bf16.mxu0 0
        %7132 = vmatpush1.bf16.msra.mxu0 %v5583
        %7133 = vmatprep.subr.bf16.mxu0 0
        %7134 = vmatpush1.bf16.msra.mxu0 %v5582
        %7135 = vmatprep.subr.bf16.mxu0 0
        %7136 = vmatpush1.bf16.msra.mxu0 %v5581
        %7137 = vmatprep.subr.bf16.mxu0 0
        %7138 = vmatpush1.bf16.msra.mxu0 %v5580
        %7139 = vmatprep.subr.bf16.mxu0 0
        %7140 = vmatpush1.bf16.msra.mxu0 %v5579
        %7141 = vmatprep.subr.bf16.mxu0 0
        %7142 = vmatpush1.bf16.msra.mxu0 %v5578
        %7143 = vmatprep.subr.bf16.mxu0 0
        %7144 = vmatpush1.bf16.msra.mxu0 %v5577
        %7145 = vmatprep.subr.bf16.mxu0 0
        %7146 = vmatpush2.bf16.msra.mxu0 %v5592
        %7147 = vmatprep.subr.bf16.mxu0 0
        %7148 = vmatpush2.bf16.msra.mxu0 %v5591
        %7149 = vmatprep.subr.bf16.mxu0 0
        %7150 = vmatpush2.bf16.msra.mxu0 %v5590
        %7151 = vmatprep.subr.bf16.mxu0 0
        %7152 = vmatpush2.bf16.msra.mxu0 %v5589
        %7153 = vmatprep.subr.bf16.mxu0 0
        %7154 = vmatpush2.bf16.msra.mxu0 %v5588
        %7155 = vmatprep.subr.bf16.mxu0 0
        %7156 = vmatpush2.bf16.msra.mxu0 %v5587
        %7157 = vmatprep.subr.bf16.mxu0 0
        %7158 = vmatpush2.bf16.msra.mxu0 %v5586
        %7159 = vmatprep.subr.bf16.mxu0 0
        %7160 = vmatpush2.bf16.msra.mxu0 %v5585
        %7161 = vmatprep.mubr.bf16.mxu0 %v2134
        %7162 = vmatmul.mubr.bf16.gmra.mxu0 %v2133
        %v7163 = vpop.f32.mrf.mxu0
        %v7164 = vadd.f32 %v7124, %v7163
        %v7165 = vpop.f32.mrf.mxu0
        %v7166 = vpop.f32.mrf.mxu0
        %v7167 = vpop.f32.mrf.mxu0
        %7168 = vdwg.mxu0
        %7169 = vmatprep.subr.bf16.mxu0 0
        %7170 = vmatpush1.bf16.msra.mxu0 %v5600
        %7171 = vmatprep.subr.bf16.mxu0 0
        %7172 = vmatpush1.bf16.msra.mxu0 %v5599
        %7173 = vmatprep.subr.bf16.mxu0 0
        %7174 = vmatpush1.bf16.msra.mxu0 %v5598
        %7175 = vmatprep.subr.bf16.mxu0 0
        %7176 = vmatpush1.bf16.msra.mxu0 %v5597
        %7177 = vmatprep.subr.bf16.mxu0 0
        %7178 = vmatpush1.bf16.msra.mxu0 %v5596
        %7179 = vmatprep.subr.bf16.mxu0 0
        %7180 = vmatpush1.bf16.msra.mxu0 %v5595
        %7181 = vmatprep.subr.bf16.mxu0 0
        %7182 = vmatpush1.bf16.msra.mxu0 %v5594
        %7183 = vmatprep.subr.bf16.mxu0 0
        %7184 = vmatpush1.bf16.msra.mxu0 %v5593
        %7185 = vmatprep.subr.bf16.mxu0 0
        %7186 = vmatpush2.bf16.msra.mxu0 %v5608
        %7187 = vmatprep.subr.bf16.mxu0 0
        %7188 = vmatpush2.bf16.msra.mxu0 %v5607
        %7189 = vmatprep.subr.bf16.mxu0 0
        %7190 = vmatpush2.bf16.msra.mxu0 %v5606
        %7191 = vmatprep.subr.bf16.mxu0 0
        %7192 = vmatpush2.bf16.msra.mxu0 %v5605
        %7193 = vmatprep.subr.bf16.mxu0 0
        %7194 = vmatpush2.bf16.msra.mxu0 %v5604
        %7195 = vmatprep.subr.bf16.mxu0 0
        %7196 = vmatpush2.bf16.msra.mxu0 %v5603
        %7197 = vmatprep.subr.bf16.mxu0 0
        %7198 = vmatpush2.bf16.msra.mxu0 %v5602
        %7199 = vmatprep.subr.bf16.mxu0 0
        %7200 = vmatpush2.bf16.msra.mxu0 %v5601
        %7201 = vmatprep.mubr.bf16.mxu0 %v2136
        %7202 = vmatmul.mubr.bf16.gmra.mxu0 %v2135
        %v7203 = vpop.f32.mrf.mxu0
        %v7204 = vadd.f32 %v7164, %v7203
        %v7205 = vpop.f32.mrf.mxu0
        %v7206 = vpop.f32.mrf.mxu0
        %v7207 = vpop.f32.mrf.mxu0
        %7208 = vdwg.mxu0
        %7209 = vmatprep.subr.bf16.mxu0 0
        %7210 = vmatpush1.bf16.msra.mxu0 %v5616
        %7211 = vmatprep.subr.bf16.mxu0 0
        %7212 = vmatpush1.bf16.msra.mxu0 %v5615
        %7213 = vmatprep.subr.bf16.mxu0 0
        %7214 = vmatpush1.bf16.msra.mxu0 %v5614
        %7215 = vmatprep.subr.bf16.mxu0 0
        %7216 = vmatpush1.bf16.msra.mxu0 %v5613
        %7217 = vmatprep.subr.bf16.mxu0 0
        %7218 = vmatpush1.bf16.msra.mxu0 %v5612
        %7219 = vmatprep.subr.bf16.mxu0 0
        %7220 = vmatpush1.bf16.msra.mxu0 %v5611
        %7221 = vmatprep.subr.bf16.mxu0 0
        %7222 = vmatpush1.bf16.msra.mxu0 %v5610
        %7223 = vmatprep.subr.bf16.mxu0 0
        %7224 = vmatpush1.bf16.msra.mxu0 %v5609
        %7225 = vmatprep.subr.bf16.mxu0 0
        %7226 = vmatpush2.bf16.msra.mxu0 %v5624
        %7227 = vmatprep.subr.bf16.mxu0 0
        %7228 = vmatpush2.bf16.msra.mxu0 %v5623
        %7229 = vmatprep.subr.bf16.mxu0 0
        %7230 = vmatpush2.bf16.msra.mxu0 %v5622
        %7231 = vmatprep.subr.bf16.mxu0 0
        %7232 = vmatpush2.bf16.msra.mxu0 %v5621
        %7233 = vmatprep.subr.bf16.mxu0 0
        %7234 = vmatpush2.bf16.msra.mxu0 %v5620
        %7235 = vmatprep.subr.bf16.mxu0 0
        %7236 = vmatpush2.bf16.msra.mxu0 %v5619
        %7237 = vmatprep.subr.bf16.mxu0 0
        %7238 = vmatpush2.bf16.msra.mxu0 %v5618
        %7239 = vmatprep.subr.bf16.mxu0 0
        %7240 = vmatpush2.bf16.msra.mxu0 %v5617
        %7241 = vmatprep.mubr.bf16.mxu0 %v2138
        %7242 = vmatmul.mubr.bf16.gmra.mxu0 %v2137
        %v7243 = vpop.f32.mrf.mxu0
        %v7244 = vadd.f32 %v7204, %v7243
        %v7245 = vpop.f32.mrf.mxu0
        %v7246 = vpop.f32.mrf.mxu0
        %v7247 = vpop.f32.mrf.mxu0
        %7248 = vdwg.mxu0
        %7249 = vmatprep.subr.bf16.mxu0 0
        %7250 = vmatpush1.bf16.msra.mxu0 %v5632
        %7251 = vmatprep.subr.bf16.mxu0 0
        %7252 = vmatpush1.bf16.msra.mxu0 %v5631
        %7253 = vmatprep.subr.bf16.mxu0 0
        %7254 = vmatpush1.bf16.msra.mxu0 %v5630
        %7255 = vmatprep.subr.bf16.mxu0 0
        %7256 = vmatpush1.bf16.msra.mxu0 %v5629
        %7257 = vmatprep.subr.bf16.mxu0 0
        %7258 = vmatpush1.bf16.msra.mxu0 %v5628
        %7259 = vmatprep.subr.bf16.mxu0 0
        %7260 = vmatpush1.bf16.msra.mxu0 %v5627
        %7261 = vmatprep.subr.bf16.mxu0 0
        %7262 = vmatpush1.bf16.msra.mxu0 %v5626
        %7263 = vmatprep.subr.bf16.mxu0 0
        %7264 = vmatpush1.bf16.msra.mxu0 %v5625
        %7265 = vmatprep.subr.bf16.mxu0 0
        %7266 = vmatpush2.bf16.msra.mxu0 %v5640
        %7267 = vmatprep.subr.bf16.mxu0 0
        %7268 = vmatpush2.bf16.msra.mxu0 %v5639
        %7269 = vmatprep.subr.bf16.mxu0 0
        %7270 = vmatpush2.bf16.msra.mxu0 %v5638
        %7271 = vmatprep.subr.bf16.mxu0 0
        %7272 = vmatpush2.bf16.msra.mxu0 %v5637
        %7273 = vmatprep.subr.bf16.mxu0 0
        %7274 = vmatpush2.bf16.msra.mxu0 %v5636
        %7275 = vmatprep.subr.bf16.mxu0 0
        %7276 = vmatpush2.bf16.msra.mxu0 %v5635
        %7277 = vmatprep.subr.bf16.mxu0 0
        %7278 = vmatpush2.bf16.msra.mxu0 %v5634
        %7279 = vmatprep.subr.bf16.mxu0 0
        %7280 = vmatpush2.bf16.msra.mxu0 %v5633
        %7281 = vmatprep.mubr.bf16.mxu0 %v2140
        %7282 = vmatmul.mubr.bf16.gmra.mxu0 %v2139
        %v7283 = vpop.f32.mrf.mxu0
        %v7284 = vadd.f32 %v7244, %v7283
        %v7285 = vpop.f32.mrf.mxu0
        %v7286 = vpop.f32.mrf.mxu0
        %v7287 = vpop.f32.mrf.mxu0
        %7288 = vdwg.mxu0
        %7289 = vmatprep.subr.bf16.mxu0 0
        %7290 = vmatpush1.bf16.msra.mxu0 %v5648
        %7291 = vmatprep.subr.bf16.mxu0 0
        %7292 = vmatpush1.bf16.msra.mxu0 %v5647
        %7293 = vmatprep.subr.bf16.mxu0 0
        %7294 = vmatpush1.bf16.msra.mxu0 %v5646
        %7295 = vmatprep.subr.bf16.mxu0 0
        %7296 = vmatpush1.bf16.msra.mxu0 %v5645
        %7297 = vmatprep.subr.bf16.mxu0 0
        %7298 = vmatpush1.bf16.msra.mxu0 %v5644
        %7299 = vmatprep.subr.bf16.mxu0 0
        %7300 = vmatpush1.bf16.msra.mxu0 %v5643
        %7301 = vmatprep.subr.bf16.mxu0 0
        %7302 = vmatpush1.bf16.msra.mxu0 %v5642
        %7303 = vmatprep.subr.bf16.mxu0 0
        %7304 = vmatpush1.bf16.msra.mxu0 %v5641
        %7305 = vmatprep.subr.bf16.mxu0 0
        %7306 = vmatpush2.bf16.msra.mxu0 %v5656
        %7307 = vmatprep.subr.bf16.mxu0 0
        %7308 = vmatpush2.bf16.msra.mxu0 %v5655
        %7309 = vmatprep.subr.bf16.mxu0 0
        %7310 = vmatpush2.bf16.msra.mxu0 %v5654
        %7311 = vmatprep.subr.bf16.mxu0 0
        %7312 = vmatpush2.bf16.msra.mxu0 %v5653
        %7313 = vmatprep.subr.bf16.mxu0 0
        %7314 = vmatpush2.bf16.msra.mxu0 %v5652
        %7315 = vmatprep.subr.bf16.mxu0 0
        %7316 = vmatpush2.bf16.msra.mxu0 %v5651
        %7317 = vmatprep.subr.bf16.mxu0 0
        %7318 = vmatpush2.bf16.msra.mxu0 %v5650
        %7319 = vmatprep.subr.bf16.mxu0 0
        %7320 = vmatpush2.bf16.msra.mxu0 %v5649
        %7321 = vmatprep.mubr.bf16.mxu0 %v2142
        %7322 = vmatmul.mubr.bf16.gmra.mxu0 %v2141
        %v7323 = vpop.f32.mrf.mxu0
        %v7324 = vadd.f32 %v7284, %v7323
        %v7325 = vpop.f32.mrf.mxu0
        %v7326 = vpop.f32.mrf.mxu0
        %v7327 = vpop.f32.mrf.mxu0
        %7328 = vdwg.mxu0
        %7329 = vmatprep.subr.bf16.mxu0 0
        %7330 = vmatpush1.bf16.msra.mxu0 %v5664
        %7331 = vmatprep.subr.bf16.mxu0 0
        %7332 = vmatpush1.bf16.msra.mxu0 %v5663
        %7333 = vmatprep.subr.bf16.mxu0 0
        %7334 = vmatpush1.bf16.msra.mxu0 %v5662
        %7335 = vmatprep.subr.bf16.mxu0 0
        %7336 = vmatpush1.bf16.msra.mxu0 %v5661
        %7337 = vmatprep.subr.bf16.mxu0 0
        %7338 = vmatpush1.bf16.msra.mxu0 %v5660
        %7339 = vmatprep.subr.bf16.mxu0 0
        %7340 = vmatpush1.bf16.msra.mxu0 %v5659
        %7341 = vmatprep.subr.bf16.mxu0 0
        %7342 = vmatpush1.bf16.msra.mxu0 %v5658
        %7343 = vmatprep.subr.bf16.mxu0 0
        %7344 = vmatpush1.bf16.msra.mxu0 %v5657
        %7345 = vmatprep.subr.bf16.mxu0 0
        %7346 = vmatpush2.bf16.msra.mxu0 %v5672
        %7347 = vmatprep.subr.bf16.mxu0 0
        %7348 = vmatpush2.bf16.msra.mxu0 %v5671
        %7349 = vmatprep.subr.bf16.mxu0 0
        %7350 = vmatpush2.bf16.msra.mxu0 %v5670
        %7351 = vmatprep.subr.bf16.mxu0 0
        %7352 = vmatpush2.bf16.msra.mxu0 %v5669
        %7353 = vmatprep.subr.bf16.mxu0 0
        %7354 = vmatpush2.bf16.msra.mxu0 %v5668
        %7355 = vmatprep.subr.bf16.mxu0 0
        %7356 = vmatpush2.bf16.msra.mxu0 %v5667
        %7357 = vmatprep.subr.bf16.mxu0 0
        %7358 = vmatpush2.bf16.msra.mxu0 %v5666
        %7359 = vmatprep.subr.bf16.mxu0 0
        %7360 = vmatpush2.bf16.msra.mxu0 %v5665
        %7361 = vmatprep.mubr.bf16.mxu0 %v2144
        %7362 = vmatmul.mubr.bf16.gmra.mxu0 %v2143
        %v7363 = vpop.f32.mrf.mxu0
        %v7364 = vadd.f32 %v7324, %v7363
        %v7365 = vpop.f32.mrf.mxu0
        %v7366 = vpop.f32.mrf.mxu0
        %v7367 = vpop.f32.mrf.mxu0
        %7368 = vdwg.mxu0
        %7369 = vmatprep.subr.bf16.mxu0 0
        %7370 = vmatpush1.bf16.msra.mxu0 %v5680
        %7371 = vmatprep.subr.bf16.mxu0 0
        %7372 = vmatpush1.bf16.msra.mxu0 %v5679
        %7373 = vmatprep.subr.bf16.mxu0 0
        %7374 = vmatpush1.bf16.msra.mxu0 %v5678
        %7375 = vmatprep.subr.bf16.mxu0 0
        %7376 = vmatpush1.bf16.msra.mxu0 %v5677
        %7377 = vmatprep.subr.bf16.mxu0 0
        %7378 = vmatpush1.bf16.msra.mxu0 %v5676
        %7379 = vmatprep.subr.bf16.mxu0 0
        %7380 = vmatpush1.bf16.msra.mxu0 %v5675
        %7381 = vmatprep.subr.bf16.mxu0 0
        %7382 = vmatpush1.bf16.msra.mxu0 %v5674
        %7383 = vmatprep.subr.bf16.mxu0 0
        %7384 = vmatpush1.bf16.msra.mxu0 %v5673
        %7385 = vmatprep.subr.bf16.mxu0 0
        %7386 = vmatpush2.bf16.msra.mxu0 %v5688
        %7387 = vmatprep.subr.bf16.mxu0 0
        %7388 = vmatpush2.bf16.msra.mxu0 %v5687
        %7389 = vmatprep.subr.bf16.mxu0 0
        %7390 = vmatpush2.bf16.msra.mxu0 %v5686
        %7391 = vmatprep.subr.bf16.mxu0 0
        %7392 = vmatpush2.bf16.msra.mxu0 %v5685
        %7393 = vmatprep.subr.bf16.mxu0 0
        %7394 = vmatpush2.bf16.msra.mxu0 %v5684
        %7395 = vmatprep.subr.bf16.mxu0 0
        %7396 = vmatpush2.bf16.msra.mxu0 %v5683
        %7397 = vmatprep.subr.bf16.mxu0 0
        %7398 = vmatpush2.bf16.msra.mxu0 %v5682
        %7399 = vmatprep.subr.bf16.mxu0 0
        %7400 = vmatpush2.bf16.msra.mxu0 %v5681
        %7401 = vmatprep.mubr.bf16.mxu0 %v2146
        %7402 = vmatmul.mubr.bf16.gmra.mxu0 %v2145
        %v7403 = vpop.f32.mrf.mxu0
        %v7404 = vadd.f32 %v7364, %v7403
        %v7405 = vpop.f32.mrf.mxu0
        %v7406 = vpop.f32.mrf.mxu0
        %v7407 = vpop.f32.mrf.mxu0
        %7408 = vdwg.mxu0
        %7409 = vmatprep.subr.bf16.mxu0 0
        %7410 = vmatpush1.bf16.msra.mxu0 %v5696
        %7411 = vmatprep.subr.bf16.mxu0 0
        %7412 = vmatpush1.bf16.msra.mxu0 %v5695
        %7413 = vmatprep.subr.bf16.mxu0 0
        %7414 = vmatpush1.bf16.msra.mxu0 %v5694
        %7415 = vmatprep.subr.bf16.mxu0 0
        %7416 = vmatpush1.bf16.msra.mxu0 %v5693
        %7417 = vmatprep.subr.bf16.mxu0 0
        %7418 = vmatpush1.bf16.msra.mxu0 %v5692
        %7419 = vmatprep.subr.bf16.mxu0 0
        %7420 = vmatpush1.bf16.msra.mxu0 %v5691
        %7421 = vmatprep.subr.bf16.mxu0 0
        %7422 = vmatpush1.bf16.msra.mxu0 %v5690
        %7423 = vmatprep.subr.bf16.mxu0 0
        %7424 = vmatpush1.bf16.msra.mxu0 %v5689
        %7425 = vmatprep.subr.bf16.mxu0 0
        %7426 = vmatpush2.bf16.msra.mxu0 %v5704
        %7427 = vmatprep.subr.bf16.mxu0 0
        %7428 = vmatpush2.bf16.msra.mxu0 %v5703
        %7429 = vmatprep.subr.bf16.mxu0 0
        %7430 = vmatpush2.bf16.msra.mxu0 %v5702
        %7431 = vmatprep.subr.bf16.mxu0 0
        %7432 = vmatpush2.bf16.msra.mxu0 %v5701
        %7433 = vmatprep.subr.bf16.mxu0 0
        %7434 = vmatpush2.bf16.msra.mxu0 %v5700
        %7435 = vmatprep.subr.bf16.mxu0 0
        %7436 = vmatpush2.bf16.msra.mxu0 %v5699
        %7437 = vmatprep.subr.bf16.mxu0 0
        %7438 = vmatpush2.bf16.msra.mxu0 %v5698
        %7439 = vmatprep.subr.bf16.mxu0 0
        %7440 = vmatpush2.bf16.msra.mxu0 %v5697
        %7441 = vmatprep.mubr.bf16.mxu0 %v2148
        %7442 = vmatmul.mubr.bf16.gmra.mxu0 %v2147
        %v7443 = vpop.f32.mrf.mxu0
        %v7444 = vadd.f32 %v7404, %v7443
        %v7445 = vpop.f32.mrf.mxu0
        %v7446 = vpop.f32.mrf.mxu0
        %v7447 = vpop.f32.mrf.mxu0
        %7448 = vdwg.mxu0
        %7449 = vmatprep.subr.bf16.mxu0 0
        %7450 = vmatpush1.bf16.msra.mxu0 %v5712
        %7451 = vmatprep.subr.bf16.mxu0 0
        %7452 = vmatpush1.bf16.msra.mxu0 %v5711
        %7453 = vmatprep.subr.bf16.mxu0 0
        %7454 = vmatpush1.bf16.msra.mxu0 %v5710
        %7455 = vmatprep.subr.bf16.mxu0 0
        %7456 = vmatpush1.bf16.msra.mxu0 %v5709
        %7457 = vmatprep.subr.bf16.mxu0 0
        %7458 = vmatpush1.bf16.msra.mxu0 %v5708
        %7459 = vmatprep.subr.bf16.mxu0 0
        %7460 = vmatpush1.bf16.msra.mxu0 %v5707
        %7461 = vmatprep.subr.bf16.mxu0 0
        %7462 = vmatpush1.bf16.msra.mxu0 %v5706
        %7463 = vmatprep.subr.bf16.mxu0 0
        %7464 = vmatpush1.bf16.msra.mxu0 %v5705
        %7465 = vmatprep.subr.bf16.mxu0 0
        %7466 = vmatpush2.bf16.msra.mxu0 %v5720
        %7467 = vmatprep.subr.bf16.mxu0 0
        %7468 = vmatpush2.bf16.msra.mxu0 %v5719
        %7469 = vmatprep.subr.bf16.mxu0 0
        %7470 = vmatpush2.bf16.msra.mxu0 %v5718
        %7471 = vmatprep.subr.bf16.mxu0 0
        %7472 = vmatpush2.bf16.msra.mxu0 %v5717
        %7473 = vmatprep.subr.bf16.mxu0 0
        %7474 = vmatpush2.bf16.msra.mxu0 %v5716
        %7475 = vmatprep.subr.bf16.mxu0 0
        %7476 = vmatpush2.bf16.msra.mxu0 %v5715
        %7477 = vmatprep.subr.bf16.mxu0 0
        %7478 = vmatpush2.bf16.msra.mxu0 %v5714
        %7479 = vmatprep.subr.bf16.mxu0 0
        %7480 = vmatpush2.bf16.msra.mxu0 %v5713
        %7481 = vmatprep.mubr.bf16.mxu0 %v2150
        %7482 = vmatmul.mubr.bf16.gmra.mxu0 %v2149
        %v7483 = vpop.f32.mrf.mxu0
        %v7484 = vadd.f32 %v7444, %v7483
        %v7485 = vpop.f32.mrf.mxu0
        %v7486 = vpop.f32.mrf.mxu0
        %v7487 = vpop.f32.mrf.mxu0
        %7488 = vdwg.mxu0
        %7489 = vmatprep.subr.bf16.mxu0 0
        %7490 = vmatpush1.bf16.msra.mxu0 %v5728
        %7491 = vmatprep.subr.bf16.mxu0 0
        %7492 = vmatpush1.bf16.msra.mxu0 %v5727
        %7493 = vmatprep.subr.bf16.mxu0 0
        %7494 = vmatpush1.bf16.msra.mxu0 %v5726
        %7495 = vmatprep.subr.bf16.mxu0 0
        %7496 = vmatpush1.bf16.msra.mxu0 %v5725
        %7497 = vmatprep.subr.bf16.mxu0 0
        %7498 = vmatpush1.bf16.msra.mxu0 %v5724
        %7499 = vmatprep.subr.bf16.mxu0 0
        %7500 = vmatpush1.bf16.msra.mxu0 %v5723
        %7501 = vmatprep.subr.bf16.mxu0 0
        %7502 = vmatpush1.bf16.msra.mxu0 %v5722
        %7503 = vmatprep.subr.bf16.mxu0 0
        %7504 = vmatpush1.bf16.msra.mxu0 %v5721
        %7505 = vmatprep.subr.bf16.mxu0 0
        %7506 = vmatpush2.bf16.msra.mxu0 %v5736
        %7507 = vmatprep.subr.bf16.mxu0 0
        %7508 = vmatpush2.bf16.msra.mxu0 %v5735
        %7509 = vmatprep.subr.bf16.mxu0 0
        %7510 = vmatpush2.bf16.msra.mxu0 %v5734
        %7511 = vmatprep.subr.bf16.mxu0 0
        %7512 = vmatpush2.bf16.msra.mxu0 %v5733
        %7513 = vmatprep.subr.bf16.mxu0 0
        %7514 = vmatpush2.bf16.msra.mxu0 %v5732
        %7515 = vmatprep.subr.bf16.mxu0 0
        %7516 = vmatpush2.bf16.msra.mxu0 %v5731
        %7517 = vmatprep.subr.bf16.mxu0 0
        %7518 = vmatpush2.bf16.msra.mxu0 %v5730
        %7519 = vmatprep.subr.bf16.mxu0 0
        %7520 = vmatpush2.bf16.msra.mxu0 %v5729
        %7521 = vmatprep.mubr.bf16.mxu0 %v2152
        %7522 = vmatmul.mubr.bf16.gmra.mxu0 %v2151
        %v7523 = vpop.f32.mrf.mxu0
        %v7524 = vadd.f32 %v7484, %v7523
        %v7525 = vpop.f32.mrf.mxu0
        %v7526 = vpop.f32.mrf.mxu0
        %v7527 = vpop.f32.mrf.mxu0
        %7528 = vdwg.mxu0
        %7529 = vmatprep.subr.mxu0 0.0
        %7530 = vmatpush1.msra.mxu0 %v566
        %7531 = vmatprep.subr.mxu0 0.0
        %7532 = vmatpush1.msra.mxu0 %v565
        %7533 = vmatprep.subr.mxu0 0.0
        %7534 = vmatpush1.msra.mxu0 %v564
        %7535 = vmatprep.subr.mxu0 0.0
        %7536 = vmatpush1.msra.mxu0 %v563
        %7537 = vmatprep.subr.mxu0 0.0
        %7538 = vmatpush1.msra.mxu0 %v562
        %7539 = vmatprep.subr.mxu0 0.0
        %7540 = vmatpush1.msra.mxu0 %v561
        %7541 = vmatprep.subr.mxu0 0.0
        %7542 = vmatpush1.msra.mxu0 %v560
        %7543 = vmatprep.subr.mxu0 0.0
        %7544 = vmatpush1.msra.mxu0 %v559
        %7545 = vmatprep.subr.mxu0 0.0
        %7546 = vmatpush1.msra.mxu0 %v558
        %7547 = vmatprep.subr.mxu0 0.0
        %7548 = vmatpush1.msra.mxu0 %v557
        %7549 = vmatprep.subr.mxu0 0.0
        %7550 = vmatpush1.msra.mxu0 %v556
        %7551 = vmatprep.subr.mxu0 0.0
        %7552 = vmatpush1.msra.mxu0 %v555
        %7553 = vmatprep.subr.mxu0 0.0
        %7554 = vmatpush1.msra.mxu0 %v554
        %7555 = vmatprep.subr.mxu0 0.0
        %7556 = vmatpush1.msra.mxu0 %v553
        %7557 = vmatprep.subr.mxu0 0.0
        %7558 = vmatpush1.msra.mxu0 %v552
        %7559 = vmatprep.subr.mxu0 0.0
        %7560 = vmatpush1.msra.mxu0 %v551
        %7561 = vmatprep.subr.mxu0 0.0
        %7562 = vmatpush2.msra.mxu0 0.0
        %7563 = vmatprep.subr.mxu0 0.0
        %7564 = vmatpush2.msra.mxu0 0.0
        %7565 = vmatprep.subr.mxu0 0.0
        %7566 = vmatpush2.msra.mxu0 0.0
        %7567 = vmatprep.subr.mxu0 0.0
        %7568 = vmatpush2.msra.mxu0 0.0
        %7569 = vmatprep.subr.mxu0 0.0
        %7570 = vmatpush2.msra.mxu0 0.0
        %7571 = vmatprep.subr.mxu0 0.0
        %7572 = vmatpush2.msra.mxu0 0.0
        %7573 = vmatprep.subr.mxu0 0.0
        %7574 = vmatpush2.msra.mxu0 0.0
        %7575 = vmatprep.subr.mxu0 0.0
        %7576 = vmatpush2.msra.mxu0 0.0
        %7577 = vmatprep.subr.mxu0 0.0
        %7578 = vmatpush2.msra.mxu0 0.0
        %7579 = vmatprep.subr.mxu0 0.0
        %7580 = vmatpush2.msra.mxu0 0.0
        %7581 = vmatprep.subr.mxu0 0.0
        %7582 = vmatpush2.msra.mxu0 0.0
        %7583 = vmatprep.subr.mxu0 0.0
        %7584 = vmatpush2.msra.mxu0 0.0
        %7585 = vmatprep.subr.mxu0 0.0
        %7586 = vmatpush2.msra.mxu0 0.0
        %7587 = vmatprep.subr.mxu0 0.0
        %7588 = vmatpush2.msra.mxu0 0.0
        %7589 = vmatprep.subr.mxu0 0.0
        %7590 = vmatpush2.msra.mxu0 0.0
        %7591 = vmatprep.subr.mxu0 0.0
        %7592 = vmatpush2.msra.mxu0 0.0
        %7593 = vmatprep.mubr.f32.mxu0 0.0
        %7594 = vmatmul.mubr.f32.gmra.mxu0 %v550
        %v7595 = vpop.f32.mrf.mxu0
        %v7596 = vadd.f32 %v7524, %v7595
        %v7597 = vpop.f32.mrf.mxu0
        %7598 = vdwg.mxu0
        %7599 = vst [vmem:[%s365] sm:$0xff] %v7596
        %s7600 = sand.u32 %s189, 1
        %s7601 = scalar_lea.sflag [#allocation4], %s7600
        %s7602 = sand.u32 %s189, 1
        %s7603 = smul.addr %s7602, 8
        %s7604 = scalar_lea.vmem [#allocation13], %s7603
        // Predicated region
        $region69: #{tpu_custom_call.1} parent=43 // pred_check
          %p7605 = pneg %p199
        $region70: #{tpu_custom_call.1} parent=43 // pred_check_branch
          %7607 = sbr.rel (%p7605) target = $region72
        $region71: #{tpu_custom_call.1} parent=43 // pred_region
          %s7609 = ssub.s32 128, 128
          %7610 = vsyncadd %s7601, %s7609
          %s7611 = sadd.s32 %s31, %s30
          %s7612 = smul.addr %s7611, 128
          %s7613 = scalar_lea.hbm %s6, %s7612
          %s7615 = sshll.u32 %s7604, 4
          %s7616 = int_to_ptr.vmem [resolvable:$true] %s7615
          %7618 = dma.vmem_to_hbm [thread:$0]  %s7616, 128, %s7613, %s7601
        $region72: #{tpu_custom_call.1} parent=43 // pred_fallthru
          _
      $region44: #{tpu_custom_call.1} parent=5 // pred_fallthru
        _
      %p7619 = scmp.le.s32.totalorder 2, %s21
      // Predicated region
      $region73: #{tpu_custom_call.1} parent=5 // pred_check
        %p7620 = pneg %p7619
      $region74: #{tpu_custom_call.1} parent=5 // pred_check_branch
        %7622 = sbr.rel (%p7620) target = $region76
      $region75: #{tpu_custom_call.1} parent=5 // pred_region
        %s7623 = ssub.s32 %s21, 2
        // Predicated region
        $region77: #{tpu_custom_call.1} parent=75 // pred_check
          %p7624 = pneg %p205
        $region78: #{tpu_custom_call.1} parent=75 // pred_check_branch
          %7626 = sbr.rel (%p7624) target = $region80
        $region79: #{tpu_custom_call.1} parent=75 // pred_region
          %s7627 = sand.u32 %s190, 1
          %s7628 = scalar_lea.sflag [#allocation4], %s7627
          %s7629 = sand.u32 %s190, 1
          %s7630 = smul.addr %s7629, 8
          %s7631 = scalar_lea.vmem [#allocation13], %s7630
          %7632 = dma.done %s7628, 128
        $region80: #{tpu_custom_call.1} parent=75 // pred_fallthru
          _
      $region76: #{tpu_custom_call.1} parent=5 // pred_fallthru
        _
    $region6: #{tpu_custom_call.1} parent=1 // loop_footer
      %s25 = sadd.s32 1, %s21
    $region7: #{tpu_custom_call.1} parent=1 // loop_footer_branch
      %20 = sbr.rel target = $region3
    $region8: #{tpu_custom_call.1} parent=1 // loop_exit
      _
    %7633 = vsyncpa [#allocation3], 1
    %s7634 = scalar_lea.sflag [#allocation3], 1
    %7635 = vsyncpa %s7634, 1
    %7636 = vsyncpa [#allocation6], 1
    %7637 = vsyncpa [#allocation9], 1
    %7638 = vsyncpa [#allocation12], 1
    %7639 = vsyncpa [#allocation4], 1
    %s7640 = scalar_lea.sflag [#allocation4], 1
    %7641 = vsyncpa %s7640, 1

</llo_original>
